<compile_context>
chip_gen: v7x
topology: tpu7x:2x2x1
jax: 0.10.0
libtpu: 0.0.40
codegen_flags: <defaults>
</compile_context>

<pallas_src>
import numpy as np
import jax
import jax.numpy as jnp
from jax.experimental import pallas as pl
from jax.experimental.pallas import tpu as pltpu


def _round_up(x, m):
    return (x + m - 1) // m * m


# ----------------------------------------------------------------------------
# Init-time weight preprocessing (runs once, off the forward path).
# ----------------------------------------------------------------------------
def _conv_to_matrix(wgt, stride, in_shape):
    """Exact dense matrix M with flatten(conv(x)) == flatten(x) @ M (NCHW flatten)."""
    wgt = np.asarray(wgt, np.float32)                      # (O, C, kh, kw)
    O, C, kh, kw = wgt.shape
    Ci, H, W = in_shape
    assert Ci == C
    Ho = (H - kh) // stride + 1
    Wo = (W - kw) // stride + 1
    m = np.zeros((C, H, W, O, Ho, Wo), np.float32)
    for i in range(kh):
        for j in range(kw):
            for p in range(Ho):
                for q in range(Wo):
                    m[:, p * stride + i, q * stride + j, :, p, q] = wgt[:, :, i, j].T
    return m.reshape(C * H * W, O * Ho * Wo), (O, Ho, Wo)


def _build_fused_layers(convs, act_w, act_b, obs_shape, dtype):
    """Return [(W, b), ...]; ALL output widths zero-padded to multiples of 128."""
    mats, biases = [], []
    shape = obs_shape
    for (wgt, bia, stride) in convs:
        m, shape = _conv_to_matrix(wgt, stride, shape)
        mats.append(m)
        # NCHW-flatten bias: channel bias repeated over Ho*Wo positions.
        biases.append(np.repeat(np.asarray(bia, np.float32), shape[1] * shape[2]))
    # Action head: torch does flat @ act_w.T + act_b on the NCHW-flattened features.
    mats.append(np.asarray(act_w, np.float32).T)
    biases.append(np.asarray(act_b, np.float32))

    layers = []
    in_dim = mats[0].shape[0]
    for m, b in zip(mats, biases):
        out_dim = _round_up(m.shape[1], 128)               # lane-dense everywhere (incl. head)
        wp = np.zeros((in_dim, out_dim), np.float32)
        wp[: m.shape[0], : m.shape[1]] = m                 # zero rows/cols = exact padding
        bp = np.zeros((1, out_dim), np.float32)
        bp[0, : b.shape[0]] = b
        layers.append((jnp.asarray(wp, dtype), jnp.asarray(bp, jnp.float32)))
        in_dim = out_dim
    return layers


def init_critic_params(key, obs_shape, num_actions, filters, dtype=jnp.bfloat16):
    """obs_shape = (C, H, W); filters = [(out_ch, ksize, stride), ...]."""
    C, H, W = obs_shape
    convs = []
    c, h, w = C, H, W
    for (out_ch, k, s) in filters:
        key, kw_, kb_ = jax.random.split(key, 3)
        wgt = jax.random.normal(kw_, (out_ch, c, k, k), jnp.float32) * 0.05
        bia = jax.random.normal(kb_, (out_ch,), jnp.float32) * 0.01
        convs.append((wgt, bia, s))
        h = (h - k) // s + 1
        w = (w - k) // s + 1
        c = out_ch
    out_features = c * h * w                               # == compute_output_dim(...) in torch
    key, kw_, kb_ = jax.random.split(key, 3)
    act_w = jax.random.normal(kw_, (num_actions, out_features), jnp.float32) * 0.05
    act_b = jax.random.normal(kb_, (num_actions,), jnp.float32) * 0.01
    fused = _build_fused_layers(convs, act_w, act_b, obs_shape, dtype)
    return {"convs": convs, "action": (act_w, act_b), "fused": fused}, out_features


# ----------------------------------------------------------------------------
# Single fused Pallas kernel: x @ W1 + b1 -> ReLU -> ... -> @ Wh + bh.
# ----------------------------------------------------------------------------
def _critic_fused_kernel(x_ref, *refs):
    o_ref = refs[-1]
    layer_refs = refs[:-1]
    n_layers = len(layer_refs) // 2
    h = x_ref[...]                                         # f32 tile straight from HBM
    for l in range(n_layers):
        w_ref, b_ref = layer_refs[2 * l], layer_refs[2 * l + 1]
        h = jnp.dot(h.astype(w_ref.dtype), w_ref[...],     # in-kernel downcast (bf16 path)
                    preferred_element_type=jnp.float32)
        h = h + b_ref[...]                                 # (1, N) broadcasts over rows
        if l < n_layers - 1:                               # ReLU after every conv, not the head
            h = jnp.maximum(h, 0.0)
    o_ref[...] = h.astype(o_ref.dtype)


def _pick_batch_tile(B, batch_tile):
    """Multiple of 8; aims for >= 2 grid steps (keeps both v7x TCs busy)."""
    b8 = _round_up(B, 8)
    if b8 <= 8:
        return 8
    return min(batch_tile, max(8, _round_up(b8, 16) // 2))


def critic_forward(params, obs_nchw, *, batch_tile=256):
    """obs_nchw: (B, C, H, W) -> (B, num_actions) float32.

    batch_tile=256 matches the v6e/v7x 256x256 MXU; use batch_tile=128 on v5e.
    """
    layers = params["fused"]
    din = layers[0][0].shape[0]
    nout_pad = layers[-1][0].shape[1]                      # padded head width (>=128)
    num_actions = params["action"][0].shape[0]
    B = obs_nchw.shape[0]

    # NCHW flatten == torch nn.Flatten(-3, -1); pure reshape, no transpose needed.
    # x stays f32: the bf16 downcast happens inside the kernel (no extra HBM pass).
    x = obs_nchw.reshape(B, -1).astype(jnp.float32)
    assert x.shape[1] == din, (x.shape, din)

    tb = _pick_batch_tile(B, batch_tile)
    bp = _round_up(B, tb)
    if bp != B:
        x = jnp.pad(x, ((0, bp - B), (0, 0)))

    args = [x]
    flops = 0
    bytes_accessed = x.size * 4 + bp * nout_pad * 4
    vmem_est = tb * din * 4 * 2 + tb * nout_pad * 4 * 2    # x / out double buffers
    for (w, b) in layers:
        args.extend([w, b])
        flops += 2 * bp * w.shape[0] * w.shape[1]
        bytes_accessed += w.size * w.dtype.itemsize + b.size * b.dtype.itemsize
        vmem_est += w.size * w.dtype.itemsize + b.size * b.dtype.itemsize   # single-buffered
        vmem_est += tb * w.shape[1] * 4                                     # activation staging
    vmem_limit = int(min(max(2 * vmem_est, 32 << 20), 48 << 20))

    def build_call(weight_bufs):
        wkw = {"pipeline_mode": pl.Buffered(1)} if weight_bufs == 1 else {}
        in_specs = [pl.BlockSpec((tb, din), lambda i: (i, 0))]
        for (w, b) in layers:
            # Constant index_map => weights stay VMEM-resident across grid steps.
            in_specs.append(pl.BlockSpec(w.shape, lambda i: (0, 0), **wkw))
            in_specs.append(pl.BlockSpec(b.shape, lambda i: (0, 0), **wkw))
        return pl.pallas_call(
            _critic_fused_kernel,
            out_shape=jax.ShapeDtypeStruct((bp, nout_pad), jnp.float32),
            grid=(bp // tb,),
            in_specs=in_specs,
            out_specs=pl.BlockSpec((tb, nout_pad), lambda i: (i, 0)),
            compiler_params=pltpu.CompilerParams(
                dimension_semantics=("parallel",),
                vmem_limit_bytes=vmem_limit),
            cost_estimate=pl.CostEstimate(flops=int(flops), transcendentals=0,
                                          bytes_accessed=int(bytes_accessed)),
        )

    try:
        out = build_call(1)(*args)                         # single-buffered invariant weights
    except Exception:
        out = build_call(2)(*args)                         # fallback: default double-buffering
    return out[:B, :num_actions]


# ----------------------------------------------------------------------------
# Pure-JAX reference (correctness check only).
# ----------------------------------------------------------------------------
def critic_forward_ref(params, obs_nchw):
    x = obs_nchw.astype(jnp.float32)
    for (wgt, bia, stride) in params["convs"]:
        x = jax.lax.conv_general_dilated(
            x, wgt, (stride, stride), "VALID",
            dimension_numbers=("NCHW", "OIHW", "NCHW"))
        x = jax.nn.relu(x + bia.reshape(1, -1, 1, 1))
    x = x.reshape(x.shape[0], -1)
    act_w, act_b = params["action"]
    return x @ act_w.T + act_b


if __name__ == "__main__":
    key = jax.random.PRNGKey(0)

    # Conv-branch-consistent small config:
    #   obs_space.shape = (4, 16, 16), num_actions.n = 6,
    #   filters = [(8, 4, 2), (16, 3, 2)]  (custom `filters` arg of get_preprocessor)
    obs_shape = (4, 16, 16)
    num_actions = 6
    filters = [(8, 4, 2), (16, 3, 2)]
    batch = 2

    key, kp, kx = jax.random.split(key, 3)
    params, out_features = init_critic_params(kp, obs_shape, num_actions, filters)  # bf16 default
    obs = jax.random.normal(kx, (batch,) + obs_shape, jnp.float32)   # NCHW

    ref = critic_forward_ref(params, obs)

    # bf16 compute path (default): loosened tolerance.
    out = jax.block_until_ready(critic_forward(params, obs))
    assert out.shape == (batch, num_actions)
    np.testing.assert_allclose(np.asarray(out), np.asarray(ref), rtol=2e-2, atol=2e-2)

    # f32 compute path: strict tolerance (validates the exact linearisation/padding).
    act_w, act_b = params["action"]
    params_f32 = dict(params,
                      fused=_build_fused_layers(params["convs"], act_w, act_b,
                                                obs_shape, jnp.float32))
    out_f32 = jax.block_until_ready(critic_forward(params_f32, obs))
    np.testing.assert_allclose(np.asarray(out_f32), np.asarray(ref), rtol=1e-4, atol=2e-4)

    print("KERNEL_OK")
</pallas_src>

<mosaic_0001>
module attributes {stable_mosaic.version = 11 : i64} {
  func.func @_critic_fused_kernel(%arg0: i32, %arg1: memref<8x1024xf32, #tpu.memory_space<vmem>>, %arg2: memref<1024x512xbf16, #tpu.memory_space<vmem>>, %arg3: memref<1x512xf32, #tpu.memory_space<vmem>>, %arg4: memref<512x256xbf16, #tpu.memory_space<vmem>>, %arg5: memref<1x256xf32, #tpu.memory_space<vmem>>, %arg6: memref<256x128xbf16, #tpu.memory_space<vmem>>, %arg7: memref<1x128xf32, #tpu.memory_space<vmem>>, %arg8: memref<8x128xf32, #tpu.memory_space<vmem>>) attributes {dimension_semantics = [#tpu.dimension_semantics<parallel>], iteration_bounds = array<i64: 1>, scalar_prefetch = 0 : i64, scratch_operands = 0 : i64, tpu.core_type = #tpu.core_type<tc>, window_params = [{transform_indices = @transform_0, window_bounds = array<i64: 8, 1024>}, {pipeline_mode = #tpu.pipeline_mode<synchronous>, transform_indices = @transform_1, window_bounds = array<i64: 1024, 512>}, {pipeline_mode = #tpu.pipeline_mode<synchronous>, transform_indices = @transform_2, window_bounds = array<i64: 1, 512>}, {pipeline_mode = #tpu.pipeline_mode<synchronous>, transform_indices = @transform_3, window_bounds = array<i64: 512, 256>}, {pipeline_mode = #tpu.pipeline_mode<synchronous>, transform_indices = @transform_4, window_bounds = array<i64: 1, 256>}, {pipeline_mode = #tpu.pipeline_mode<synchronous>, transform_indices = @transform_5, window_bounds = array<i64: 256, 128>}, {pipeline_mode = #tpu.pipeline_mode<synchronous>, transform_indices = @transform_6, window_bounds = array<i64: 1, 128>}, {transform_indices = @transform_7, window_bounds = array<i64: 8, 128>}]} {
    %c0 = arith.constant 0 : index
    %c0_0 = arith.constant 0 : index
    %0 = vector.load %arg1[%c0, %c0_0] : memref<8x1024xf32, #tpu.memory_space<vmem>>, vector<8x1024xf32>
    %1 = arith.truncf %0 : vector<8x1024xf32> to vector<8x1024xbf16>
    %c0_1 = arith.constant 0 : index
    %c0_2 = arith.constant 0 : index
    %2 = vector.load %arg2[%c0_1, %c0_2] : memref<1024x512xbf16, #tpu.memory_space<vmem>>, vector<1024x512xbf16>
    %cst = arith.constant dense<0.000000e+00> : vector<8x512xf32>
    %3 = tpu.matmul %1, %2, %cst {dimension_numbers = #tpu.dot_dimension_numbers<[1], [0], [0], [1], [0, 0, 1, 1], [], []>} : vector<8x1024xbf16>, vector<1024x512xbf16>, vector<8x512xf32> -> vector<8x512xf32>
    %c0_3 = arith.constant 0 : index
    %c0_4 = arith.constant 0 : index
    %4 = vector.load %arg3[%c0_3, %c0_4] : memref<1x512xf32, #tpu.memory_space<vmem>>, vector<1x512xf32>
    %5 = vector.broadcast %4 : vector<1x512xf32> to vector<8x512xf32>
    %6 = arith.addf %3, %5 : vector<8x512xf32>
    %cst_5 = arith.constant 0.000000e+00 : f32
    %7 = vector.broadcast %cst_5 : f32 to vector<8x512xf32>
    %8 = arith.maximumf %6, %7 : vector<8x512xf32>
    %9 = arith.truncf %8 : vector<8x512xf32> to vector<8x512xbf16>
    %c0_6 = arith.constant 0 : index
    %c0_7 = arith.constant 0 : index
    %10 = vector.load %arg4[%c0_6, %c0_7] : memref<512x256xbf16, #tpu.memory_space<vmem>>, vector<512x256xbf16>
    %cst_8 = arith.constant dense<0.000000e+00> : vector<8x256xf32>
    %11 = tpu.matmul %9, %10, %cst_8 {dimension_numbers = #tpu.dot_dimension_numbers<[1], [0], [0], [1], [0, 0, 1, 1], [], []>} : vector<8x512xbf16>, vector<512x256xbf16>, vector<8x256xf32> -> vector<8x256xf32>
    %c0_9 = arith.constant 0 : index
    %c0_10 = arith.constant 0 : index
    %12 = vector.load %arg5[%c0_9, %c0_10] : memref<1x256xf32, #tpu.memory_space<vmem>>, vector<1x256xf32>
    %13 = vector.broadcast %12 : vector<1x256xf32> to vector<8x256xf32>
    %14 = arith.addf %11, %13 : vector<8x256xf32>
    %cst_11 = arith.constant 0.000000e+00 : f32
    %15 = vector.broadcast %cst_11 : f32 to vector<8x256xf32>
    %16 = arith.maximumf %14, %15 : vector<8x256xf32>
    %17 = arith.truncf %16 : vector<8x256xf32> to vector<8x256xbf16>
    %c0_12 = arith.constant 0 : index
    %c0_13 = arith.constant 0 : index
    %18 = vector.load %arg6[%c0_12, %c0_13] : memref<256x128xbf16, #tpu.memory_space<vmem>>, vector<256x128xbf16>
    %cst_14 = arith.constant dense<0.000000e+00> : vector<8x128xf32>
    %19 = tpu.matmul %17, %18, %cst_14 {dimension_numbers = #tpu.dot_dimension_numbers<[1], [0], [0], [1], [0, 0, 1, 1], [], []>} : vector<8x256xbf16>, vector<256x128xbf16>, vector<8x128xf32> -> vector<8x128xf32>
    %c0_15 = arith.constant 0 : index
    %c0_16 = arith.constant 0 : index
    %20 = vector.load %arg7[%c0_15, %c0_16] : memref<1x128xf32, #tpu.memory_space<vmem>>, vector<1x128xf32>
    %21 = vector.broadcast %20 : vector<1x128xf32> to vector<8x128xf32>
    %22 = arith.addf %19, %21 : vector<8x128xf32>
    %c0_17 = arith.constant 0 : index
    %c0_18 = arith.constant 0 : index
    %23 = vector.load %arg8[%c0_17, %c0_18] : memref<8x128xf32, #tpu.memory_space<vmem>>, vector<8x128xf32>
    tpu.vector_store %arg8[%c0_17, %c0_18], %22 {strides = array<i32>} : memref<8x128xf32, #tpu.memory_space<vmem>>, vector<8x128xf32>,
    return
  }
  func.func @transform_0(%arg0: i32) -> (i32, i32) {
    %c0_i32 = arith.constant 0 : i32
    %c0_i32_0 = arith.constant 0 : i32
    return %arg0, %c0_i32 : i32, i32
  }
  func.func @transform_1(%arg0: i32) -> (i32, i32) {
    %c0_i32 = arith.constant 0 : i32
    %c0_i32_0 = arith.constant 0 : i32
    %c0_i32_1 = arith.constant 0 : i32
    return %c0_i32, %c0_i32_0 : i32, i32
  }
  func.func @transform_2(%arg0: i32) -> (i32, i32) {
    %c0_i32 = arith.constant 0 : i32
    %c0_i32_0 = arith.constant 0 : i32
    %c0_i32_1 = arith.constant 0 : i32
    return %c0_i32, %c0_i32_0 : i32, i32
  }
  func.func @transform_3(%arg0: i32) -> (i32, i32) {
    %c0_i32 = arith.constant 0 : i32
    %c0_i32_0 = arith.constant 0 : i32
    %c0_i32_1 = arith.constant 0 : i32
    return %c0_i32, %c0_i32_0 : i32, i32
  }
  func.func @transform_4(%arg0: i32) -> (i32, i32) {
    %c0_i32 = arith.constant 0 : i32
    %c0_i32_0 = arith.constant 0 : i32
    %c0_i32_1 = arith.constant 0 : i32
    return %c0_i32, %c0_i32_0 : i32, i32
  }
  func.func @transform_5(%arg0: i32) -> (i32, i32) {
    %c0_i32 = arith.constant 0 : i32
    %c0_i32_0 = arith.constant 0 : i32
    %c0_i32_1 = arith.constant 0 : i32
    return %c0_i32, %c0_i32_0 : i32, i32
  }
  func.func @transform_6(%arg0: i32) -> (i32, i32) {
    %c0_i32 = arith.constant 0 : i32
    %c0_i32_0 = arith.constant 0 : i32
    %c0_i32_1 = arith.constant 0 : i32
    return %c0_i32, %c0_i32_0 : i32, i32
  }
  func.func @transform_7(%arg0: i32) -> (i32, i32) {
    %c0_i32 = arith.constant 0 : i32
    %c0_i32_0 = arith.constant 0 : i32
    return %arg0, %c0_i32 : i32, i32
  }
}

module attributes {stable_mosaic.version = 11 : i64} {
  func.func @_critic_fused_kernel(%arg0: i32, %arg1: memref<8x1024xf32, #tpu.memory_space<vmem>>, %arg2: memref<1024x512xbf16, #tpu.memory_space<vmem>>, %arg3: memref<1x512xf32, #tpu.memory_space<vmem>>, %arg4: memref<512x256xbf16, #tpu.memory_space<vmem>>, %arg5: memref<1x256xf32, #tpu.memory_space<vmem>>, %arg6: memref<256x128xbf16, #tpu.memory_space<vmem>>, %arg7: memref<1x128xf32, #tpu.memory_space<vmem>>, %arg8: memref<8x128xf32, #tpu.memory_space<vmem>>) attributes {dimension_semantics = [#tpu.dimension_semantics<parallel>], iteration_bounds = array<i64: 1>, scalar_prefetch = 0 : i64, scratch_operands = 0 : i64, tpu.core_type = #tpu.core_type<tc>, window_params = [{transform_indices = @transform_0, window_bounds = array<i64: 8, 1024>}, {pipeline_mode = #tpu.pipeline_mode<synchronous>, transform_indices = @transform_1, window_bounds = array<i64: 1024, 512>}, {pipeline_mode = #tpu.pipeline_mode<synchronous>, transform_indices = @transform_2, window_bounds = array<i64: 1, 512>}, {pipeline_mode = #tpu.pipeline_mode<synchronous>, transform_indices = @transform_3, window_bounds = array<i64: 512, 256>}, {pipeline_mode = #tpu.pipeline_mode<synchronous>, transform_indices = @transform_4, window_bounds = array<i64: 1, 256>}, {pipeline_mode = #tpu.pipeline_mode<synchronous>, transform_indices = @transform_5, window_bounds = array<i64: 256, 128>}, {pipeline_mode = #tpu.pipeline_mode<synchronous>, transform_indices = @transform_6, window_bounds = array<i64: 1, 128>}, {transform_indices = @transform_7, window_bounds = array<i64: 8, 128>}]} {
    %c0 = arith.constant 0 : index
    %c0_0 = arith.constant 0 : index
    %0 = vector.load %arg1[%c0, %c0_0] : memref<8x1024xf32, #tpu.memory_space<vmem>>, vector<8x1024xf32>
    %1 = arith.truncf %0 : vector<8x1024xf32> to vector<8x1024xbf16>
    %c0_1 = arith.constant 0 : index
    %c0_2 = arith.constant 0 : index
    %2 = vector.load %arg2[%c0_1, %c0_2] : memref<1024x512xbf16, #tpu.memory_space<vmem>>, vector<1024x512xbf16>
    %cst = arith.constant dense<0.000000e+00> : vector<8x512xf32>
    %3 = tpu.matmul %1, %2, %cst {dimension_numbers = #tpu.dot_dimension_numbers<[1], [0], [0], [1], [0, 0, 1, 1], [], []>} : vector<8x1024xbf16>, vector<1024x512xbf16>, vector<8x512xf32> -> vector<8x512xf32>
    %c0_3 = arith.constant 0 : index
    %c0_4 = arith.constant 0 : index
    %4 = vector.load %arg3[%c0_3, %c0_4] : memref<1x512xf32, #tpu.memory_space<vmem>>, vector<1x512xf32>
    %5 = vector.broadcast %4 : vector<1x512xf32> to vector<8x512xf32>
    %6 = arith.addf %3, %5 : vector<8x512xf32>
    %cst_5 = arith.constant 0.000000e+00 : f32
    %7 = vector.broadcast %cst_5 : f32 to vector<8x512xf32>
    %8 = arith.maximumf %6, %7 : vector<8x512xf32>
    %9 = arith.truncf %8 : vector<8x512xf32> to vector<8x512xbf16>
    %c0_6 = arith.constant 0 : index
    %c0_7 = arith.constant 0 : index
    %10 = vector.load %arg4[%c0_6, %c0_7] : memref<512x256xbf16, #tpu.memory_space<vmem>>, vector<512x256xbf16>
    %cst_8 = arith.constant dense<0.000000e+00> : vector<8x256xf32>
    %11 = tpu.matmul %9, %10, %cst_8 {dimension_numbers = #tpu.dot_dimension_numbers<[1], [0], [0], [1], [0, 0, 1, 1], [], []>} : vector<8x512xbf16>, vector<512x256xbf16>, vector<8x256xf32> -> vector<8x256xf32>
    %c0_9 = arith.constant 0 : index
    %c0_10 = arith.constant 0 : index
    %12 = vector.load %arg5[%c0_9, %c0_10] : memref<1x256xf32, #tpu.memory_space<vmem>>, vector<1x256xf32>
    %13 = vector.broadcast %12 : vector<1x256xf32> to vector<8x256xf32>
    %14 = arith.addf %11, %13 : vector<8x256xf32>
    %cst_11 = arith.constant 0.000000e+00 : f32
    %15 = vector.broadcast %cst_11 : f32 to vector<8x256xf32>
    %16 = arith.maximumf %14, %15 : vector<8x256xf32>
    %17 = arith.truncf %16 : vector<8x256xf32> to vector<8x256xbf16>
    %c0_12 = arith.constant 0 : index
    %c0_13 = arith.constant 0 : index
    %18 = vector.load %arg6[%c0_12, %c0_13] : memref<256x128xbf16, #tpu.memory_space<vmem>>, vector<256x128xbf16>
    %cst_14 = arith.constant dense<0.000000e+00> : vector<8x128xf32>
    %19 = tpu.matmul %17, %18, %cst_14 {dimension_numbers = #tpu.dot_dimension_numbers<[1], [0], [0], [1], [0, 0, 1, 1], [], []>} : vector<8x256xbf16>, vector<256x128xbf16>, vector<8x128xf32> -> vector<8x128xf32>
    %c0_15 = arith.constant 0 : index
    %c0_16 = arith.constant 0 : index
    %20 = vector.load %arg7[%c0_15, %c0_16] : memref<1x128xf32, #tpu.memory_space<vmem>>, vector<1x128xf32>
    %21 = vector.broadcast %20 : vector<1x128xf32> to vector<8x128xf32>
    %22 = arith.addf %19, %21 : vector<8x128xf32>
    %c0_17 = arith.constant 0 : index
    %c0_18 = arith.constant 0 : index
    %23 = vector.load %arg8[%c0_17, %c0_18] : memref<8x128xf32, #tpu.memory_space<vmem>>, vector<8x128xf32>
    tpu.vector_store %arg8[%c0_17, %c0_18], %22 {strides = array<i32>} : memref<8x128xf32, #tpu.memory_space<vmem>>, vector<8x128xf32>,
    return
  }
  func.func @transform_0(%arg0: i32) -> (i32, i32) {
    %c0_i32 = arith.constant 0 : i32
    %c0_i32_0 = arith.constant 0 : i32
    return %arg0, %c0_i32 : i32, i32
  }
  func.func @transform_1(%arg0: i32) -> (i32, i32) {
    %c0_i32 = arith.constant 0 : i32
    %c0_i32_0 = arith.constant 0 : i32
    %c0_i32_1 = arith.constant 0 : i32
    return %c0_i32, %c0_i32_0 : i32, i32
  }
  func.func @transform_2(%arg0: i32) -> (i32, i32) {
    %c0_i32 = arith.constant 0 : i32
    %c0_i32_0 = arith.constant 0 : i32
    %c0_i32_1 = arith.constant 0 : i32
    return %c0_i32, %c0_i32_0 : i32, i32
  }
  func.func @transform_3(%arg0: i32) -> (i32, i32) {
    %c0_i32 = arith.constant 0 : i32
    %c0_i32_0 = arith.constant 0 : i32
    %c0_i32_1 = arith.constant 0 : i32
    return %c0_i32, %c0_i32_0 : i32, i32
  }
  func.func @transform_4(%arg0: i32) -> (i32, i32) {
    %c0_i32 = arith.constant 0 : i32
    %c0_i32_0 = arith.constant 0 : i32
    %c0_i32_1 = arith.constant 0 : i32
    return %c0_i32, %c0_i32_0 : i32, i32
  }
  func.func @transform_5(%arg0: i32) -> (i32, i32) {
    %c0_i32 = arith.constant 0 : i32
    %c0_i32_0 = arith.constant 0 : i32
    %c0_i32_1 = arith.constant 0 : i32
    return %c0_i32, %c0_i32_0 : i32, i32
  }
  func.func @transform_6(%arg0: i32) -> (i32, i32) {
    %c0_i32 = arith.constant 0 : i32
    %c0_i32_0 = arith.constant 0 : i32
    %c0_i32_1 = arith.constant 0 : i32
    return %c0_i32, %c0_i32_0 : i32, i32
  }
  func.func @transform_7(%arg0: i32) -> (i32, i32) {
    %c0_i32 = arith.constant 0 : i32
    %c0_i32_0 = arith.constant 0 : i32
    return %arg0, %c0_i32 : i32, i32
  }
}

</mosaic_0001>

<llo_original>
// kernel: tpu_custom_call.1
$region0: #{tpu_custom_call.1}
  #allocation0 [shape = 'u32[]', space=smem, size = 0x4, offset = 0x4, fixed_abs, tag = 'smem constant byte address 0x4 - core index']
  #allocation1 [shape = 'u32[144,128]{1,0:T(1,128)}', space=vmem, size = 0x12000, scoped, tag = 'internal scratch']
  %s0 = inlined_call_operand.hbm [shape: f32[8,1024], index: 0, kind: input, shape index: {}]
  %s1 = inlined_call_operand.hbm [shape: bf16[1024,512], index: 1, kind: input, shape index: {}]
  %s2 = inlined_call_operand.vmem [shape: f32[1,512], index: 2, kind: input, shape index: {}]
  %s3 = inlined_call_operand.hbm [shape: bf16[512,256], index: 3, kind: input, shape index: {}]
  %s4 = inlined_call_operand.vmem [shape: f32[1,256], index: 4, kind: input, shape index: {}]
  %s5 = inlined_call_operand.hbm [shape: bf16[256,128], index: 5, kind: input, shape index: {}]
  %s6 = inlined_call_operand.vmem [shape: f32[1,128], index: 6, kind: input, shape index: {}]
  %s7 = inlined_call_operand.hbm [shape: f32[8,128], index: 7, kind: output, shape index: {}]
  %s8 = sld [smem:[#allocation0]]
  $region54: #{tpu_custom_call.1} parent=0
    _
  %s10 = ssub.s32 1, %s8
  %s11 = scalar_select 0, %s10, %s8
  $region1: #{tpu_custom_call.1} parent=0
    #allocation2 [shape = 'u8[32768]{0}', space=vmem, size = 0x8000, scoped, tag = 'input window, operand 0, single buffered']
    #allocation3 [shape = 's32[1]{0}', space=sflag, size = 0x4, scoped, tag = 'scoped memory for tpu_custom_call.1']
    #allocation4 [shape = 's32[1]{0}', space=sflag, size = 0x4, scoped, tag = 'scoped memory for tpu_custom_call.1']
    #allocation5 [shape = 'u8[1048576]{0}', space=vmem, size = 0x100000, scoped, tag = 'input window, operand 1, single buffered']
    #allocation6 [shape = 's32[1]{0}', space=sflag, size = 0x4, scoped, tag = 'scoped memory for tpu_custom_call.1']
    #allocation7 [shape = 'u8[262144]{0}', space=vmem, size = 0x40000, scoped, tag = 'input window, operand 3, single buffered']
    #allocation8 [shape = 'u8[65536]{0}', space=vmem, size = 0x10000, scoped, tag = 'input window, operand 5, single buffered']
    #allocation9 [shape = 's32[1]{0}', space=sflag, size = 0x4, scoped, tag = 'scoped memory for tpu_custom_call.1']
    #allocation10 [shape = 'u8[4096]{0}', space=vmem, size = 0x1000, scoped, tag = 'output window, operand 0, single buffered']
    %12 = vsyncpa [#allocation3], 0
    %13 = vsyncpa [#allocation6], 0
    %14 = vsyncpa [#allocation9], 0
    %15 = vsyncpa [#allocation4], 0
    // Predicated region
    $region2: #{tpu_custom_call.1} parent=1 // pred_check
      _
    $region3: #{tpu_custom_call.1} parent=1 // pred_check_branch
      %17 = sbr.rel (0) target = $region5
    $region4: #{tpu_custom_call.1} parent=1 // pred_region
      %s19 = ssub.s32 1024, 1024
      %20 = vsyncadd [#allocation3], %s19
      %s22 = sshll.u32 [#allocation2], 4
      %s23 = int_to_ptr.vmem [resolvable:$true] %s22
      %25 = dma.hbm_to_vmem [thread:$0]  %s0, 1024, %s23, [#allocation3]
    $region5: #{tpu_custom_call.1} parent=1 // pred_fallthru
      _
    // Predicated region
    $region6: #{tpu_custom_call.1} parent=1 // pred_check
      _
    $region7: #{tpu_custom_call.1} parent=1 // pred_check_branch
      %27 = sbr.rel (0) target = $region9
    $region8: #{tpu_custom_call.1} parent=1 // pred_region
      %s29 = ssub.s32 32768, 32768
      %30 = vsyncadd [#allocation6], %s29
      %s31 = sshll.u32 [#allocation5], 4
      %s32 = int_to_ptr.vmem [resolvable:$true] %s31
      %37 = dma.hbm_to_vmem [thread:$0]  %s1, 32768, %s32, [#allocation6], 256, 256, 16
    $region9: #{tpu_custom_call.1} parent=1 // pred_fallthru
      _
    // Predicated region
    $region10: #{tpu_custom_call.1} parent=1 // pred_check
      _
    $region11: #{tpu_custom_call.1} parent=1 // pred_check_branch
      %39 = sbr.rel (0) target = $region13
    $region12: #{tpu_custom_call.1} parent=1 // pred_region
      _
    $region13: #{tpu_custom_call.1} parent=1 // pred_fallthru
      _
    // Predicated region
    $region14: #{tpu_custom_call.1} parent=1 // pred_check
      _
    $region15: #{tpu_custom_call.1} parent=1 // pred_check_branch
      %41 = sbr.rel (0) target = $region17
    $region16: #{tpu_custom_call.1} parent=1 // pred_region
      %s43 = ssub.s32 8192, 8192
      %44 = vsyncadd [#allocation6], %s43
      %s45 = sshll.u32 [#allocation7], 4
      %s46 = int_to_ptr.vmem [resolvable:$true] %s45
      %51 = dma.hbm_to_vmem [thread:$0]  %s3, 8192, %s46, [#allocation6], 128, 128, 8
    $region17: #{tpu_custom_call.1} parent=1 // pred_fallthru
      _
    // Predicated region
    $region18: #{tpu_custom_call.1} parent=1 // pred_check
      _
    $region19: #{tpu_custom_call.1} parent=1 // pred_check_branch
      %53 = sbr.rel (0) target = $region21
    $region20: #{tpu_custom_call.1} parent=1 // pred_region
      _
    $region21: #{tpu_custom_call.1} parent=1 // pred_fallthru
      _
    // Predicated region
    $region22: #{tpu_custom_call.1} parent=1 // pred_check
      _
    $region23: #{tpu_custom_call.1} parent=1 // pred_check_branch
      %55 = sbr.rel (0) target = $region25
    $region24: #{tpu_custom_call.1} parent=1 // pred_region
      %s57 = ssub.s32 2048, 2048
      %58 = vsyncadd [#allocation9], %s57
      %s59 = sshll.u32 [#allocation8], 4
      %s60 = int_to_ptr.vmem [resolvable:$true] %s59
      %65 = dma.hbm_to_vmem [thread:$0]  %s5, 2048, %s60, [#allocation9], 64, 64, 4
    $region25: #{tpu_custom_call.1} parent=1 // pred_fallthru
      _
    // Predicated region
    $region26: #{tpu_custom_call.1} parent=1 // pred_check
      _
    $region27: #{tpu_custom_call.1} parent=1 // pred_check_branch
      %67 = sbr.rel (0) target = $region29
    $region28: #{tpu_custom_call.1} parent=1 // pred_region
      _
    $region29: #{tpu_custom_call.1} parent=1 // pred_fallthru
      _
    // Predicated region
    $region30: #{tpu_custom_call.1} parent=1 // pred_check
      _
    $region31: #{tpu_custom_call.1} parent=1 // pred_check_branch
      %69 = sbr.rel (0) target = $region33
    $region32: #{tpu_custom_call.1} parent=1 // pred_region
      %70 = dma.done [#allocation3], 1024
    $region33: #{tpu_custom_call.1} parent=1 // pred_fallthru
      _
    // Predicated region
    $region34: #{tpu_custom_call.1} parent=1 // pred_check
      _
    $region35: #{tpu_custom_call.1} parent=1 // pred_check_branch
      %72 = sbr.rel (0) target = $region37
    $region36: #{tpu_custom_call.1} parent=1 // pred_region
      %73 = dma.done [#allocation6], 32768
    $region37: #{tpu_custom_call.1} parent=1 // pred_fallthru
      _
    // Predicated region
    $region38: #{tpu_custom_call.1} parent=1 // pred_check
      _
    $region39: #{tpu_custom_call.1} parent=1 // pred_check_branch
      %75 = sbr.rel (0) target = $region41
    $region40: #{tpu_custom_call.1} parent=1 // pred_region
      %76 = dma.done [#allocation6], 8192
    $region41: #{tpu_custom_call.1} parent=1 // pred_fallthru
      _
    // Predicated region
    $region42: #{tpu_custom_call.1} parent=1 // pred_check
      _
    $region43: #{tpu_custom_call.1} parent=1 // pred_check_branch
      %78 = sbr.rel (0) target = $region45
    $region44: #{tpu_custom_call.1} parent=1 // pred_region
      %79 = dma.done [#allocation9], 2048
    $region45: #{tpu_custom_call.1} parent=1 // pred_fallthru
      _
    %v81 = vld [vmem:[#allocation2] sm:$0xff]
    %v82 = vld [vmem:[#allocation2 + $0x8] sm:$0xff]
    %v83 = vld [vmem:[#allocation2 + $0x10] sm:$0xff]
    %v84 = vld [vmem:[#allocation2 + $0x18] sm:$0xff]
    %v85 = vld [vmem:[#allocation2 + $0x20] sm:$0xff]
    %v86 = vld [vmem:[#allocation2 + $0x28] sm:$0xff]
    %v87 = vld [vmem:[#allocation2 + $0x30] sm:$0xff]
    %v88 = vld [vmem:[#allocation2 + $0x38] sm:$0xff]
    %v89 = vpack.c.bf16 %v81, %v81
    %v90 = vpack.c.bf16 %v82, %v82
    %v91 = vpack.c.bf16 %v83, %v83
    %v92 = vpack.c.bf16 %v84, %v84
    %v93 = vpack.c.bf16 %v85, %v85
    %v94 = vpack.c.bf16 %v86, %v86
    %v95 = vpack.c.bf16 %v87, %v87
    %v96 = vpack.c.bf16 %v88, %v88
    %v97 = vld [vmem:[#allocation5] sm:$0xff]
    %v98 = vld [vmem:[#allocation5 + $0x8] sm:$0xff]
    %v99 = vld [vmem:[#allocation5 + $0x10] sm:$0xff]
    %v100 = vld [vmem:[#allocation5 + $0x18] sm:$0xff]
    %v101 = vld [vmem:[#allocation5 + $0x20] sm:$0xff]
    %v102 = vld [vmem:[#allocation5 + $0x28] sm:$0xff]
    %v103 = vld [vmem:[#allocation5 + $0x30] sm:$0xff]
    %v104 = vld [vmem:[#allocation5 + $0x38] sm:$0xff]
    %v105 = vld [vmem:[#allocation5 + $0x40] sm:$0xff]
    %v106 = vld [vmem:[#allocation5 + $0x48] sm:$0xff]
    %v107 = vld [vmem:[#allocation5 + $0x50] sm:$0xff]
    %v108 = vld [vmem:[#allocation5 + $0x58] sm:$0xff]
    %v109 = vld [vmem:[#allocation5 + $0x60] sm:$0xff]
    %v110 = vld [vmem:[#allocation5 + $0x68] sm:$0xff]
    %v111 = vld [vmem:[#allocation5 + $0x70] sm:$0xff]
    %v112 = vld [vmem:[#allocation5 + $0x78] sm:$0xff]
    %v113 = vld [vmem:[#allocation5 + $0x80] sm:$0xff]
    %v114 = vld [vmem:[#allocation5 + $0x88] sm:$0xff]
    %v115 = vld [vmem:[#allocation5 + $0x90] sm:$0xff]
    %v116 = vld [vmem:[#allocation5 + $0x98] sm:$0xff]
    %v117 = vld [vmem:[#allocation5 + $0xa0] sm:$0xff]
    %v118 = vld [vmem:[#allocation5 + $0xa8] sm:$0xff]
    %v119 = vld [vmem:[#allocation5 + $0xb0] sm:$0xff]
    %v120 = vld [vmem:[#allocation5 + $0xb8] sm:$0xff]
    %v121 = vld [vmem:[#allocation5 + $0xc0] sm:$0xff]
    %v122 = vld [vmem:[#allocation5 + $0xc8] sm:$0xff]
    %v123 = vld [vmem:[#allocation5 + $0xd0] sm:$0xff]
    %v124 = vld [vmem:[#allocation5 + $0xd8] sm:$0xff]
    %v125 = vld [vmem:[#allocation5 + $0xe0] sm:$0xff]
    %v126 = vld [vmem:[#allocation5 + $0xe8] sm:$0xff]
    %v127 = vld [vmem:[#allocation5 + $0xf0] sm:$0xff]
    %v128 = vld [vmem:[#allocation5 + $0xf8] sm:$0xff]
    %v129 = vld [vmem:[#allocation5 + $0x100] sm:$0xff]
    %v130 = vld [vmem:[#allocation5 + $0x108] sm:$0xff]
    %v131 = vld [vmem:[#allocation5 + $0x110] sm:$0xff]
    %v132 = vld [vmem:[#allocation5 + $0x118] sm:$0xff]
    %v133 = vld [vmem:[#allocation5 + $0x120] sm:$0xff]
    %v134 = vld [vmem:[#allocation5 + $0x128] sm:$0xff]
    %v135 = vld [vmem:[#allocation5 + $0x130] sm:$0xff]
    %v136 = vld [vmem:[#allocation5 + $0x138] sm:$0xff]
    %v137 = vld [vmem:[#allocation5 + $0x140] sm:$0xff]
    %v138 = vld [vmem:[#allocation5 + $0x148] sm:$0xff]
    %v139 = vld [vmem:[#allocation5 + $0x150] sm:$0xff]
    %v140 = vld [vmem:[#allocation5 + $0x158] sm:$0xff]
    %v141 = vld [vmem:[#allocation5 + $0x160] sm:$0xff]
    %v142 = vld [vmem:[#allocation5 + $0x168] sm:$0xff]
    %v143 = vld [vmem:[#allocation5 + $0x170] sm:$0xff]
    %v144 = vld [vmem:[#allocation5 + $0x178] sm:$0xff]
    %v145 = vld [vmem:[#allocation5 + $0x180] sm:$0xff]
    %v146 = vld [vmem:[#allocation5 + $0x188] sm:$0xff]
    %v147 = vld [vmem:[#allocation5 + $0x190] sm:$0xff]
    %v148 = vld [vmem:[#allocation5 + $0x198] sm:$0xff]
    %v149 = vld [vmem:[#allocation5 + $0x1a0] sm:$0xff]
    %v150 = vld [vmem:[#allocation5 + $0x1a8] sm:$0xff]
    %v151 = vld [vmem:[#allocation5 + $0x1b0] sm:$0xff]
    %v152 = vld [vmem:[#allocation5 + $0x1b8] sm:$0xff]
    %v153 = vld [vmem:[#allocation5 + $0x1c0] sm:$0xff]
    %v154 = vld [vmem:[#allocation5 + $0x1c8] sm:$0xff]
    %v155 = vld [vmem:[#allocation5 + $0x1d0] sm:$0xff]
    %v156 = vld [vmem:[#allocation5 + $0x1d8] sm:$0xff]
    %v157 = vld [vmem:[#allocation5 + $0x1e0] sm:$0xff]
    %v158 = vld [vmem:[#allocation5 + $0x1e8] sm:$0xff]
    %v159 = vld [vmem:[#allocation5 + $0x1f0] sm:$0xff]
    %v160 = vld [vmem:[#allocation5 + $0x1f8] sm:$0xff]
    %v161 = vld [vmem:[#allocation5 + $0x200] sm:$0xff]
    %v162 = vld [vmem:[#allocation5 + $0x208] sm:$0xff]
    %v163 = vld [vmem:[#allocation5 + $0x210] sm:$0xff]
    %v164 = vld [vmem:[#allocation5 + $0x218] sm:$0xff]
    %v165 = vld [vmem:[#allocation5 + $0x220] sm:$0xff]
    %v166 = vld [vmem:[#allocation5 + $0x228] sm:$0xff]
    %v167 = vld [vmem:[#allocation5 + $0x230] sm:$0xff]
    %v168 = vld [vmem:[#allocation5 + $0x238] sm:$0xff]
    %v169 = vld [vmem:[#allocation5 + $0x240] sm:$0xff]
    %v170 = vld [vmem:[#allocation5 + $0x248] sm:$0xff]
    %v171 = vld [vmem:[#allocation5 + $0x250] sm:$0xff]
    %v172 = vld [vmem:[#allocation5 + $0x258] sm:$0xff]
    %v173 = vld [vmem:[#allocation5 + $0x260] sm:$0xff]
    %v174 = vld [vmem:[#allocation5 + $0x268] sm:$0xff]
    %v175 = vld [vmem:[#allocation5 + $0x270] sm:$0xff]
    %v176 = vld [vmem:[#allocation5 + $0x278] sm:$0xff]
    %v177 = vld [vmem:[#allocation5 + $0x280] sm:$0xff]
    %v178 = vld [vmem:[#allocation5 + $0x288] sm:$0xff]
    %v179 = vld [vmem:[#allocation5 + $0x290] sm:$0xff]
    %v180 = vld [vmem:[#allocation5 + $0x298] sm:$0xff]
    %v181 = vld [vmem:[#allocation5 + $0x2a0] sm:$0xff]
    %v182 = vld [vmem:[#allocation5 + $0x2a8] sm:$0xff]
    %v183 = vld [vmem:[#allocation5 + $0x2b0] sm:$0xff]
    %v184 = vld [vmem:[#allocation5 + $0x2b8] sm:$0xff]
    %v185 = vld [vmem:[#allocation5 + $0x2c0] sm:$0xff]
    %v186 = vld [vmem:[#allocation5 + $0x2c8] sm:$0xff]
    %v187 = vld [vmem:[#allocation5 + $0x2d0] sm:$0xff]
    %v188 = vld [vmem:[#allocation5 + $0x2d8] sm:$0xff]
    %v189 = vld [vmem:[#allocation5 + $0x2e0] sm:$0xff]
    %v190 = vld [vmem:[#allocation5 + $0x2e8] sm:$0xff]
    %v191 = vld [vmem:[#allocation5 + $0x2f0] sm:$0xff]
    %v192 = vld [vmem:[#allocation5 + $0x2f8] sm:$0xff]
    %v193 = vld [vmem:[#allocation5 + $0x300] sm:$0xff]
    %v194 = vld [vmem:[#allocation5 + $0x308] sm:$0xff]
    %v195 = vld [vmem:[#allocation5 + $0x310] sm:$0xff]
    %v196 = vld [vmem:[#allocation5 + $0x318] sm:$0xff]
    %v197 = vld [vmem:[#allocation5 + $0x320] sm:$0xff]
    %v198 = vld [vmem:[#allocation5 + $0x328] sm:$0xff]
    %v199 = vld [vmem:[#allocation5 + $0x330] sm:$0xff]
    %v200 = vld [vmem:[#allocation5 + $0x338] sm:$0xff]
    %v201 = vld [vmem:[#allocation5 + $0x340] sm:$0xff]
    %v202 = vld [vmem:[#allocation5 + $0x348] sm:$0xff]
    %v203 = vld [vmem:[#allocation5 + $0x350] sm:$0xff]
    %v204 = vld [vmem:[#allocation5 + $0x358] sm:$0xff]
    %v205 = vld [vmem:[#allocation5 + $0x360] sm:$0xff]
    %v206 = vld [vmem:[#allocation5 + $0x368] sm:$0xff]
    %v207 = vld [vmem:[#allocation5 + $0x370] sm:$0xff]
    %v208 = vld [vmem:[#allocation5 + $0x378] sm:$0xff]
    %v209 = vld [vmem:[#allocation5 + $0x380] sm:$0xff]
    %v210 = vld [vmem:[#allocation5 + $0x388] sm:$0xff]
    %v211 = vld [vmem:[#allocation5 + $0x390] sm:$0xff]
    %v212 = vld [vmem:[#allocation5 + $0x398] sm:$0xff]
    %v213 = vld [vmem:[#allocation5 + $0x3a0] sm:$0xff]
    %v214 = vld [vmem:[#allocation5 + $0x3a8] sm:$0xff]
    %v215 = vld [vmem:[#allocation5 + $0x3b0] sm:$0xff]
    %v216 = vld [vmem:[#allocation5 + $0x3b8] sm:$0xff]
    %v217 = vld [vmem:[#allocation5 + $0x3c0] sm:$0xff]
    %v218 = vld [vmem:[#allocation5 + $0x3c8] sm:$0xff]
    %v219 = vld [vmem:[#allocation5 + $0x3d0] sm:$0xff]
    %v220 = vld [vmem:[#allocation5 + $0x3d8] sm:$0xff]
    %v221 = vld [vmem:[#allocation5 + $0x3e0] sm:$0xff]
    %v222 = vld [vmem:[#allocation5 + $0x3e8] sm:$0xff]
    %v223 = vld [vmem:[#allocation5 + $0x3f0] sm:$0xff]
    %v224 = vld [vmem:[#allocation5 + $0x3f8] sm:$0xff]
    %v225 = vld [vmem:[#allocation5 + $0x400] sm:$0xff]
    %v226 = vld [vmem:[#allocation5 + $0x408] sm:$0xff]
    %v227 = vld [vmem:[#allocation5 + $0x410] sm:$0xff]
    %v228 = vld [vmem:[#allocation5 + $0x418] sm:$0xff]
    %v229 = vld [vmem:[#allocation5 + $0x420] sm:$0xff]
    %v230 = vld [vmem:[#allocation5 + $0x428] sm:$0xff]
    %v231 = vld [vmem:[#allocation5 + $0x430] sm:$0xff]
    %v232 = vld [vmem:[#allocation5 + $0x438] sm:$0xff]
    %v233 = vld [vmem:[#allocation5 + $0x440] sm:$0xff]
    %v234 = vld [vmem:[#allocation5 + $0x448] sm:$0xff]
    %v235 = vld [vmem:[#allocation5 + $0x450] sm:$0xff]
    %v236 = vld [vmem:[#allocation5 + $0x458] sm:$0xff]
    %v237 = vld [vmem:[#allocation5 + $0x460] sm:$0xff]
    %v238 = vld [vmem:[#allocation5 + $0x468] sm:$0xff]
    %v239 = vld [vmem:[#allocation5 + $0x470] sm:$0xff]
    %v240 = vld [vmem:[#allocation5 + $0x478] sm:$0xff]
    %v241 = vld [vmem:[#allocation5 + $0x480] sm:$0xff]
    %v242 = vld [vmem:[#allocation5 + $0x488] sm:$0xff]
    %v243 = vld [vmem:[#allocation5 + $0x490] sm:$0xff]
    %v244 = vld [vmem:[#allocation5 + $0x498] sm:$0xff]
    %v245 = vld [vmem:[#allocation5 + $0x4a0] sm:$0xff]
    %v246 = vld [vmem:[#allocation5 + $0x4a8] sm:$0xff]
    %v247 = vld [vmem:[#allocation5 + $0x4b0] sm:$0xff]
    %v248 = vld [vmem:[#allocation5 + $0x4b8] sm:$0xff]
    %v249 = vld [vmem:[#allocation5 + $0x4c0] sm:$0xff]
    %v250 = vld [vmem:[#allocation5 + $0x4c8] sm:$0xff]
    %v251 = vld [vmem:[#allocation5 + $0x4d0] sm:$0xff]
    %v252 = vld [vmem:[#allocation5 + $0x4d8] sm:$0xff]
    %v253 = vld [vmem:[#allocation5 + $0x4e0] sm:$0xff]
    %v254 = vld [vmem:[#allocation5 + $0x4e8] sm:$0xff]
    %v255 = vld [vmem:[#allocation5 + $0x4f0] sm:$0xff]
    %v256 = vld [vmem:[#allocation5 + $0x4f8] sm:$0xff]
    %v257 = vld [vmem:[#allocation5 + $0x500] sm:$0xff]
    %v258 = vld [vmem:[#allocation5 + $0x508] sm:$0xff]
    %v259 = vld [vmem:[#allocation5 + $0x510] sm:$0xff]
    %v260 = vld [vmem:[#allocation5 + $0x518] sm:$0xff]
    %v261 = vld [vmem:[#allocation5 + $0x520] sm:$0xff]
    %v262 = vld [vmem:[#allocation5 + $0x528] sm:$0xff]
    %v263 = vld [vmem:[#allocation5 + $0x530] sm:$0xff]
    %v264 = vld [vmem:[#allocation5 + $0x538] sm:$0xff]
    %v265 = vld [vmem:[#allocation5 + $0x540] sm:$0xff]
    %v266 = vld [vmem:[#allocation5 + $0x548] sm:$0xff]
    %v267 = vld [vmem:[#allocation5 + $0x550] sm:$0xff]
    %v268 = vld [vmem:[#allocation5 + $0x558] sm:$0xff]
    %v269 = vld [vmem:[#allocation5 + $0x560] sm:$0xff]
    %v270 = vld [vmem:[#allocation5 + $0x568] sm:$0xff]
    %v271 = vld [vmem:[#allocation5 + $0x570] sm:$0xff]
    %v272 = vld [vmem:[#allocation5 + $0x578] sm:$0xff]
    %v273 = vld [vmem:[#allocation5 + $0x580] sm:$0xff]
    %v274 = vld [vmem:[#allocation5 + $0x588] sm:$0xff]
    %v275 = vld [vmem:[#allocation5 + $0x590] sm:$0xff]
    %v276 = vld [vmem:[#allocation5 + $0x598] sm:$0xff]
    %v277 = vld [vmem:[#allocation5 + $0x5a0] sm:$0xff]
    %v278 = vld [vmem:[#allocation5 + $0x5a8] sm:$0xff]
    %v279 = vld [vmem:[#allocation5 + $0x5b0] sm:$0xff]
    %v280 = vld [vmem:[#allocation5 + $0x5b8] sm:$0xff]
    %v281 = vld [vmem:[#allocation5 + $0x5c0] sm:$0xff]
    %v282 = vld [vmem:[#allocation5 + $0x5c8] sm:$0xff]
    %v283 = vld [vmem:[#allocation5 + $0x5d0] sm:$0xff]
    %v284 = vld [vmem:[#allocation5 + $0x5d8] sm:$0xff]
    %v285 = vld [vmem:[#allocation5 + $0x5e0] sm:$0xff]
    %v286 = vld [vmem:[#allocation5 + $0x5e8] sm:$0xff]
    %v287 = vld [vmem:[#allocation5 + $0x5f0] sm:$0xff]
    %v288 = vld [vmem:[#allocation5 + $0x5f8] sm:$0xff]
    %v289 = vld [vmem:[#allocation5 + $0x600] sm:$0xff]
    %v290 = vld [vmem:[#allocation5 + $0x608] sm:$0xff]
    %v291 = vld [vmem:[#allocation5 + $0x610] sm:$0xff]
    %v292 = vld [vmem:[#allocation5 + $0x618] sm:$0xff]
    %v293 = vld [vmem:[#allocation5 + $0x620] sm:$0xff]
    %v294 = vld [vmem:[#allocation5 + $0x628] sm:$0xff]
    %v295 = vld [vmem:[#allocation5 + $0x630] sm:$0xff]
    %v296 = vld [vmem:[#allocation5 + $0x638] sm:$0xff]
    %v297 = vld [vmem:[#allocation5 + $0x640] sm:$0xff]
    %v298 = vld [vmem:[#allocation5 + $0x648] sm:$0xff]
    %v299 = vld [vmem:[#allocation5 + $0x650] sm:$0xff]
    %v300 = vld [vmem:[#allocation5 + $0x658] sm:$0xff]
    %v301 = vld [vmem:[#allocation5 + $0x660] sm:$0xff]
    %v302 = vld [vmem:[#allocation5 + $0x668] sm:$0xff]
    %v303 = vld [vmem:[#allocation5 + $0x670] sm:$0xff]
    %v304 = vld [vmem:[#allocation5 + $0x678] sm:$0xff]
    %v305 = vld [vmem:[#allocation5 + $0x680] sm:$0xff]
    %v306 = vld [vmem:[#allocation5 + $0x688] sm:$0xff]
    %v307 = vld [vmem:[#allocation5 + $0x690] sm:$0xff]
    %v308 = vld [vmem:[#allocation5 + $0x698] sm:$0xff]
    %v309 = vld [vmem:[#allocation5 + $0x6a0] sm:$0xff]
    %v310 = vld [vmem:[#allocation5 + $0x6a8] sm:$0xff]
    %v311 = vld [vmem:[#allocation5 + $0x6b0] sm:$0xff]
    %v312 = vld [vmem:[#allocation5 + $0x6b8] sm:$0xff]
    %v313 = vld [vmem:[#allocation5 + $0x6c0] sm:$0xff]
    %v314 = vld [vmem:[#allocation5 + $0x6c8] sm:$0xff]
    %v315 = vld [vmem:[#allocation5 + $0x6d0] sm:$0xff]
    %v316 = vld [vmem:[#allocation5 + $0x6d8] sm:$0xff]
    %v317 = vld [vmem:[#allocation5 + $0x6e0] sm:$0xff]
    %v318 = vld [vmem:[#allocation5 + $0x6e8] sm:$0xff]
    %v319 = vld [vmem:[#allocation5 + $0x6f0] sm:$0xff]
    %v320 = vld [vmem:[#allocation5 + $0x6f8] sm:$0xff]
    %v321 = vld [vmem:[#allocation5 + $0x700] sm:$0xff]
    %v322 = vld [vmem:[#allocation5 + $0x708] sm:$0xff]
    %v323 = vld [vmem:[#allocation5 + $0x710] sm:$0xff]
    %v324 = vld [vmem:[#allocation5 + $0x718] sm:$0xff]
    %v325 = vld [vmem:[#allocation5 + $0x720] sm:$0xff]
    %v326 = vld [vmem:[#allocation5 + $0x728] sm:$0xff]
    %v327 = vld [vmem:[#allocation5 + $0x730] sm:$0xff]
    %v328 = vld [vmem:[#allocation5 + $0x738] sm:$0xff]
    %v329 = vld [vmem:[#allocation5 + $0x740] sm:$0xff]
    %v330 = vld [vmem:[#allocation5 + $0x748] sm:$0xff]
    %v331 = vld [vmem:[#allocation5 + $0x750] sm:$0xff]
    %v332 = vld [vmem:[#allocation5 + $0x758] sm:$0xff]
    %v333 = vld [vmem:[#allocation5 + $0x760] sm:$0xff]
    %v334 = vld [vmem:[#allocation5 + $0x768] sm:$0xff]
    %v335 = vld [vmem:[#allocation5 + $0x770] sm:$0xff]
    %v336 = vld [vmem:[#allocation5 + $0x778] sm:$0xff]
    %v337 = vld [vmem:[#allocation5 + $0x780] sm:$0xff]
    %v338 = vld [vmem:[#allocation5 + $0x788] sm:$0xff]
    %v339 = vld [vmem:[#allocation5 + $0x790] sm:$0xff]
    %v340 = vld [vmem:[#allocation5 + $0x798] sm:$0xff]
    %v341 = vld [vmem:[#allocation5 + $0x7a0] sm:$0xff]
    %v342 = vld [vmem:[#allocation5 + $0x7a8] sm:$0xff]
    %v343 = vld [vmem:[#allocation5 + $0x7b0] sm:$0xff]
    %v344 = vld [vmem:[#allocation5 + $0x7b8] sm:$0xff]
    %v345 = vld [vmem:[#allocation5 + $0x7c0] sm:$0xff]
    %v346 = vld [vmem:[#allocation5 + $0x7c8] sm:$0xff]
    %v347 = vld [vmem:[#allocation5 + $0x7d0] sm:$0xff]
    %v348 = vld [vmem:[#allocation5 + $0x7d8] sm:$0xff]
    %v349 = vld [vmem:[#allocation5 + $0x7e0] sm:$0xff]
    %v350 = vld [vmem:[#allocation5 + $0x7e8] sm:$0xff]
    %v351 = vld [vmem:[#allocation5 + $0x7f0] sm:$0xff]
    %v352 = vld [vmem:[#allocation5 + $0x7f8] sm:$0xff]
    %v353 = vld [vmem:[%s2] sm:$0xf]
    %v355 = vlaneseq
    %v356 = vshrl.u32 %v355, 7
    %v357 = vsub.s32 0, %v356
    %v358 = vrot.slane %v353, %v357
    %v359 = vlaneseq
    %v360 = vshrl.u32 %v359, 7
    %v361 = vsub.s32 1, %v360
    %v362 = vrot.slane %v353, %v361
    %v363 = vlaneseq
    %v364 = vshrl.u32 %v363, 7
    %v365 = vsub.s32 2, %v364
    %v366 = vrot.slane %v353, %v365
    %v367 = vlaneseq
    %v368 = vshrl.u32 %v367, 7
    %v369 = vsub.s32 3, %v368
    %v370 = vrot.slane %v353, %v369
    %v631 = vunpack.c.l.b16 %v97
    %v632 = vunpack.c.h.b16 %v97
    %v633 = vunpack.c.l.b16 %v98
    %v634 = vunpack.c.h.b16 %v98
    %v635 = vunpack.c.l.b16 %v99
    %v636 = vunpack.c.h.b16 %v99
    %v637 = vunpack.c.l.b16 %v100
    %v638 = vunpack.c.h.b16 %v100
    %v639 = vunpack.c.l.b16 %v101
    %v640 = vunpack.c.h.b16 %v101
    %v641 = vunpack.c.l.b16 %v102
    %v642 = vunpack.c.h.b16 %v102
    %v643 = vunpack.c.l.b16 %v103
    %v644 = vunpack.c.h.b16 %v103
    %v645 = vunpack.c.l.b16 %v104
    %v646 = vunpack.c.h.b16 %v104
    %v647 = vunpack.c.l.b16 %v105
    %v648 = vunpack.c.h.b16 %v105
    %v649 = vunpack.c.l.b16 %v106
    %v650 = vunpack.c.h.b16 %v106
    %v651 = vunpack.c.l.b16 %v107
    %v652 = vunpack.c.h.b16 %v107
    %v653 = vunpack.c.l.b16 %v108
    %v654 = vunpack.c.h.b16 %v108
    %v655 = vunpack.c.l.b16 %v109
    %v656 = vunpack.c.h.b16 %v109
    %v657 = vunpack.c.l.b16 %v110
    %v658 = vunpack.c.h.b16 %v110
    %v659 = vunpack.c.l.b16 %v111
    %v660 = vunpack.c.h.b16 %v111
    %v661 = vunpack.c.l.b16 %v112
    %v662 = vunpack.c.h.b16 %v112
    %v663 = vunpack.c.l.b16 %v113
    %v664 = vunpack.c.h.b16 %v113
    %v665 = vunpack.c.l.b16 %v114
    %v666 = vunpack.c.h.b16 %v114
    %v667 = vunpack.c.l.b16 %v115
    %v668 = vunpack.c.h.b16 %v115
    %v669 = vunpack.c.l.b16 %v116
    %v670 = vunpack.c.h.b16 %v116
    %v671 = vunpack.c.l.b16 %v117
    %v672 = vunpack.c.h.b16 %v117
    %v673 = vunpack.c.l.b16 %v118
    %v674 = vunpack.c.h.b16 %v118
    %v675 = vunpack.c.l.b16 %v119
    %v676 = vunpack.c.h.b16 %v119
    %v677 = vunpack.c.l.b16 %v120
    %v678 = vunpack.c.h.b16 %v120
    %v679 = vunpack.c.l.b16 %v121
    %v680 = vunpack.c.h.b16 %v121
    %v681 = vunpack.c.l.b16 %v122
    %v682 = vunpack.c.h.b16 %v122
    %v683 = vunpack.c.l.b16 %v123
    %v684 = vunpack.c.h.b16 %v123
    %v685 = vunpack.c.l.b16 %v124
    %v686 = vunpack.c.h.b16 %v124
    %v687 = vunpack.c.l.b16 %v125
    %v688 = vunpack.c.h.b16 %v125
    %v689 = vunpack.c.l.b16 %v126
    %v690 = vunpack.c.h.b16 %v126
    %v691 = vunpack.c.l.b16 %v127
    %v692 = vunpack.c.h.b16 %v127
    %v693 = vunpack.c.l.b16 %v128
    %v694 = vunpack.c.h.b16 %v128
    %v695 = vunpack.c.l.b16 %v129
    %v696 = vunpack.c.h.b16 %v129
    %v697 = vunpack.c.l.b16 %v130
    %v698 = vunpack.c.h.b16 %v130
    %v699 = vunpack.c.l.b16 %v131
    %v700 = vunpack.c.h.b16 %v131
    %v701 = vunpack.c.l.b16 %v132
    %v702 = vunpack.c.h.b16 %v132
    %v703 = vunpack.c.l.b16 %v133
    %v704 = vunpack.c.h.b16 %v133
    %v705 = vunpack.c.l.b16 %v134
    %v706 = vunpack.c.h.b16 %v134
    %v707 = vunpack.c.l.b16 %v135
    %v708 = vunpack.c.h.b16 %v135
    %v709 = vunpack.c.l.b16 %v136
    %v710 = vunpack.c.h.b16 %v136
    %v711 = vunpack.c.l.b16 %v137
    %v712 = vunpack.c.h.b16 %v137
    %v713 = vunpack.c.l.b16 %v138
    %v714 = vunpack.c.h.b16 %v138
    %v715 = vunpack.c.l.b16 %v139
    %v716 = vunpack.c.h.b16 %v139
    %v717 = vunpack.c.l.b16 %v140
    %v718 = vunpack.c.h.b16 %v140
    %v719 = vunpack.c.l.b16 %v141
    %v720 = vunpack.c.h.b16 %v141
    %v721 = vunpack.c.l.b16 %v142
    %v722 = vunpack.c.h.b16 %v142
    %v723 = vunpack.c.l.b16 %v143
    %v724 = vunpack.c.h.b16 %v143
    %v725 = vunpack.c.l.b16 %v144
    %v726 = vunpack.c.h.b16 %v144
    %v727 = vunpack.c.l.b16 %v145
    %v728 = vunpack.c.h.b16 %v145
    %v729 = vunpack.c.l.b16 %v146
    %v730 = vunpack.c.h.b16 %v146
    %v731 = vunpack.c.l.b16 %v147
    %v732 = vunpack.c.h.b16 %v147
    %v733 = vunpack.c.l.b16 %v148
    %v734 = vunpack.c.h.b16 %v148
    %v735 = vunpack.c.l.b16 %v149
    %v736 = vunpack.c.h.b16 %v149
    %v737 = vunpack.c.l.b16 %v150
    %v738 = vunpack.c.h.b16 %v150
    %v739 = vunpack.c.l.b16 %v151
    %v740 = vunpack.c.h.b16 %v151
    %v741 = vunpack.c.l.b16 %v152
    %v742 = vunpack.c.h.b16 %v152
    %v743 = vunpack.c.l.b16 %v153
    %v744 = vunpack.c.h.b16 %v153
    %v745 = vunpack.c.l.b16 %v154
    %v746 = vunpack.c.h.b16 %v154
    %v747 = vunpack.c.l.b16 %v155
    %v748 = vunpack.c.h.b16 %v155
    %v749 = vunpack.c.l.b16 %v156
    %v750 = vunpack.c.h.b16 %v156
    %v751 = vunpack.c.l.b16 %v157
    %v752 = vunpack.c.h.b16 %v157
    %v753 = vunpack.c.l.b16 %v158
    %v754 = vunpack.c.h.b16 %v158
    %v755 = vunpack.c.l.b16 %v159
    %v756 = vunpack.c.h.b16 %v159
    %v757 = vunpack.c.l.b16 %v160
    %v758 = vunpack.c.h.b16 %v160
    %v759 = vunpack.c.l.b16 %v161
    %v760 = vunpack.c.h.b16 %v161
    %v761 = vunpack.c.l.b16 %v162
    %v762 = vunpack.c.h.b16 %v162
    %v763 = vunpack.c.l.b16 %v163
    %v764 = vunpack.c.h.b16 %v163
    %v765 = vunpack.c.l.b16 %v164
    %v766 = vunpack.c.h.b16 %v164
    %v767 = vunpack.c.l.b16 %v165
    %v768 = vunpack.c.h.b16 %v165
    %v769 = vunpack.c.l.b16 %v166
    %v770 = vunpack.c.h.b16 %v166
    %v771 = vunpack.c.l.b16 %v167
    %v772 = vunpack.c.h.b16 %v167
    %v773 = vunpack.c.l.b16 %v168
    %v774 = vunpack.c.h.b16 %v168
    %v775 = vunpack.c.l.b16 %v169
    %v776 = vunpack.c.h.b16 %v169
    %v777 = vunpack.c.l.b16 %v170
    %v778 = vunpack.c.h.b16 %v170
    %v779 = vunpack.c.l.b16 %v171
    %v780 = vunpack.c.h.b16 %v171
    %v781 = vunpack.c.l.b16 %v172
    %v782 = vunpack.c.h.b16 %v172
    %v783 = vunpack.c.l.b16 %v173
    %v784 = vunpack.c.h.b16 %v173
    %v785 = vunpack.c.l.b16 %v174
    %v786 = vunpack.c.h.b16 %v174
    %v787 = vunpack.c.l.b16 %v175
    %v788 = vunpack.c.h.b16 %v175
    %v789 = vunpack.c.l.b16 %v176
    %v790 = vunpack.c.h.b16 %v176
    %v791 = vunpack.c.l.b16 %v177
    %v792 = vunpack.c.h.b16 %v177
    %v793 = vunpack.c.l.b16 %v178
    %v794 = vunpack.c.h.b16 %v178
    %v795 = vunpack.c.l.b16 %v179
    %v796 = vunpack.c.h.b16 %v179
    %v797 = vunpack.c.l.b16 %v180
    %v798 = vunpack.c.h.b16 %v180
    %v799 = vunpack.c.l.b16 %v181
    %v800 = vunpack.c.h.b16 %v181
    %v801 = vunpack.c.l.b16 %v182
    %v802 = vunpack.c.h.b16 %v182
    %v803 = vunpack.c.l.b16 %v183
    %v804 = vunpack.c.h.b16 %v183
    %v805 = vunpack.c.l.b16 %v184
    %v806 = vunpack.c.h.b16 %v184
    %v807 = vunpack.c.l.b16 %v185
    %v808 = vunpack.c.h.b16 %v185
    %v809 = vunpack.c.l.b16 %v186
    %v810 = vunpack.c.h.b16 %v186
    %v811 = vunpack.c.l.b16 %v187
    %v812 = vunpack.c.h.b16 %v187
    %v813 = vunpack.c.l.b16 %v188
    %v814 = vunpack.c.h.b16 %v188
    %v815 = vunpack.c.l.b16 %v189
    %v816 = vunpack.c.h.b16 %v189
    %v817 = vunpack.c.l.b16 %v190
    %v818 = vunpack.c.h.b16 %v190
    %v819 = vunpack.c.l.b16 %v191
    %v820 = vunpack.c.h.b16 %v191
    %v821 = vunpack.c.l.b16 %v192
    %v822 = vunpack.c.h.b16 %v192
    %v823 = vunpack.c.l.b16 %v193
    %v824 = vunpack.c.h.b16 %v193
    %v825 = vunpack.c.l.b16 %v194
    %v826 = vunpack.c.h.b16 %v194
    %v827 = vunpack.c.l.b16 %v195
    %v828 = vunpack.c.h.b16 %v195
    %v829 = vunpack.c.l.b16 %v196
    %v830 = vunpack.c.h.b16 %v196
    %v831 = vunpack.c.l.b16 %v197
    %v832 = vunpack.c.h.b16 %v197
    %v833 = vunpack.c.l.b16 %v198
    %v834 = vunpack.c.h.b16 %v198
    %v835 = vunpack.c.l.b16 %v199
    %v836 = vunpack.c.h.b16 %v199
    %v837 = vunpack.c.l.b16 %v200
    %v838 = vunpack.c.h.b16 %v200
    %v839 = vunpack.c.l.b16 %v201
    %v840 = vunpack.c.h.b16 %v201
    %v841 = vunpack.c.l.b16 %v202
    %v842 = vunpack.c.h.b16 %v202
    %v843 = vunpack.c.l.b16 %v203
    %v844 = vunpack.c.h.b16 %v203
    %v845 = vunpack.c.l.b16 %v204
    %v846 = vunpack.c.h.b16 %v204
    %v847 = vunpack.c.l.b16 %v205
    %v848 = vunpack.c.h.b16 %v205
    %v849 = vunpack.c.l.b16 %v206
    %v850 = vunpack.c.h.b16 %v206
    %v851 = vunpack.c.l.b16 %v207
    %v852 = vunpack.c.h.b16 %v207
    %v853 = vunpack.c.l.b16 %v208
    %v854 = vunpack.c.h.b16 %v208
    %v855 = vunpack.c.l.b16 %v209
    %v856 = vunpack.c.h.b16 %v209
    %v857 = vunpack.c.l.b16 %v210
    %v858 = vunpack.c.h.b16 %v210
    %v859 = vunpack.c.l.b16 %v211
    %v860 = vunpack.c.h.b16 %v211
    %v861 = vunpack.c.l.b16 %v212
    %v862 = vunpack.c.h.b16 %v212
    %v863 = vunpack.c.l.b16 %v213
    %v864 = vunpack.c.h.b16 %v213
    %v865 = vunpack.c.l.b16 %v214
    %v866 = vunpack.c.h.b16 %v214
    %v867 = vunpack.c.l.b16 %v215
    %v868 = vunpack.c.h.b16 %v215
    %v869 = vunpack.c.l.b16 %v216
    %v870 = vunpack.c.h.b16 %v216
    %v871 = vunpack.c.l.b16 %v217
    %v872 = vunpack.c.h.b16 %v217
    %v873 = vunpack.c.l.b16 %v218
    %v874 = vunpack.c.h.b16 %v218
    %v875 = vunpack.c.l.b16 %v219
    %v876 = vunpack.c.h.b16 %v219
    %v877 = vunpack.c.l.b16 %v220
    %v878 = vunpack.c.h.b16 %v220
    %v879 = vunpack.c.l.b16 %v221
    %v880 = vunpack.c.h.b16 %v221
    %v881 = vunpack.c.l.b16 %v222
    %v882 = vunpack.c.h.b16 %v222
    %v883 = vunpack.c.l.b16 %v223
    %v884 = vunpack.c.h.b16 %v223
    %v885 = vunpack.c.l.b16 %v224
    %v886 = vunpack.c.h.b16 %v224
    %v887 = vunpack.c.l.b16 %v225
    %v888 = vunpack.c.h.b16 %v225
    %v889 = vunpack.c.l.b16 %v226
    %v890 = vunpack.c.h.b16 %v226
    %v891 = vunpack.c.l.b16 %v227
    %v892 = vunpack.c.h.b16 %v227
    %v893 = vunpack.c.l.b16 %v228
    %v894 = vunpack.c.h.b16 %v228
    %v895 = vunpack.c.l.b16 %v229
    %v896 = vunpack.c.h.b16 %v229
    %v897 = vunpack.c.l.b16 %v230
    %v898 = vunpack.c.h.b16 %v230
    %v899 = vunpack.c.l.b16 %v231
    %v900 = vunpack.c.h.b16 %v231
    %v901 = vunpack.c.l.b16 %v232
    %v902 = vunpack.c.h.b16 %v232
    %v903 = vunpack.c.l.b16 %v233
    %v904 = vunpack.c.h.b16 %v233
    %v905 = vunpack.c.l.b16 %v234
    %v906 = vunpack.c.h.b16 %v234
    %v907 = vunpack.c.l.b16 %v235
    %v908 = vunpack.c.h.b16 %v235
    %v909 = vunpack.c.l.b16 %v236
    %v910 = vunpack.c.h.b16 %v236
    %v911 = vunpack.c.l.b16 %v237
    %v912 = vunpack.c.h.b16 %v237
    %v913 = vunpack.c.l.b16 %v238
    %v914 = vunpack.c.h.b16 %v238
    %v915 = vunpack.c.l.b16 %v239
    %v916 = vunpack.c.h.b16 %v239
    %v917 = vunpack.c.l.b16 %v240
    %v918 = vunpack.c.h.b16 %v240
    %v919 = vunpack.c.l.b16 %v241
    %v920 = vunpack.c.h.b16 %v241
    %v921 = vunpack.c.l.b16 %v242
    %v922 = vunpack.c.h.b16 %v242
    %v923 = vunpack.c.l.b16 %v243
    %v924 = vunpack.c.h.b16 %v243
    %v925 = vunpack.c.l.b16 %v244
    %v926 = vunpack.c.h.b16 %v244
    %v927 = vunpack.c.l.b16 %v245
    %v928 = vunpack.c.h.b16 %v245
    %v929 = vunpack.c.l.b16 %v246
    %v930 = vunpack.c.h.b16 %v246
    %v931 = vunpack.c.l.b16 %v247
    %v932 = vunpack.c.h.b16 %v247
    %v933 = vunpack.c.l.b16 %v248
    %v934 = vunpack.c.h.b16 %v248
    %v935 = vunpack.c.l.b16 %v249
    %v936 = vunpack.c.h.b16 %v249
    %v937 = vunpack.c.l.b16 %v250
    %v938 = vunpack.c.h.b16 %v250
    %v939 = vunpack.c.l.b16 %v251
    %v940 = vunpack.c.h.b16 %v251
    %v941 = vunpack.c.l.b16 %v252
    %v942 = vunpack.c.h.b16 %v252
    %v943 = vunpack.c.l.b16 %v253
    %v944 = vunpack.c.h.b16 %v253
    %v945 = vunpack.c.l.b16 %v254
    %v946 = vunpack.c.h.b16 %v254
    %v947 = vunpack.c.l.b16 %v255
    %v948 = vunpack.c.h.b16 %v255
    %v949 = vunpack.c.l.b16 %v256
    %v950 = vunpack.c.h.b16 %v256
    %v951 = vunpack.c.l.b16 %v257
    %v952 = vunpack.c.h.b16 %v257
    %v953 = vunpack.c.l.b16 %v258
    %v954 = vunpack.c.h.b16 %v258
    %v955 = vunpack.c.l.b16 %v259
    %v956 = vunpack.c.h.b16 %v259
    %v957 = vunpack.c.l.b16 %v260
    %v958 = vunpack.c.h.b16 %v260
    %v959 = vunpack.c.l.b16 %v261
    %v960 = vunpack.c.h.b16 %v261
    %v961 = vunpack.c.l.b16 %v262
    %v962 = vunpack.c.h.b16 %v262
    %v963 = vunpack.c.l.b16 %v263
    %v964 = vunpack.c.h.b16 %v263
    %v965 = vunpack.c.l.b16 %v264
    %v966 = vunpack.c.h.b16 %v264
    %v967 = vunpack.c.l.b16 %v265
    %v968 = vunpack.c.h.b16 %v265
    %v969 = vunpack.c.l.b16 %v266
    %v970 = vunpack.c.h.b16 %v266
    %v971 = vunpack.c.l.b16 %v267
    %v972 = vunpack.c.h.b16 %v267
    %v973 = vunpack.c.l.b16 %v268
    %v974 = vunpack.c.h.b16 %v268
    %v975 = vunpack.c.l.b16 %v269
    %v976 = vunpack.c.h.b16 %v269
    %v977 = vunpack.c.l.b16 %v270
    %v978 = vunpack.c.h.b16 %v270
    %v979 = vunpack.c.l.b16 %v271
    %v980 = vunpack.c.h.b16 %v271
    %v981 = vunpack.c.l.b16 %v272
    %v982 = vunpack.c.h.b16 %v272
    %v983 = vunpack.c.l.b16 %v273
    %v984 = vunpack.c.h.b16 %v273
    %v985 = vunpack.c.l.b16 %v274
    %v986 = vunpack.c.h.b16 %v274
    %v987 = vunpack.c.l.b16 %v275
    %v988 = vunpack.c.h.b16 %v275
    %v989 = vunpack.c.l.b16 %v276
    %v990 = vunpack.c.h.b16 %v276
    %v991 = vunpack.c.l.b16 %v277
    %v992 = vunpack.c.h.b16 %v277
    %v993 = vunpack.c.l.b16 %v278
    %v994 = vunpack.c.h.b16 %v278
    %v995 = vunpack.c.l.b16 %v279
    %v996 = vunpack.c.h.b16 %v279
    %v997 = vunpack.c.l.b16 %v280
    %v998 = vunpack.c.h.b16 %v280
    %v999 = vunpack.c.l.b16 %v281
    %v1000 = vunpack.c.h.b16 %v281
    %v1001 = vunpack.c.l.b16 %v282
    %v1002 = vunpack.c.h.b16 %v282
    %v1003 = vunpack.c.l.b16 %v283
    %v1004 = vunpack.c.h.b16 %v283
    %v1005 = vunpack.c.l.b16 %v284
    %v1006 = vunpack.c.h.b16 %v284
    %v1007 = vunpack.c.l.b16 %v285
    %v1008 = vunpack.c.h.b16 %v285
    %v1009 = vunpack.c.l.b16 %v286
    %v1010 = vunpack.c.h.b16 %v286
    %v1011 = vunpack.c.l.b16 %v287
    %v1012 = vunpack.c.h.b16 %v287
    %v1013 = vunpack.c.l.b16 %v288
    %v1014 = vunpack.c.h.b16 %v288
    %v1015 = vunpack.c.l.b16 %v289
    %v1016 = vunpack.c.h.b16 %v289
    %v1017 = vunpack.c.l.b16 %v290
    %v1018 = vunpack.c.h.b16 %v290
    %v1019 = vunpack.c.l.b16 %v291
    %v1020 = vunpack.c.h.b16 %v291
    %v1021 = vunpack.c.l.b16 %v292
    %v1022 = vunpack.c.h.b16 %v292
    %v1023 = vunpack.c.l.b16 %v293
    %v1024 = vunpack.c.h.b16 %v293
    %v1025 = vunpack.c.l.b16 %v294
    %v1026 = vunpack.c.h.b16 %v294
    %v1027 = vunpack.c.l.b16 %v295
    %v1028 = vunpack.c.h.b16 %v295
    %v1029 = vunpack.c.l.b16 %v296
    %v1030 = vunpack.c.h.b16 %v296
    %v1031 = vunpack.c.l.b16 %v297
    %v1032 = vunpack.c.h.b16 %v297
    %v1033 = vunpack.c.l.b16 %v298
    %v1034 = vunpack.c.h.b16 %v298
    %v1035 = vunpack.c.l.b16 %v299
    %v1036 = vunpack.c.h.b16 %v299
    %v1037 = vunpack.c.l.b16 %v300
    %v1038 = vunpack.c.h.b16 %v300
    %v1039 = vunpack.c.l.b16 %v301
    %v1040 = vunpack.c.h.b16 %v301
    %v1041 = vunpack.c.l.b16 %v302
    %v1042 = vunpack.c.h.b16 %v302
    %v1043 = vunpack.c.l.b16 %v303
    %v1044 = vunpack.c.h.b16 %v303
    %v1045 = vunpack.c.l.b16 %v304
    %v1046 = vunpack.c.h.b16 %v304
    %v1047 = vunpack.c.l.b16 %v305
    %v1048 = vunpack.c.h.b16 %v305
    %v1049 = vunpack.c.l.b16 %v306
    %v1050 = vunpack.c.h.b16 %v306
    %v1051 = vunpack.c.l.b16 %v307
    %v1052 = vunpack.c.h.b16 %v307
    %v1053 = vunpack.c.l.b16 %v308
    %v1054 = vunpack.c.h.b16 %v308
    %v1055 = vunpack.c.l.b16 %v309
    %v1056 = vunpack.c.h.b16 %v309
    %v1057 = vunpack.c.l.b16 %v310
    %v1058 = vunpack.c.h.b16 %v310
    %v1059 = vunpack.c.l.b16 %v311
    %v1060 = vunpack.c.h.b16 %v311
    %v1061 = vunpack.c.l.b16 %v312
    %v1062 = vunpack.c.h.b16 %v312
    %v1063 = vunpack.c.l.b16 %v313
    %v1064 = vunpack.c.h.b16 %v313
    %v1065 = vunpack.c.l.b16 %v314
    %v1066 = vunpack.c.h.b16 %v314
    %v1067 = vunpack.c.l.b16 %v315
    %v1068 = vunpack.c.h.b16 %v315
    %v1069 = vunpack.c.l.b16 %v316
    %v1070 = vunpack.c.h.b16 %v316
    %v1071 = vunpack.c.l.b16 %v317
    %v1072 = vunpack.c.h.b16 %v317
    %v1073 = vunpack.c.l.b16 %v318
    %v1074 = vunpack.c.h.b16 %v318
    %v1075 = vunpack.c.l.b16 %v319
    %v1076 = vunpack.c.h.b16 %v319
    %v1077 = vunpack.c.l.b16 %v320
    %v1078 = vunpack.c.h.b16 %v320
    %v1079 = vunpack.c.l.b16 %v321
    %v1080 = vunpack.c.h.b16 %v321
    %v1081 = vunpack.c.l.b16 %v322
    %v1082 = vunpack.c.h.b16 %v322
    %v1083 = vunpack.c.l.b16 %v323
    %v1084 = vunpack.c.h.b16 %v323
    %v1085 = vunpack.c.l.b16 %v324
    %v1086 = vunpack.c.h.b16 %v324
    %v1087 = vunpack.c.l.b16 %v325
    %v1088 = vunpack.c.h.b16 %v325
    %v1089 = vunpack.c.l.b16 %v326
    %v1090 = vunpack.c.h.b16 %v326
    %v1091 = vunpack.c.l.b16 %v327
    %v1092 = vunpack.c.h.b16 %v327
    %v1093 = vunpack.c.l.b16 %v328
    %v1094 = vunpack.c.h.b16 %v328
    %v1095 = vunpack.c.l.b16 %v329
    %v1096 = vunpack.c.h.b16 %v329
    %v1097 = vunpack.c.l.b16 %v330
    %v1098 = vunpack.c.h.b16 %v330
    %v1099 = vunpack.c.l.b16 %v331
    %v1100 = vunpack.c.h.b16 %v331
    %v1101 = vunpack.c.l.b16 %v332
    %v1102 = vunpack.c.h.b16 %v332
    %v1103 = vunpack.c.l.b16 %v333
    %v1104 = vunpack.c.h.b16 %v333
    %v1105 = vunpack.c.l.b16 %v334
    %v1106 = vunpack.c.h.b16 %v334
    %v1107 = vunpack.c.l.b16 %v335
    %v1108 = vunpack.c.h.b16 %v335
    %v1109 = vunpack.c.l.b16 %v336
    %v1110 = vunpack.c.h.b16 %v336
    %v1111 = vunpack.c.l.b16 %v337
    %v1112 = vunpack.c.h.b16 %v337
    %v1113 = vunpack.c.l.b16 %v338
    %v1114 = vunpack.c.h.b16 %v338
    %v1115 = vunpack.c.l.b16 %v339
    %v1116 = vunpack.c.h.b16 %v339
    %v1117 = vunpack.c.l.b16 %v340
    %v1118 = vunpack.c.h.b16 %v340
    %v1119 = vunpack.c.l.b16 %v341
    %v1120 = vunpack.c.h.b16 %v341
    %v1121 = vunpack.c.l.b16 %v342
    %v1122 = vunpack.c.h.b16 %v342
    %v1123 = vunpack.c.l.b16 %v343
    %v1124 = vunpack.c.h.b16 %v343
    %v1125 = vunpack.c.l.b16 %v344
    %v1126 = vunpack.c.h.b16 %v344
    %v1127 = vunpack.c.l.b16 %v345
    %v1128 = vunpack.c.h.b16 %v345
    %v1129 = vunpack.c.l.b16 %v346
    %v1130 = vunpack.c.h.b16 %v346
    %v1131 = vunpack.c.l.b16 %v347
    %v1132 = vunpack.c.h.b16 %v347
    %v1133 = vunpack.c.l.b16 %v348
    %v1134 = vunpack.c.h.b16 %v348
    %v1135 = vunpack.c.l.b16 %v349
    %v1136 = vunpack.c.h.b16 %v349
    %v1137 = vunpack.c.l.b16 %v350
    %v1138 = vunpack.c.h.b16 %v350
    %v1139 = vunpack.c.l.b16 %v351
    %v1140 = vunpack.c.h.b16 %v351
    %v1141 = vunpack.c.l.b16 %v352
    %v1142 = vunpack.c.h.b16 %v352
    %v1143 = vpack.c.b16 %v635, %v631
    %v1144 = vpack.c.b16 %v636, %v632
    %v1145 = vpack.c.b16 %v637, %v633
    %v1146 = vpack.c.b16 %v638, %v634
    %v1147 = vpack.c.b16 %v643, %v639
    %v1148 = vpack.c.b16 %v644, %v640
    %v1149 = vpack.c.b16 %v645, %v641
    %v1150 = vpack.c.b16 %v646, %v642
    %v1151 = vpack.c.b16 %v651, %v647
    %v1152 = vpack.c.b16 %v652, %v648
    %v1153 = vpack.c.b16 %v653, %v649
    %v1154 = vpack.c.b16 %v654, %v650
    %v1155 = vpack.c.b16 %v659, %v655
    %v1156 = vpack.c.b16 %v660, %v656
    %v1157 = vpack.c.b16 %v661, %v657
    %v1158 = vpack.c.b16 %v662, %v658
    %v1159 = vpack.c.b16 %v667, %v663
    %v1160 = vpack.c.b16 %v668, %v664
    %v1161 = vpack.c.b16 %v669, %v665
    %v1162 = vpack.c.b16 %v670, %v666
    %v1163 = vpack.c.b16 %v675, %v671
    %v1164 = vpack.c.b16 %v676, %v672
    %v1165 = vpack.c.b16 %v677, %v673
    %v1166 = vpack.c.b16 %v678, %v674
    %v1167 = vpack.c.b16 %v683, %v679
    %v1168 = vpack.c.b16 %v684, %v680
    %v1169 = vpack.c.b16 %v685, %v681
    %v1170 = vpack.c.b16 %v686, %v682
    %v1171 = vpack.c.b16 %v691, %v687
    %v1172 = vpack.c.b16 %v692, %v688
    %v1173 = vpack.c.b16 %v693, %v689
    %v1174 = vpack.c.b16 %v694, %v690
    %v1175 = vpack.c.b16 %v699, %v695
    %v1176 = vpack.c.b16 %v700, %v696
    %v1177 = vpack.c.b16 %v701, %v697
    %v1178 = vpack.c.b16 %v702, %v698
    %v1179 = vpack.c.b16 %v707, %v703
    %v1180 = vpack.c.b16 %v708, %v704
    %v1181 = vpack.c.b16 %v709, %v705
    %v1182 = vpack.c.b16 %v710, %v706
    %v1183 = vpack.c.b16 %v715, %v711
    %v1184 = vpack.c.b16 %v716, %v712
    %v1185 = vpack.c.b16 %v717, %v713
    %v1186 = vpack.c.b16 %v718, %v714
    %v1187 = vpack.c.b16 %v723, %v719
    %v1188 = vpack.c.b16 %v724, %v720
    %v1189 = vpack.c.b16 %v725, %v721
    %v1190 = vpack.c.b16 %v726, %v722
    %v1191 = vpack.c.b16 %v731, %v727
    %v1192 = vpack.c.b16 %v732, %v728
    %v1193 = vpack.c.b16 %v733, %v729
    %v1194 = vpack.c.b16 %v734, %v730
    %v1195 = vpack.c.b16 %v739, %v735
    %v1196 = vpack.c.b16 %v740, %v736
    %v1197 = vpack.c.b16 %v741, %v737
    %v1198 = vpack.c.b16 %v742, %v738
    %v1199 = vpack.c.b16 %v747, %v743
    %v1200 = vpack.c.b16 %v748, %v744
    %v1201 = vpack.c.b16 %v749, %v745
    %v1202 = vpack.c.b16 %v750, %v746
    %v1203 = vpack.c.b16 %v755, %v751
    %v1204 = vpack.c.b16 %v756, %v752
    %v1205 = vpack.c.b16 %v757, %v753
    %v1206 = vpack.c.b16 %v758, %v754
    %v1207 = vpack.c.b16 %v763, %v759
    %v1208 = vpack.c.b16 %v764, %v760
    %v1209 = vpack.c.b16 %v765, %v761
    %v1210 = vpack.c.b16 %v766, %v762
    %v1211 = vpack.c.b16 %v771, %v767
    %v1212 = vpack.c.b16 %v772, %v768
    %v1213 = vpack.c.b16 %v773, %v769
    %v1214 = vpack.c.b16 %v774, %v770
    %v1215 = vpack.c.b16 %v779, %v775
    %v1216 = vpack.c.b16 %v780, %v776
    %v1217 = vpack.c.b16 %v781, %v777
    %v1218 = vpack.c.b16 %v782, %v778
    %v1219 = vpack.c.b16 %v787, %v783
    %v1220 = vpack.c.b16 %v788, %v784
    %v1221 = vpack.c.b16 %v789, %v785
    %v1222 = vpack.c.b16 %v790, %v786
    %v1223 = vpack.c.b16 %v795, %v791
    %v1224 = vpack.c.b16 %v796, %v792
    %v1225 = vpack.c.b16 %v797, %v793
    %v1226 = vpack.c.b16 %v798, %v794
    %v1227 = vpack.c.b16 %v803, %v799
    %v1228 = vpack.c.b16 %v804, %v800
    %v1229 = vpack.c.b16 %v805, %v801
    %v1230 = vpack.c.b16 %v806, %v802
    %v1231 = vpack.c.b16 %v811, %v807
    %v1232 = vpack.c.b16 %v812, %v808
    %v1233 = vpack.c.b16 %v813, %v809
    %v1234 = vpack.c.b16 %v814, %v810
    %v1235 = vpack.c.b16 %v819, %v815
    %v1236 = vpack.c.b16 %v820, %v816
    %v1237 = vpack.c.b16 %v821, %v817
    %v1238 = vpack.c.b16 %v822, %v818
    %v1239 = vpack.c.b16 %v827, %v823
    %v1240 = vpack.c.b16 %v828, %v824
    %v1241 = vpack.c.b16 %v829, %v825
    %v1242 = vpack.c.b16 %v830, %v826
    %v1243 = vpack.c.b16 %v835, %v831
    %v1244 = vpack.c.b16 %v836, %v832
    %v1245 = vpack.c.b16 %v837, %v833
    %v1246 = vpack.c.b16 %v838, %v834
    %v1247 = vpack.c.b16 %v843, %v839
    %v1248 = vpack.c.b16 %v844, %v840
    %v1249 = vpack.c.b16 %v845, %v841
    %v1250 = vpack.c.b16 %v846, %v842
    %v1251 = vpack.c.b16 %v851, %v847
    %v1252 = vpack.c.b16 %v852, %v848
    %v1253 = vpack.c.b16 %v853, %v849
    %v1254 = vpack.c.b16 %v854, %v850
    %v1255 = vpack.c.b16 %v859, %v855
    %v1256 = vpack.c.b16 %v860, %v856
    %v1257 = vpack.c.b16 %v861, %v857
    %v1258 = vpack.c.b16 %v862, %v858
    %v1259 = vpack.c.b16 %v867, %v863
    %v1260 = vpack.c.b16 %v868, %v864
    %v1261 = vpack.c.b16 %v869, %v865
    %v1262 = vpack.c.b16 %v870, %v866
    %v1263 = vpack.c.b16 %v875, %v871
    %v1264 = vpack.c.b16 %v876, %v872
    %v1265 = vpack.c.b16 %v877, %v873
    %v1266 = vpack.c.b16 %v878, %v874
    %v1267 = vpack.c.b16 %v883, %v879
    %v1268 = vpack.c.b16 %v884, %v880
    %v1269 = vpack.c.b16 %v885, %v881
    %v1270 = vpack.c.b16 %v886, %v882
    %v1271 = vpack.c.b16 %v891, %v887
    %v1272 = vpack.c.b16 %v892, %v888
    %v1273 = vpack.c.b16 %v893, %v889
    %v1274 = vpack.c.b16 %v894, %v890
    %v1275 = vpack.c.b16 %v899, %v895
    %v1276 = vpack.c.b16 %v900, %v896
    %v1277 = vpack.c.b16 %v901, %v897
    %v1278 = vpack.c.b16 %v902, %v898
    %v1279 = vpack.c.b16 %v907, %v903
    %v1280 = vpack.c.b16 %v908, %v904
    %v1281 = vpack.c.b16 %v909, %v905
    %v1282 = vpack.c.b16 %v910, %v906
    %v1283 = vpack.c.b16 %v915, %v911
    %v1284 = vpack.c.b16 %v916, %v912
    %v1285 = vpack.c.b16 %v917, %v913
    %v1286 = vpack.c.b16 %v918, %v914
    %v1287 = vpack.c.b16 %v923, %v919
    %v1288 = vpack.c.b16 %v924, %v920
    %v1289 = vpack.c.b16 %v925, %v921
    %v1290 = vpack.c.b16 %v926, %v922
    %v1291 = vpack.c.b16 %v931, %v927
    %v1292 = vpack.c.b16 %v932, %v928
    %v1293 = vpack.c.b16 %v933, %v929
    %v1294 = vpack.c.b16 %v934, %v930
    %v1295 = vpack.c.b16 %v939, %v935
    %v1296 = vpack.c.b16 %v940, %v936
    %v1297 = vpack.c.b16 %v941, %v937
    %v1298 = vpack.c.b16 %v942, %v938
    %v1299 = vpack.c.b16 %v947, %v943
    %v1300 = vpack.c.b16 %v948, %v944
    %v1301 = vpack.c.b16 %v949, %v945
    %v1302 = vpack.c.b16 %v950, %v946
    %v1303 = vpack.c.b16 %v955, %v951
    %v1304 = vpack.c.b16 %v956, %v952
    %v1305 = vpack.c.b16 %v957, %v953
    %v1306 = vpack.c.b16 %v958, %v954
    %v1307 = vpack.c.b16 %v963, %v959
    %v1308 = vpack.c.b16 %v964, %v960
    %v1309 = vpack.c.b16 %v965, %v961
    %v1310 = vpack.c.b16 %v966, %v962
    %v1311 = vpack.c.b16 %v971, %v967
    %v1312 = vpack.c.b16 %v972, %v968
    %v1313 = vpack.c.b16 %v973, %v969
    %v1314 = vpack.c.b16 %v974, %v970
    %v1315 = vpack.c.b16 %v979, %v975
    %v1316 = vpack.c.b16 %v980, %v976
    %v1317 = vpack.c.b16 %v981, %v977
    %v1318 = vpack.c.b16 %v982, %v978
    %v1319 = vpack.c.b16 %v987, %v983
    %v1320 = vpack.c.b16 %v988, %v984
    %v1321 = vpack.c.b16 %v989, %v985
    %v1322 = vpack.c.b16 %v990, %v986
    %v1323 = vpack.c.b16 %v995, %v991
    %v1324 = vpack.c.b16 %v996, %v992
    %v1325 = vpack.c.b16 %v997, %v993
    %v1326 = vpack.c.b16 %v998, %v994
    %v1327 = vpack.c.b16 %v1003, %v999
    %v1328 = vpack.c.b16 %v1004, %v1000
    %v1329 = vpack.c.b16 %v1005, %v1001
    %v1330 = vpack.c.b16 %v1006, %v1002
    %v1331 = vpack.c.b16 %v1011, %v1007
    %v1332 = vpack.c.b16 %v1012, %v1008
    %v1333 = vpack.c.b16 %v1013, %v1009
    %v1334 = vpack.c.b16 %v1014, %v1010
    %v1335 = vpack.c.b16 %v1019, %v1015
    %v1336 = vpack.c.b16 %v1020, %v1016
    %v1337 = vpack.c.b16 %v1021, %v1017
    %v1338 = vpack.c.b16 %v1022, %v1018
    %v1339 = vpack.c.b16 %v1027, %v1023
    %v1340 = vpack.c.b16 %v1028, %v1024
    %v1341 = vpack.c.b16 %v1029, %v1025
    %v1342 = vpack.c.b16 %v1030, %v1026
    %v1343 = vpack.c.b16 %v1035, %v1031
    %v1344 = vpack.c.b16 %v1036, %v1032
    %v1345 = vpack.c.b16 %v1037, %v1033
    %v1346 = vpack.c.b16 %v1038, %v1034
    %v1347 = vpack.c.b16 %v1043, %v1039
    %v1348 = vpack.c.b16 %v1044, %v1040
    %v1349 = vpack.c.b16 %v1045, %v1041
    %v1350 = vpack.c.b16 %v1046, %v1042
    %v1351 = vpack.c.b16 %v1051, %v1047
    %v1352 = vpack.c.b16 %v1052, %v1048
    %v1353 = vpack.c.b16 %v1053, %v1049
    %v1354 = vpack.c.b16 %v1054, %v1050
    %v1355 = vpack.c.b16 %v1059, %v1055
    %v1356 = vpack.c.b16 %v1060, %v1056
    %v1357 = vpack.c.b16 %v1061, %v1057
    %v1358 = vpack.c.b16 %v1062, %v1058
    %v1359 = vpack.c.b16 %v1067, %v1063
    %v1360 = vpack.c.b16 %v1068, %v1064
    %v1361 = vpack.c.b16 %v1069, %v1065
    %v1362 = vpack.c.b16 %v1070, %v1066
    %v1363 = vpack.c.b16 %v1075, %v1071
    %v1364 = vpack.c.b16 %v1076, %v1072
    %v1365 = vpack.c.b16 %v1077, %v1073
    %v1366 = vpack.c.b16 %v1078, %v1074
    %v1367 = vpack.c.b16 %v1083, %v1079
    %v1368 = vpack.c.b16 %v1084, %v1080
    %v1369 = vpack.c.b16 %v1085, %v1081
    %v1370 = vpack.c.b16 %v1086, %v1082
    %v1371 = vpack.c.b16 %v1091, %v1087
    %v1372 = vpack.c.b16 %v1092, %v1088
    %v1373 = vpack.c.b16 %v1093, %v1089
    %v1374 = vpack.c.b16 %v1094, %v1090
    %v1375 = vpack.c.b16 %v1099, %v1095
    %v1376 = vpack.c.b16 %v1100, %v1096
    %v1377 = vpack.c.b16 %v1101, %v1097
    %v1378 = vpack.c.b16 %v1102, %v1098
    %v1379 = vpack.c.b16 %v1107, %v1103
    %v1380 = vpack.c.b16 %v1108, %v1104
    %v1381 = vpack.c.b16 %v1109, %v1105
    %v1382 = vpack.c.b16 %v1110, %v1106
    %v1383 = vpack.c.b16 %v1115, %v1111
    %v1384 = vpack.c.b16 %v1116, %v1112
    %v1385 = vpack.c.b16 %v1117, %v1113
    %v1386 = vpack.c.b16 %v1118, %v1114
    %v1387 = vpack.c.b16 %v1123, %v1119
    %v1388 = vpack.c.b16 %v1124, %v1120
    %v1389 = vpack.c.b16 %v1125, %v1121
    %v1390 = vpack.c.b16 %v1126, %v1122
    %v1391 = vpack.c.b16 %v1131, %v1127
    %v1392 = vpack.c.b16 %v1132, %v1128
    %v1393 = vpack.c.b16 %v1133, %v1129
    %v1394 = vpack.c.b16 %v1134, %v1130
    %v1395 = vpack.c.b16 %v1139, %v1135
    %v1396 = vpack.c.b16 %v1140, %v1136
    %v1397 = vpack.c.b16 %v1141, %v1137
    %v1398 = vpack.c.b16 %v1142, %v1138
    %1655 = vmatprep.subr.bf16.mxu0 %v1144
    %1656 = vmatpush1.bf16.msra.mxu0 %v1143
    %1657 = vmatprep.subr.bf16.mxu0 %v1148
    %1658 = vmatpush1.bf16.msra.mxu0 %v1147
    %1659 = vmatprep.subr.bf16.mxu0 %v1152
    %1660 = vmatpush1.bf16.msra.mxu0 %v1151
    %1661 = vmatprep.subr.bf16.mxu0 %v1156
    %1662 = vmatpush1.bf16.msra.mxu0 %v1155
    %1663 = vmatprep.subr.bf16.mxu0 %v1160
    %1664 = vmatpush1.bf16.msra.mxu0 %v1159
    %1665 = vmatprep.subr.bf16.mxu0 %v1164
    %1666 = vmatpush1.bf16.msra.mxu0 %v1163
    %1667 = vmatprep.subr.bf16.mxu0 %v1168
    %1668 = vmatpush1.bf16.msra.mxu0 %v1167
    %1669 = vmatprep.subr.bf16.mxu0 %v1172
    %1670 = vmatpush1.bf16.msra.mxu0 %v1171
    %1671 = vmatprep.subr.bf16.mxu0 %v1176
    %1672 = vmatpush1.bf16.msra.mxu0 %v1175
    %1673 = vmatprep.subr.bf16.mxu0 %v1180
    %1674 = vmatpush1.bf16.msra.mxu0 %v1179
    %1675 = vmatprep.subr.bf16.mxu0 %v1184
    %1676 = vmatpush1.bf16.msra.mxu0 %v1183
    %1677 = vmatprep.subr.bf16.mxu0 %v1188
    %1678 = vmatpush1.bf16.msra.mxu0 %v1187
    %1679 = vmatprep.subr.bf16.mxu0 %v1192
    %1680 = vmatpush1.bf16.msra.mxu0 %v1191
    %1681 = vmatprep.subr.bf16.mxu0 %v1196
    %1682 = vmatpush1.bf16.msra.mxu0 %v1195
    %1683 = vmatprep.subr.bf16.mxu0 %v1200
    %1684 = vmatpush1.bf16.msra.mxu0 %v1199
    %1685 = vmatprep.subr.bf16.mxu0 %v1204
    %1686 = vmatpush1.bf16.msra.mxu0 %v1203
    %1687 = vmatprep.mubr.bf16.mxu0 %v90
    %1688 = vmatmul.mubr.bf16.gmra.mrb[0].mxu0 %v89
    %v1689 = vpop.f32.mrb[0].mxu0
    %v1690 = vadd.f32 %v358, %v1689
    %v1691 = vpop.f32.mrb[0].mxu0
    %v1692 = vadd.f32 %v362, %v1691
    %v1693 = vpop.f32.mrb[0].mxu0
    %v1694 = vpop.f32.mrb[0].mxu0
    %1695 = vdwg.mxu0
    %1696 = vmatprep.subr.bf16.mxu0 %v1208
    %1697 = vmatpush1.bf16.msra.mxu0 %v1207
    %1698 = vmatprep.subr.bf16.mxu0 %v1212
    %1699 = vmatpush1.bf16.msra.mxu0 %v1211
    %1700 = vmatprep.subr.bf16.mxu0 %v1216
    %1701 = vmatpush1.bf16.msra.mxu0 %v1215
    %1702 = vmatprep.subr.bf16.mxu0 %v1220
    %1703 = vmatpush1.bf16.msra.mxu0 %v1219
    %1704 = vmatprep.subr.bf16.mxu0 %v1224
    %1705 = vmatpush1.bf16.msra.mxu0 %v1223
    %1706 = vmatprep.subr.bf16.mxu0 %v1228
    %1707 = vmatpush1.bf16.msra.mxu0 %v1227
    %1708 = vmatprep.subr.bf16.mxu0 %v1232
    %1709 = vmatpush1.bf16.msra.mxu0 %v1231
    %1710 = vmatprep.subr.bf16.mxu0 %v1236
    %1711 = vmatpush1.bf16.msra.mxu0 %v1235
    %1712 = vmatprep.subr.bf16.mxu0 %v1240
    %1713 = vmatpush1.bf16.msra.mxu0 %v1239
    %1714 = vmatprep.subr.bf16.mxu0 %v1244
    %1715 = vmatpush1.bf16.msra.mxu0 %v1243
    %1716 = vmatprep.subr.bf16.mxu0 %v1248
    %1717 = vmatpush1.bf16.msra.mxu0 %v1247
    %1718 = vmatprep.subr.bf16.mxu0 %v1252
    %1719 = vmatpush1.bf16.msra.mxu0 %v1251
    %1720 = vmatprep.subr.bf16.mxu0 %v1256
    %1721 = vmatpush1.bf16.msra.mxu0 %v1255
    %1722 = vmatprep.subr.bf16.mxu0 %v1260
    %1723 = vmatpush1.bf16.msra.mxu0 %v1259
    %1724 = vmatprep.subr.bf16.mxu0 %v1264
    %1725 = vmatpush1.bf16.msra.mxu0 %v1263
    %1726 = vmatprep.subr.bf16.mxu0 %v1268
    %1727 = vmatpush1.bf16.msra.mxu0 %v1267
    %1728 = vmatprep.mubr.bf16.mxu0 %v92
    %1729 = vmatmul.mubr.bf16.gmra.mrb[0].mxu0 %v91
    %v1730 = vpop.f32.mrb[0].mxu0
    %v1731 = vadd.f32 %v1690, %v1730
    %v1732 = vpop.f32.mrb[0].mxu0
    %v1733 = vadd.f32 %v1692, %v1732
    %v1734 = vpop.f32.mrb[0].mxu0
    %v1735 = vpop.f32.mrb[0].mxu0
    %1736 = vdwg.mxu0
    %1737 = vmatprep.subr.bf16.mxu0 %v1272
    %1738 = vmatpush1.bf16.msra.mxu0 %v1271
    %1739 = vmatprep.subr.bf16.mxu0 %v1276
    %1740 = vmatpush1.bf16.msra.mxu0 %v1275
    %1741 = vmatprep.subr.bf16.mxu0 %v1280
    %1742 = vmatpush1.bf16.msra.mxu0 %v1279
    %1743 = vmatprep.subr.bf16.mxu0 %v1284
    %1744 = vmatpush1.bf16.msra.mxu0 %v1283
    %1745 = vmatprep.subr.bf16.mxu0 %v1288
    %1746 = vmatpush1.bf16.msra.mxu0 %v1287
    %1747 = vmatprep.subr.bf16.mxu0 %v1292
    %1748 = vmatpush1.bf16.msra.mxu0 %v1291
    %1749 = vmatprep.subr.bf16.mxu0 %v1296
    %1750 = vmatpush1.bf16.msra.mxu0 %v1295
    %1751 = vmatprep.subr.bf16.mxu0 %v1300
    %1752 = vmatpush1.bf16.msra.mxu0 %v1299
    %1753 = vmatprep.subr.bf16.mxu0 %v1304
    %1754 = vmatpush1.bf16.msra.mxu0 %v1303
    %1755 = vmatprep.subr.bf16.mxu0 %v1308
    %1756 = vmatpush1.bf16.msra.mxu0 %v1307
    %1757 = vmatprep.subr.bf16.mxu0 %v1312
    %1758 = vmatpush1.bf16.msra.mxu0 %v1311
    %1759 = vmatprep.subr.bf16.mxu0 %v1316
    %1760 = vmatpush1.bf16.msra.mxu0 %v1315
    %1761 = vmatprep.subr.bf16.mxu0 %v1320
    %1762 = vmatpush1.bf16.msra.mxu0 %v1319
    %1763 = vmatprep.subr.bf16.mxu0 %v1324
    %1764 = vmatpush1.bf16.msra.mxu0 %v1323
    %1765 = vmatprep.subr.bf16.mxu0 %v1328
    %1766 = vmatpush1.bf16.msra.mxu0 %v1327
    %1767 = vmatprep.subr.bf16.mxu0 %v1332
    %1768 = vmatpush1.bf16.msra.mxu0 %v1331
    %1769 = vmatprep.mubr.bf16.mxu0 %v94
    %1770 = vmatmul.mubr.bf16.gmra.mrb[0].mxu0 %v93
    %v1771 = vpop.f32.mrb[0].mxu0
    %v1772 = vadd.f32 %v1731, %v1771
    %v1773 = vpop.f32.mrb[0].mxu0
    %v1774 = vadd.f32 %v1733, %v1773
    %v1775 = vpop.f32.mrb[0].mxu0
    %v1776 = vpop.f32.mrb[0].mxu0
    %1777 = vdwg.mxu0
    %1778 = vmatprep.subr.bf16.mxu0 %v1336
    %1779 = vmatpush1.bf16.msra.mxu0 %v1335
    %1780 = vmatprep.subr.bf16.mxu0 %v1340
    %1781 = vmatpush1.bf16.msra.mxu0 %v1339
    %1782 = vmatprep.subr.bf16.mxu0 %v1344
    %1783 = vmatpush1.bf16.msra.mxu0 %v1343
    %1784 = vmatprep.subr.bf16.mxu0 %v1348
    %1785 = vmatpush1.bf16.msra.mxu0 %v1347
    %1786 = vmatprep.subr.bf16.mxu0 %v1352
    %1787 = vmatpush1.bf16.msra.mxu0 %v1351
    %1788 = vmatprep.subr.bf16.mxu0 %v1356
    %1789 = vmatpush1.bf16.msra.mxu0 %v1355
    %1790 = vmatprep.subr.bf16.mxu0 %v1360
    %1791 = vmatpush1.bf16.msra.mxu0 %v1359
    %1792 = vmatprep.subr.bf16.mxu0 %v1364
    %1793 = vmatpush1.bf16.msra.mxu0 %v1363
    %1794 = vmatprep.subr.bf16.mxu0 %v1368
    %1795 = vmatpush1.bf16.msra.mxu0 %v1367
    %1796 = vmatprep.subr.bf16.mxu0 %v1372
    %1797 = vmatpush1.bf16.msra.mxu0 %v1371
    %1798 = vmatprep.subr.bf16.mxu0 %v1376
    %1799 = vmatpush1.bf16.msra.mxu0 %v1375
    %1800 = vmatprep.subr.bf16.mxu0 %v1380
    %1801 = vmatpush1.bf16.msra.mxu0 %v1379
    %1802 = vmatprep.subr.bf16.mxu0 %v1384
    %1803 = vmatpush1.bf16.msra.mxu0 %v1383
    %1804 = vmatprep.subr.bf16.mxu0 %v1388
    %1805 = vmatpush1.bf16.msra.mxu0 %v1387
    %1806 = vmatprep.subr.bf16.mxu0 %v1392
    %1807 = vmatpush1.bf16.msra.mxu0 %v1391
    %1808 = vmatprep.subr.bf16.mxu0 %v1396
    %1809 = vmatpush1.bf16.msra.mxu0 %v1395
    %1810 = vmatprep.mubr.bf16.mxu0 %v96
    %1811 = vmatmul.mubr.bf16.gmra.mrb[0].mxu0 %v95
    %v1812 = vpop.f32.mrb[0].mxu0
    %v1813 = vadd.f32 %v1772, %v1812
    %v1814 = vpop.f32.mrb[0].mxu0
    %v1815 = vadd.f32 %v1774, %v1814
    %v1816 = vpop.f32.mrb[0].mxu0
    %v1817 = vpop.f32.mrb[0].mxu0
    %1818 = vdwg.mxu0
    %1819 = vmatprep.subr.bf16.mxu0 %v1146
    %1820 = vmatpush1.bf16.msra.mxu0 %v1145
    %1821 = vmatprep.subr.bf16.mxu0 %v1150
    %1822 = vmatpush1.bf16.msra.mxu0 %v1149
    %1823 = vmatprep.subr.bf16.mxu0 %v1154
    %1824 = vmatpush1.bf16.msra.mxu0 %v1153
    %1825 = vmatprep.subr.bf16.mxu0 %v1158
    %1826 = vmatpush1.bf16.msra.mxu0 %v1157
    %1827 = vmatprep.subr.bf16.mxu0 %v1162
    %1828 = vmatpush1.bf16.msra.mxu0 %v1161
    %1829 = vmatprep.subr.bf16.mxu0 %v1166
    %1830 = vmatpush1.bf16.msra.mxu0 %v1165
    %1831 = vmatprep.subr.bf16.mxu0 %v1170
    %1832 = vmatpush1.bf16.msra.mxu0 %v1169
    %1833 = vmatprep.subr.bf16.mxu0 %v1174
    %1834 = vmatpush1.bf16.msra.mxu0 %v1173
    %1835 = vmatprep.subr.bf16.mxu0 %v1178
    %1836 = vmatpush1.bf16.msra.mxu0 %v1177
    %1837 = vmatprep.subr.bf16.mxu0 %v1182
    %1838 = vmatpush1.bf16.msra.mxu0 %v1181
    %1839 = vmatprep.subr.bf16.mxu0 %v1186
    %1840 = vmatpush1.bf16.msra.mxu0 %v1185
    %1841 = vmatprep.subr.bf16.mxu0 %v1190
    %1842 = vmatpush1.bf16.msra.mxu0 %v1189
    %1843 = vmatprep.subr.bf16.mxu0 %v1194
    %1844 = vmatpush1.bf16.msra.mxu0 %v1193
    %1845 = vmatprep.subr.bf16.mxu0 %v1198
    %1846 = vmatpush1.bf16.msra.mxu0 %v1197
    %1847 = vmatprep.subr.bf16.mxu0 %v1202
    %1848 = vmatpush1.bf16.msra.mxu0 %v1201
    %1849 = vmatprep.subr.bf16.mxu0 %v1206
    %1850 = vmatpush1.bf16.msra.mxu0 %v1205
    %1851 = vmatprep.mubr.bf16.mxu0 %v90
    %1852 = vmatmul.mubr.bf16.gmra.mrb[0].mxu0 %v89
    %v1853 = vpop.f32.mrb[0].mxu0
    %v1854 = vadd.f32 %v366, %v1853
    %v1855 = vpop.f32.mrb[0].mxu0
    %v1856 = vadd.f32 %v370, %v1855
    %v1857 = vpop.f32.mrb[0].mxu0
    %v1858 = vpop.f32.mrb[0].mxu0
    %1859 = vdwg.mxu0
    %1860 = vmatprep.subr.bf16.mxu0 %v1210
    %1861 = vmatpush1.bf16.msra.mxu0 %v1209
    %1862 = vmatprep.subr.bf16.mxu0 %v1214
    %1863 = vmatpush1.bf16.msra.mxu0 %v1213
    %1864 = vmatprep.subr.bf16.mxu0 %v1218
    %1865 = vmatpush1.bf16.msra.mxu0 %v1217
    %1866 = vmatprep.subr.bf16.mxu0 %v1222
    %1867 = vmatpush1.bf16.msra.mxu0 %v1221
    %1868 = vmatprep.subr.bf16.mxu0 %v1226
    %1869 = vmatpush1.bf16.msra.mxu0 %v1225
    %1870 = vmatprep.subr.bf16.mxu0 %v1230
    %1871 = vmatpush1.bf16.msra.mxu0 %v1229
    %1872 = vmatprep.subr.bf16.mxu0 %v1234
    %1873 = vmatpush1.bf16.msra.mxu0 %v1233
    %1874 = vmatprep.subr.bf16.mxu0 %v1238
    %1875 = vmatpush1.bf16.msra.mxu0 %v1237
    %1876 = vmatprep.subr.bf16.mxu0 %v1242
    %1877 = vmatpush1.bf16.msra.mxu0 %v1241
    %1878 = vmatprep.subr.bf16.mxu0 %v1246
    %1879 = vmatpush1.bf16.msra.mxu0 %v1245
    %1880 = vmatprep.subr.bf16.mxu0 %v1250
    %1881 = vmatpush1.bf16.msra.mxu0 %v1249
    %1882 = vmatprep.subr.bf16.mxu0 %v1254
    %1883 = vmatpush1.bf16.msra.mxu0 %v1253
    %1884 = vmatprep.subr.bf16.mxu0 %v1258
    %1885 = vmatpush1.bf16.msra.mxu0 %v1257
    %1886 = vmatprep.subr.bf16.mxu0 %v1262
    %1887 = vmatpush1.bf16.msra.mxu0 %v1261
    %1888 = vmatprep.subr.bf16.mxu0 %v1266
    %1889 = vmatpush1.bf16.msra.mxu0 %v1265
    %1890 = vmatprep.subr.bf16.mxu0 %v1270
    %1891 = vmatpush1.bf16.msra.mxu0 %v1269
    %1892 = vmatprep.mubr.bf16.mxu0 %v92
    %1893 = vmatmul.mubr.bf16.gmra.mrb[0].mxu0 %v91
    %v1894 = vpop.f32.mrb[0].mxu0
    %v1895 = vadd.f32 %v1854, %v1894
    %v1896 = vpop.f32.mrb[0].mxu0
    %v1897 = vadd.f32 %v1856, %v1896
    %v1898 = vpop.f32.mrb[0].mxu0
    %v1899 = vpop.f32.mrb[0].mxu0
    %1900 = vdwg.mxu0
    %1901 = vmatprep.subr.bf16.mxu0 %v1274
    %1902 = vmatpush1.bf16.msra.mxu0 %v1273
    %1903 = vmatprep.subr.bf16.mxu0 %v1278
    %1904 = vmatpush1.bf16.msra.mxu0 %v1277
    %1905 = vmatprep.subr.bf16.mxu0 %v1282
    %1906 = vmatpush1.bf16.msra.mxu0 %v1281
    %1907 = vmatprep.subr.bf16.mxu0 %v1286
    %1908 = vmatpush1.bf16.msra.mxu0 %v1285
    %1909 = vmatprep.subr.bf16.mxu0 %v1290
    %1910 = vmatpush1.bf16.msra.mxu0 %v1289
    %1911 = vmatprep.subr.bf16.mxu0 %v1294
    %1912 = vmatpush1.bf16.msra.mxu0 %v1293
    %1913 = vmatprep.subr.bf16.mxu0 %v1298
    %1914 = vmatpush1.bf16.msra.mxu0 %v1297
    %1915 = vmatprep.subr.bf16.mxu0 %v1302
    %1916 = vmatpush1.bf16.msra.mxu0 %v1301
    %1917 = vmatprep.subr.bf16.mxu0 %v1306
    %1918 = vmatpush1.bf16.msra.mxu0 %v1305
    %1919 = vmatprep.subr.bf16.mxu0 %v1310
    %1920 = vmatpush1.bf16.msra.mxu0 %v1309
    %1921 = vmatprep.subr.bf16.mxu0 %v1314
    %1922 = vmatpush1.bf16.msra.mxu0 %v1313
    %1923 = vmatprep.subr.bf16.mxu0 %v1318
    %1924 = vmatpush1.bf16.msra.mxu0 %v1317
    %1925 = vmatprep.subr.bf16.mxu0 %v1322
    %1926 = vmatpush1.bf16.msra.mxu0 %v1321
    %1927 = vmatprep.subr.bf16.mxu0 %v1326
    %1928 = vmatpush1.bf16.msra.mxu0 %v1325
    %1929 = vmatprep.subr.bf16.mxu0 %v1330
    %1930 = vmatpush1.bf16.msra.mxu0 %v1329
    %1931 = vmatprep.subr.bf16.mxu0 %v1334
    %1932 = vmatpush1.bf16.msra.mxu0 %v1333
    %1933 = vmatprep.mubr.bf16.mxu0 %v94
    %1934 = vmatmul.mubr.bf16.gmra.mrb[0].mxu0 %v93
    %v1935 = vpop.f32.mrb[0].mxu0
    %v1936 = vadd.f32 %v1895, %v1935
    %v1937 = vpop.f32.mrb[0].mxu0
    %v1938 = vadd.f32 %v1897, %v1937
    %v1939 = vpop.f32.mrb[0].mxu0
    %v1940 = vpop.f32.mrb[0].mxu0
    %1941 = vdwg.mxu0
    %1942 = vmatprep.subr.bf16.mxu0 %v1338
    %1943 = vmatpush1.bf16.msra.mxu0 %v1337
    %1944 = vmatprep.subr.bf16.mxu0 %v1342
    %1945 = vmatpush1.bf16.msra.mxu0 %v1341
    %1946 = vmatprep.subr.bf16.mxu0 %v1346
    %1947 = vmatpush1.bf16.msra.mxu0 %v1345
    %1948 = vmatprep.subr.bf16.mxu0 %v1350
    %1949 = vmatpush1.bf16.msra.mxu0 %v1349
    %1950 = vmatprep.subr.bf16.mxu0 %v1354
    %1951 = vmatpush1.bf16.msra.mxu0 %v1353
    %1952 = vmatprep.subr.bf16.mxu0 %v1358
    %1953 = vmatpush1.bf16.msra.mxu0 %v1357
    %1954 = vmatprep.subr.bf16.mxu0 %v1362
    %1955 = vmatpush1.bf16.msra.mxu0 %v1361
    %1956 = vmatprep.subr.bf16.mxu0 %v1366
    %1957 = vmatpush1.bf16.msra.mxu0 %v1365
    %1958 = vmatprep.subr.bf16.mxu0 %v1370
    %1959 = vmatpush1.bf16.msra.mxu0 %v1369
    %1960 = vmatprep.subr.bf16.mxu0 %v1374
    %1961 = vmatpush1.bf16.msra.mxu0 %v1373
    %1962 = vmatprep.subr.bf16.mxu0 %v1378
    %1963 = vmatpush1.bf16.msra.mxu0 %v1377
    %1964 = vmatprep.subr.bf16.mxu0 %v1382
    %1965 = vmatpush1.bf16.msra.mxu0 %v1381
    %1966 = vmatprep.subr.bf16.mxu0 %v1386
    %1967 = vmatpush1.bf16.msra.mxu0 %v1385
    %1968 = vmatprep.subr.bf16.mxu0 %v1390
    %1969 = vmatpush1.bf16.msra.mxu0 %v1389
    %1970 = vmatprep.subr.bf16.mxu0 %v1394
    %1971 = vmatpush1.bf16.msra.mxu0 %v1393
    %1972 = vmatprep.subr.bf16.mxu0 %v1398
    %1973 = vmatpush1.bf16.msra.mxu0 %v1397
    %1974 = vmatprep.mubr.bf16.mxu0 %v96
    %1975 = vmatmul.mubr.bf16.gmra.mrb[0].mxu0 %v95
    %v1976 = vpop.f32.mrb[0].mxu0
    %v1977 = vadd.f32 %v1936, %v1976
    %v1978 = vpop.f32.mrb[0].mxu0
    %v1979 = vadd.f32 %v1938, %v1978
    %v1980 = vpop.f32.mrb[0].mxu0
    %v1981 = vpop.f32.mrb[0].mxu0
    %1982 = vdwg.mxu0
    %v1983 = vmax.f32 %v1813, 0.0
    %v1984 = vmax.f32 %v1815, 0.0
    %v1985 = vmax.f32 %v1977, 0.0
    %v1986 = vmax.f32 %v1979, 0.0
    %v1987 = vpack.c.bf16 %v1983, %v1983
    %v1988 = vpack.c.bf16 %v1984, %v1984
    %v1989 = vpack.c.bf16 %v1985, %v1985
    %v1990 = vpack.c.bf16 %v1986, %v1986
    %v1991 = vld [vmem:[#allocation7] sm:$0xff]
    %v1992 = vld [vmem:[#allocation7 + $0x8] sm:$0xff]
    %v1993 = vld [vmem:[#allocation7 + $0x10] sm:$0xff]
    %v1994 = vld [vmem:[#allocation7 + $0x18] sm:$0xff]
    %v1995 = vld [vmem:[#allocation7 + $0x20] sm:$0xff]
    %v1996 = vld [vmem:[#allocation7 + $0x28] sm:$0xff]
    %v1997 = vld [vmem:[#allocation7 + $0x30] sm:$0xff]
    %v1998 = vld [vmem:[#allocation7 + $0x38] sm:$0xff]
    %v1999 = vld [vmem:[#allocation7 + $0x40] sm:$0xff]
    %v2000 = vld [vmem:[#allocation7 + $0x48] sm:$0xff]
    %v2001 = vld [vmem:[#allocation7 + $0x50] sm:$0xff]
    %v2002 = vld [vmem:[#allocation7 + $0x58] sm:$0xff]
    %v2003 = vld [vmem:[#allocation7 + $0x60] sm:$0xff]
    %v2004 = vld [vmem:[#allocation7 + $0x68] sm:$0xff]
    %v2005 = vld [vmem:[#allocation7 + $0x70] sm:$0xff]
    %v2006 = vld [vmem:[#allocation7 + $0x78] sm:$0xff]
    %v2007 = vld [vmem:[#allocation7 + $0x80] sm:$0xff]
    %v2008 = vld [vmem:[#allocation7 + $0x88] sm:$0xff]
    %v2009 = vld [vmem:[#allocation7 + $0x90] sm:$0xff]
    %v2010 = vld [vmem:[#allocation7 + $0x98] sm:$0xff]
    %v2011 = vld [vmem:[#allocation7 + $0xa0] sm:$0xff]
    %v2012 = vld [vmem:[#allocation7 + $0xa8] sm:$0xff]
    %v2013 = vld [vmem:[#allocation7 + $0xb0] sm:$0xff]
    %v2014 = vld [vmem:[#allocation7 + $0xb8] sm:$0xff]
    %v2015 = vld [vmem:[#allocation7 + $0xc0] sm:$0xff]
    %v2016 = vld [vmem:[#allocation7 + $0xc8] sm:$0xff]
    %v2017 = vld [vmem:[#allocation7 + $0xd0] sm:$0xff]
    %v2018 = vld [vmem:[#allocation7 + $0xd8] sm:$0xff]
    %v2019 = vld [vmem:[#allocation7 + $0xe0] sm:$0xff]
    %v2020 = vld [vmem:[#allocation7 + $0xe8] sm:$0xff]
    %v2021 = vld [vmem:[#allocation7 + $0xf0] sm:$0xff]
    %v2022 = vld [vmem:[#allocation7 + $0xf8] sm:$0xff]
    %v2023 = vld [vmem:[#allocation7 + $0x100] sm:$0xff]
    %v2024 = vld [vmem:[#allocation7 + $0x108] sm:$0xff]
    %v2025 = vld [vmem:[#allocation7 + $0x110] sm:$0xff]
    %v2026 = vld [vmem:[#allocation7 + $0x118] sm:$0xff]
    %v2027 = vld [vmem:[#allocation7 + $0x120] sm:$0xff]
    %v2028 = vld [vmem:[#allocation7 + $0x128] sm:$0xff]
    %v2029 = vld [vmem:[#allocation7 + $0x130] sm:$0xff]
    %v2030 = vld [vmem:[#allocation7 + $0x138] sm:$0xff]
    %v2031 = vld [vmem:[#allocation7 + $0x140] sm:$0xff]
    %v2032 = vld [vmem:[#allocation7 + $0x148] sm:$0xff]
    %v2033 = vld [vmem:[#allocation7 + $0x150] sm:$0xff]
    %v2034 = vld [vmem:[#allocation7 + $0x158] sm:$0xff]
    %v2035 = vld [vmem:[#allocation7 + $0x160] sm:$0xff]
    %v2036 = vld [vmem:[#allocation7 + $0x168] sm:$0xff]
    %v2037 = vld [vmem:[#allocation7 + $0x170] sm:$0xff]
    %v2038 = vld [vmem:[#allocation7 + $0x178] sm:$0xff]
    %v2039 = vld [vmem:[#allocation7 + $0x180] sm:$0xff]
    %v2040 = vld [vmem:[#allocation7 + $0x188] sm:$0xff]
    %v2041 = vld [vmem:[#allocation7 + $0x190] sm:$0xff]
    %v2042 = vld [vmem:[#allocation7 + $0x198] sm:$0xff]
    %v2043 = vld [vmem:[#allocation7 + $0x1a0] sm:$0xff]
    %v2044 = vld [vmem:[#allocation7 + $0x1a8] sm:$0xff]
    %v2045 = vld [vmem:[#allocation7 + $0x1b0] sm:$0xff]
    %v2046 = vld [vmem:[#allocation7 + $0x1b8] sm:$0xff]
    %v2047 = vld [vmem:[#allocation7 + $0x1c0] sm:$0xff]
    %v2048 = vld [vmem:[#allocation7 + $0x1c8] sm:$0xff]
    %v2049 = vld [vmem:[#allocation7 + $0x1d0] sm:$0xff]
    %v2050 = vld [vmem:[#allocation7 + $0x1d8] sm:$0xff]
    %v2051 = vld [vmem:[#allocation7 + $0x1e0] sm:$0xff]
    %v2052 = vld [vmem:[#allocation7 + $0x1e8] sm:$0xff]
    %v2053 = vld [vmem:[#allocation7 + $0x1f0] sm:$0xff]
    %v2054 = vld [vmem:[#allocation7 + $0x1f8] sm:$0xff]
    %v2055 = vld [vmem:[%s4] sm:$0x3]
    %v2057 = vlaneseq
    %v2058 = vshrl.u32 %v2057, 7
    %v2059 = vsub.s32 0, %v2058
    %v2060 = vrot.slane %v2055, %v2059
    %v2061 = vlaneseq
    %v2062 = vshrl.u32 %v2061, 7
    %v2063 = vsub.s32 1, %v2062
    %v2064 = vrot.slane %v2055, %v2063
    %v2131 = vunpack.c.l.b16 %v1991
    %v2132 = vunpack.c.h.b16 %v1991
    %v2133 = vunpack.c.l.b16 %v1992
    %v2134 = vunpack.c.h.b16 %v1992
    %v2135 = vunpack.c.l.b16 %v1993
    %v2136 = vunpack.c.h.b16 %v1993
    %v2137 = vunpack.c.l.b16 %v1994
    %v2138 = vunpack.c.h.b16 %v1994
    %v2139 = vunpack.c.l.b16 %v1995
    %v2140 = vunpack.c.h.b16 %v1995
    %v2141 = vunpack.c.l.b16 %v1996
    %v2142 = vunpack.c.h.b16 %v1996
    %v2143 = vunpack.c.l.b16 %v1997
    %v2144 = vunpack.c.h.b16 %v1997
    %v2145 = vunpack.c.l.b16 %v1998
    %v2146 = vunpack.c.h.b16 %v1998
    %v2147 = vunpack.c.l.b16 %v1999
    %v2148 = vunpack.c.h.b16 %v1999
    %v2149 = vunpack.c.l.b16 %v2000
    %v2150 = vunpack.c.h.b16 %v2000
    %v2151 = vunpack.c.l.b16 %v2001
    %v2152 = vunpack.c.h.b16 %v2001
    %v2153 = vunpack.c.l.b16 %v2002
    %v2154 = vunpack.c.h.b16 %v2002
    %v2155 = vunpack.c.l.b16 %v2003
    %v2156 = vunpack.c.h.b16 %v2003
    %v2157 = vunpack.c.l.b16 %v2004
    %v2158 = vunpack.c.h.b16 %v2004
    %v2159 = vunpack.c.l.b16 %v2005
    %v2160 = vunpack.c.h.b16 %v2005
    %v2161 = vunpack.c.l.b16 %v2006
    %v2162 = vunpack.c.h.b16 %v2006
    %v2163 = vunpack.c.l.b16 %v2007
    %v2164 = vunpack.c.h.b16 %v2007
    %v2165 = vunpack.c.l.b16 %v2008
    %v2166 = vunpack.c.h.b16 %v2008
    %v2167 = vunpack.c.l.b16 %v2009
    %v2168 = vunpack.c.h.b16 %v2009
    %v2169 = vunpack.c.l.b16 %v2010
    %v2170 = vunpack.c.h.b16 %v2010
    %v2171 = vunpack.c.l.b16 %v2011
    %v2172 = vunpack.c.h.b16 %v2011
    %v2173 = vunpack.c.l.b16 %v2012
    %v2174 = vunpack.c.h.b16 %v2012
    %v2175 = vunpack.c.l.b16 %v2013
    %v2176 = vunpack.c.h.b16 %v2013
    %v2177 = vunpack.c.l.b16 %v2014
    %v2178 = vunpack.c.h.b16 %v2014
    %v2179 = vunpack.c.l.b16 %v2015
    %v2180 = vunpack.c.h.b16 %v2015
    %v2181 = vunpack.c.l.b16 %v2016
    %v2182 = vunpack.c.h.b16 %v2016
    %v2183 = vunpack.c.l.b16 %v2017
    %v2184 = vunpack.c.h.b16 %v2017
    %v2185 = vunpack.c.l.b16 %v2018
    %v2186 = vunpack.c.h.b16 %v2018
    %v2187 = vunpack.c.l.b16 %v2019
    %v2188 = vunpack.c.h.b16 %v2019
    %v2189 = vunpack.c.l.b16 %v2020
    %v2190 = vunpack.c.h.b16 %v2020
    %v2191 = vunpack.c.l.b16 %v2021
    %v2192 = vunpack.c.h.b16 %v2021
    %v2193 = vunpack.c.l.b16 %v2022
    %v2194 = vunpack.c.h.b16 %v2022
    %v2195 = vunpack.c.l.b16 %v2023
    %v2196 = vunpack.c.h.b16 %v2023
    %v2197 = vunpack.c.l.b16 %v2024
    %v2198 = vunpack.c.h.b16 %v2024
    %v2199 = vunpack.c.l.b16 %v2025
    %v2200 = vunpack.c.h.b16 %v2025
    %v2201 = vunpack.c.l.b16 %v2026
    %v2202 = vunpack.c.h.b16 %v2026
    %v2203 = vunpack.c.l.b16 %v2027
    %v2204 = vunpack.c.h.b16 %v2027
    %v2205 = vunpack.c.l.b16 %v2028
    %v2206 = vunpack.c.h.b16 %v2028
    %v2207 = vunpack.c.l.b16 %v2029
    %v2208 = vunpack.c.h.b16 %v2029
    %v2209 = vunpack.c.l.b16 %v2030
    %v2210 = vunpack.c.h.b16 %v2030
    %v2211 = vunpack.c.l.b16 %v2031
    %v2212 = vunpack.c.h.b16 %v2031
    %v2213 = vunpack.c.l.b16 %v2032
    %v2214 = vunpack.c.h.b16 %v2032
    %v2215 = vunpack.c.l.b16 %v2033
    %v2216 = vunpack.c.h.b16 %v2033
    %v2217 = vunpack.c.l.b16 %v2034
    %v2218 = vunpack.c.h.b16 %v2034
    %v2219 = vunpack.c.l.b16 %v2035
    %v2220 = vunpack.c.h.b16 %v2035
    %v2221 = vunpack.c.l.b16 %v2036
    %v2222 = vunpack.c.h.b16 %v2036
    %v2223 = vunpack.c.l.b16 %v2037
    %v2224 = vunpack.c.h.b16 %v2037
    %v2225 = vunpack.c.l.b16 %v2038
    %v2226 = vunpack.c.h.b16 %v2038
    %v2227 = vunpack.c.l.b16 %v2039
    %v2228 = vunpack.c.h.b16 %v2039
    %v2229 = vunpack.c.l.b16 %v2040
    %v2230 = vunpack.c.h.b16 %v2040
    %v2231 = vunpack.c.l.b16 %v2041
    %v2232 = vunpack.c.h.b16 %v2041
    %v2233 = vunpack.c.l.b16 %v2042
    %v2234 = vunpack.c.h.b16 %v2042
    %v2235 = vunpack.c.l.b16 %v2043
    %v2236 = vunpack.c.h.b16 %v2043
    %v2237 = vunpack.c.l.b16 %v2044
    %v2238 = vunpack.c.h.b16 %v2044
    %v2239 = vunpack.c.l.b16 %v2045
    %v2240 = vunpack.c.h.b16 %v2045
    %v2241 = vunpack.c.l.b16 %v2046
    %v2242 = vunpack.c.h.b16 %v2046
    %v2243 = vunpack.c.l.b16 %v2047
    %v2244 = vunpack.c.h.b16 %v2047
    %v2245 = vunpack.c.l.b16 %v2048
    %v2246 = vunpack.c.h.b16 %v2048
    %v2247 = vunpack.c.l.b16 %v2049
    %v2248 = vunpack.c.h.b16 %v2049
    %v2249 = vunpack.c.l.b16 %v2050
    %v2250 = vunpack.c.h.b16 %v2050
    %v2251 = vunpack.c.l.b16 %v2051
    %v2252 = vunpack.c.h.b16 %v2051
    %v2253 = vunpack.c.l.b16 %v2052
    %v2254 = vunpack.c.h.b16 %v2052
    %v2255 = vunpack.c.l.b16 %v2053
    %v2256 = vunpack.c.h.b16 %v2053
    %v2257 = vunpack.c.l.b16 %v2054
    %v2258 = vunpack.c.h.b16 %v2054
    %v2259 = vpack.c.b16 %v2133, %v2131
    %v2260 = vpack.c.b16 %v2134, %v2132
    %v2261 = vpack.c.b16 %v2137, %v2135
    %v2262 = vpack.c.b16 %v2138, %v2136
    %v2263 = vpack.c.b16 %v2141, %v2139
    %v2264 = vpack.c.b16 %v2142, %v2140
    %v2265 = vpack.c.b16 %v2145, %v2143
    %v2266 = vpack.c.b16 %v2146, %v2144
    %v2267 = vpack.c.b16 %v2149, %v2147
    %v2268 = vpack.c.b16 %v2150, %v2148
    %v2269 = vpack.c.b16 %v2153, %v2151
    %v2270 = vpack.c.b16 %v2154, %v2152
    %v2271 = vpack.c.b16 %v2157, %v2155
    %v2272 = vpack.c.b16 %v2158, %v2156
    %v2273 = vpack.c.b16 %v2161, %v2159
    %v2274 = vpack.c.b16 %v2162, %v2160
    %v2275 = vpack.c.b16 %v2165, %v2163
    %v2276 = vpack.c.b16 %v2166, %v2164
    %v2277 = vpack.c.b16 %v2169, %v2167
    %v2278 = vpack.c.b16 %v2170, %v2168
    %v2279 = vpack.c.b16 %v2173, %v2171
    %v2280 = vpack.c.b16 %v2174, %v2172
    %v2281 = vpack.c.b16 %v2177, %v2175
    %v2282 = vpack.c.b16 %v2178, %v2176
    %v2283 = vpack.c.b16 %v2181, %v2179
    %v2284 = vpack.c.b16 %v2182, %v2180
    %v2285 = vpack.c.b16 %v2185, %v2183
    %v2286 = vpack.c.b16 %v2186, %v2184
    %v2287 = vpack.c.b16 %v2189, %v2187
    %v2288 = vpack.c.b16 %v2190, %v2188
    %v2289 = vpack.c.b16 %v2193, %v2191
    %v2290 = vpack.c.b16 %v2194, %v2192
    %v2291 = vpack.c.b16 %v2197, %v2195
    %v2292 = vpack.c.b16 %v2198, %v2196
    %v2293 = vpack.c.b16 %v2201, %v2199
    %v2294 = vpack.c.b16 %v2202, %v2200
    %v2295 = vpack.c.b16 %v2205, %v2203
    %v2296 = vpack.c.b16 %v2206, %v2204
    %v2297 = vpack.c.b16 %v2209, %v2207
    %v2298 = vpack.c.b16 %v2210, %v2208
    %v2299 = vpack.c.b16 %v2213, %v2211
    %v2300 = vpack.c.b16 %v2214, %v2212
    %v2301 = vpack.c.b16 %v2217, %v2215
    %v2302 = vpack.c.b16 %v2218, %v2216
    %v2303 = vpack.c.b16 %v2221, %v2219
    %v2304 = vpack.c.b16 %v2222, %v2220
    %v2305 = vpack.c.b16 %v2225, %v2223
    %v2306 = vpack.c.b16 %v2226, %v2224
    %v2307 = vpack.c.b16 %v2229, %v2227
    %v2308 = vpack.c.b16 %v2230, %v2228
    %v2309 = vpack.c.b16 %v2233, %v2231
    %v2310 = vpack.c.b16 %v2234, %v2232
    %v2311 = vpack.c.b16 %v2237, %v2235
    %v2312 = vpack.c.b16 %v2238, %v2236
    %v2313 = vpack.c.b16 %v2241, %v2239
    %v2314 = vpack.c.b16 %v2242, %v2240
    %v2315 = vpack.c.b16 %v2245, %v2243
    %v2316 = vpack.c.b16 %v2246, %v2244
    %v2317 = vpack.c.b16 %v2249, %v2247
    %v2318 = vpack.c.b16 %v2250, %v2248
    %v2319 = vpack.c.b16 %v2253, %v2251
    %v2320 = vpack.c.b16 %v2254, %v2252
    %v2321 = vpack.c.b16 %v2257, %v2255
    %v2322 = vpack.c.b16 %v2258, %v2256
    %2387 = vmatprep.subr.bf16.mxu0 %v2260
    %2388 = vmatpush1.bf16.msra.mxu0 %v2259
    %2389 = vmatprep.subr.bf16.mxu0 %v2262
    %2390 = vmatpush1.bf16.msra.mxu0 %v2261
    %2391 = vmatprep.subr.bf16.mxu0 %v2264
    %2392 = vmatpush1.bf16.msra.mxu0 %v2263
    %2393 = vmatprep.subr.bf16.mxu0 %v2266
    %2394 = vmatpush1.bf16.msra.mxu0 %v2265
    %2395 = vmatprep.subr.bf16.mxu0 %v2268
    %2396 = vmatpush1.bf16.msra.mxu0 %v2267
    %2397 = vmatprep.subr.bf16.mxu0 %v2270
    %2398 = vmatpush1.bf16.msra.mxu0 %v2269
    %2399 = vmatprep.subr.bf16.mxu0 %v2272
    %2400 = vmatpush1.bf16.msra.mxu0 %v2271
    %2401 = vmatprep.subr.bf16.mxu0 %v2274
    %2402 = vmatpush1.bf16.msra.mxu0 %v2273
    %2403 = vmatprep.subr.bf16.mxu0 %v2276
    %2404 = vmatpush1.bf16.msra.mxu0 %v2275
    %2405 = vmatprep.subr.bf16.mxu0 %v2278
    %2406 = vmatpush1.bf16.msra.mxu0 %v2277
    %2407 = vmatprep.subr.bf16.mxu0 %v2280
    %2408 = vmatpush1.bf16.msra.mxu0 %v2279
    %2409 = vmatprep.subr.bf16.mxu0 %v2282
    %2410 = vmatpush1.bf16.msra.mxu0 %v2281
    %2411 = vmatprep.subr.bf16.mxu0 %v2284
    %2412 = vmatpush1.bf16.msra.mxu0 %v2283
    %2413 = vmatprep.subr.bf16.mxu0 %v2286
    %2414 = vmatpush1.bf16.msra.mxu0 %v2285
    %2415 = vmatprep.subr.bf16.mxu0 %v2288
    %2416 = vmatpush1.bf16.msra.mxu0 %v2287
    %2417 = vmatprep.subr.bf16.mxu0 %v2290
    %2418 = vmatpush1.bf16.msra.mxu0 %v2289
    %2419 = vmatprep.mubr.bf16.mxu0 %v1988
    %2420 = vmatmul.mubr.bf16.gmra.mrb[0].mxu0 %v1987
    %v2421 = vpop.f32.mrb[0].mxu0
    %v2422 = vadd.f32 %v2060, %v2421
    %v2423 = vpop.f32.mrb[0].mxu0
    %v2424 = vadd.f32 %v2064, %v2423
    %v2425 = vpop.f32.mrb[0].mxu0
    %v2426 = vpop.f32.mrb[0].mxu0
    %2427 = vdwg.mxu0
    %2428 = vmatprep.subr.bf16.mxu0 %v2292
    %2429 = vmatpush1.bf16.msra.mxu0 %v2291
    %2430 = vmatprep.subr.bf16.mxu0 %v2294
    %2431 = vmatpush1.bf16.msra.mxu0 %v2293
    %2432 = vmatprep.subr.bf16.mxu0 %v2296
    %2433 = vmatpush1.bf16.msra.mxu0 %v2295
    %2434 = vmatprep.subr.bf16.mxu0 %v2298
    %2435 = vmatpush1.bf16.msra.mxu0 %v2297
    %2436 = vmatprep.subr.bf16.mxu0 %v2300
    %2437 = vmatpush1.bf16.msra.mxu0 %v2299
    %2438 = vmatprep.subr.bf16.mxu0 %v2302
    %2439 = vmatpush1.bf16.msra.mxu0 %v2301
    %2440 = vmatprep.subr.bf16.mxu0 %v2304
    %2441 = vmatpush1.bf16.msra.mxu0 %v2303
    %2442 = vmatprep.subr.bf16.mxu0 %v2306
    %2443 = vmatpush1.bf16.msra.mxu0 %v2305
    %2444 = vmatprep.subr.bf16.mxu0 %v2308
    %2445 = vmatpush1.bf16.msra.mxu0 %v2307
    %2446 = vmatprep.subr.bf16.mxu0 %v2310
    %2447 = vmatpush1.bf16.msra.mxu0 %v2309
    %2448 = vmatprep.subr.bf16.mxu0 %v2312
    %2449 = vmatpush1.bf16.msra.mxu0 %v2311
    %2450 = vmatprep.subr.bf16.mxu0 %v2314
    %2451 = vmatpush1.bf16.msra.mxu0 %v2313
    %2452 = vmatprep.subr.bf16.mxu0 %v2316
    %2453 = vmatpush1.bf16.msra.mxu0 %v2315
    %2454 = vmatprep.subr.bf16.mxu0 %v2318
    %2455 = vmatpush1.bf16.msra.mxu0 %v2317
    %2456 = vmatprep.subr.bf16.mxu0 %v2320
    %2457 = vmatpush1.bf16.msra.mxu0 %v2319
    %2458 = vmatprep.subr.bf16.mxu0 %v2322
    %2459 = vmatpush1.bf16.msra.mxu0 %v2321
    %2460 = vmatprep.mubr.bf16.mxu0 %v1990
    %2461 = vmatmul.mubr.bf16.gmra.mrb[0].mxu0 %v1989
    %v2462 = vpop.f32.mrb[0].mxu0
    %v2463 = vadd.f32 %v2422, %v2462
    %v2464 = vpop.f32.mrb[0].mxu0
    %v2465 = vadd.f32 %v2424, %v2464
    %v2466 = vpop.f32.mrb[0].mxu0
    %v2467 = vpop.f32.mrb[0].mxu0
    %2468 = vdwg.mxu0
    %v2469 = vmax.f32 %v2463, 0.0
    %v2470 = vmax.f32 %v2465, 0.0
    %v2471 = vpack.c.bf16 %v2469, %v2469
    %v2472 = vpack.c.bf16 %v2470, %v2470
    %v2473 = vld [vmem:[#allocation8] sm:$0xf]
    %v2474 = vld [vmem:[#allocation8 + $0x4] sm:$0xf]
    %v2475 = vld [vmem:[#allocation8 + $0x8] sm:$0xf]
    %v2476 = vld [vmem:[#allocation8 + $0xc] sm:$0xf]
    %v2477 = vld [vmem:[#allocation8 + $0x10] sm:$0xf]
    %v2478 = vld [vmem:[#allocation8 + $0x14] sm:$0xf]
    %v2479 = vld [vmem:[#allocation8 + $0x18] sm:$0xf]
    %v2480 = vld [vmem:[#allocation8 + $0x1c] sm:$0xf]
    %v2481 = vld [vmem:[#allocation8 + $0x20] sm:$0xf]
    %v2482 = vld [vmem:[#allocation8 + $0x24] sm:$0xf]
    %v2483 = vld [vmem:[#allocation8 + $0x28] sm:$0xf]
    %v2484 = vld [vmem:[#allocation8 + $0x2c] sm:$0xf]
    %v2485 = vld [vmem:[#allocation8 + $0x30] sm:$0xf]
    %v2486 = vld [vmem:[#allocation8 + $0x34] sm:$0xf]
    %v2487 = vld [vmem:[#allocation8 + $0x38] sm:$0xf]
    %v2488 = vld [vmem:[#allocation8 + $0x3c] sm:$0xf]
    %v2489 = vld [vmem:[#allocation8 + $0x40] sm:$0xf]
    %v2490 = vld [vmem:[#allocation8 + $0x44] sm:$0xf]
    %v2491 = vld [vmem:[#allocation8 + $0x48] sm:$0xf]
    %v2492 = vld [vmem:[#allocation8 + $0x4c] sm:$0xf]
    %v2493 = vld [vmem:[#allocation8 + $0x50] sm:$0xf]
    %v2494 = vld [vmem:[#allocation8 + $0x54] sm:$0xf]
    %v2495 = vld [vmem:[#allocation8 + $0x58] sm:$0xf]
    %v2496 = vld [vmem:[#allocation8 + $0x5c] sm:$0xf]
    %v2497 = vld [vmem:[#allocation8 + $0x60] sm:$0xf]
    %v2498 = vld [vmem:[#allocation8 + $0x64] sm:$0xf]
    %v2499 = vld [vmem:[#allocation8 + $0x68] sm:$0xf]
    %v2500 = vld [vmem:[#allocation8 + $0x6c] sm:$0xf]
    %v2501 = vld [vmem:[#allocation8 + $0x70] sm:$0xf]
    %v2502 = vld [vmem:[#allocation8 + $0x74] sm:$0xf]
    %v2503 = vld [vmem:[#allocation8 + $0x78] sm:$0xf]
    %v2504 = vld [vmem:[#allocation8 + $0x7c] sm:$0xf]
    %v2505 = vld [vmem:[%s6] sm:$0x1]
    %v2507 = vlaneseq
    %v2508 = vshrl.u32 %v2507, 7
    %v2509 = vsub.s32 0, %v2508
    %v2510 = vrot.slane %v2505, %v2509
    %v2544 = vunpack.c.l.b16 %v2473
    %v2545 = vunpack.c.l.b16 %v2474
    %v2546 = vunpack.c.l.b16 %v2475
    %v2547 = vunpack.c.l.b16 %v2476
    %v2548 = vunpack.c.l.b16 %v2477
    %v2549 = vunpack.c.l.b16 %v2478
    %v2550 = vunpack.c.l.b16 %v2479
    %v2551 = vunpack.c.l.b16 %v2480
    %v2552 = vunpack.c.l.b16 %v2481
    %v2553 = vunpack.c.l.b16 %v2482
    %v2554 = vunpack.c.l.b16 %v2483
    %v2555 = vunpack.c.l.b16 %v2484
    %v2556 = vunpack.c.l.b16 %v2485
    %v2557 = vunpack.c.l.b16 %v2486
    %v2558 = vunpack.c.l.b16 %v2487
    %v2559 = vunpack.c.l.b16 %v2488
    %v2560 = vunpack.c.l.b16 %v2489
    %v2561 = vunpack.c.l.b16 %v2490
    %v2562 = vunpack.c.l.b16 %v2491
    %v2563 = vunpack.c.l.b16 %v2492
    %v2564 = vunpack.c.l.b16 %v2493
    %v2565 = vunpack.c.l.b16 %v2494
    %v2566 = vunpack.c.l.b16 %v2495
    %v2567 = vunpack.c.l.b16 %v2496
    %v2568 = vunpack.c.l.b16 %v2497
    %v2569 = vunpack.c.l.b16 %v2498
    %v2570 = vunpack.c.l.b16 %v2499
    %v2571 = vunpack.c.l.b16 %v2500
    %v2572 = vunpack.c.l.b16 %v2501
    %v2573 = vunpack.c.l.b16 %v2502
    %v2574 = vunpack.c.l.b16 %v2503
    %v2575 = vunpack.c.l.b16 %v2504
    %v2576 = vpack.c.b16 %v2545, %v2544
    %v2577 = vpack.c.b16 %v2547, %v2546
    %v2578 = vpack.c.b16 %v2549, %v2548
    %v2579 = vpack.c.b16 %v2551, %v2550
    %v2580 = vpack.c.b16 %v2553, %v2552
    %v2581 = vpack.c.b16 %v2555, %v2554
    %v2582 = vpack.c.b16 %v2557, %v2556
    %v2583 = vpack.c.b16 %v2559, %v2558
    %v2584 = vpack.c.b16 %v2561, %v2560
    %v2585 = vpack.c.b16 %v2563, %v2562
    %v2586 = vpack.c.b16 %v2565, %v2564
    %v2587 = vpack.c.b16 %v2567, %v2566
    %v2588 = vpack.c.b16 %v2569, %v2568
    %v2589 = vpack.c.b16 %v2571, %v2570
    %v2590 = vpack.c.b16 %v2573, %v2572
    %v2591 = vpack.c.b16 %v2575, %v2574
    %2608 = vmatprep.subr.bf16.mxu0 0
    %2609 = vmatpush1.bf16.msra.mxu0 %v2576
    %2610 = vmatprep.subr.bf16.mxu0 0
    %2611 = vmatpush1.bf16.msra.mxu0 %v2577
    %2612 = vmatprep.subr.bf16.mxu0 0
    %2613 = vmatpush1.bf16.msra.mxu0 %v2578
    %2614 = vmatprep.subr.bf16.mxu0 0
    %2615 = vmatpush1.bf16.msra.mxu0 %v2579
    %2616 = vmatprep.subr.bf16.mxu0 0
    %2617 = vmatpush1.bf16.msra.mxu0 %v2580
    %2618 = vmatprep.subr.bf16.mxu0 0
    %2619 = vmatpush1.bf16.msra.mxu0 %v2581
    %2620 = vmatprep.subr.bf16.mxu0 0
    %2621 = vmatpush1.bf16.msra.mxu0 %v2582
    %2622 = vmatprep.subr.bf16.mxu0 0
    %2623 = vmatpush1.bf16.msra.mxu0 %v2583
    %2624 = vmatprep.subr.bf16.mxu0 0
    %2625 = vmatpush1.bf16.msra.mxu0 %v2584
    %2626 = vmatprep.subr.bf16.mxu0 0
    %2627 = vmatpush1.bf16.msra.mxu0 %v2585
    %2628 = vmatprep.subr.bf16.mxu0 0
    %2629 = vmatpush1.bf16.msra.mxu0 %v2586
    %2630 = vmatprep.subr.bf16.mxu0 0
    %2631 = vmatpush1.bf16.msra.mxu0 %v2587
    %2632 = vmatprep.subr.bf16.mxu0 0
    %2633 = vmatpush1.bf16.msra.mxu0 %v2588
    %2634 = vmatprep.subr.bf16.mxu0 0
    %2635 = vmatpush1.bf16.msra.mxu0 %v2589
    %2636 = vmatprep.subr.bf16.mxu0 0
    %2637 = vmatpush1.bf16.msra.mxu0 %v2590
    %2638 = vmatprep.subr.bf16.mxu0 0
    %2639 = vmatpush1.bf16.msra.mxu0 %v2591
    %2640 = vmatprep.mubr.bf16.mxu0 %v2472
    %2641 = vmatmul.mubr.bf16.gmra.mrb[0].mxu0 %v2471
    %v2642 = vpop.f32.mrb[0].mxu0
    %v2643 = vadd.f32 %v2510, %v2642
    %v2644 = vpop.f32.mrb[0].mxu0
    %v2645 = vpop.f32.mrb[0].mxu0
    %v2646 = vpop.f32.mrb[0].mxu0
    %2647 = vdwg.mxu0
    %2648 = vst [vmem:[#allocation10] sm:$0xff] %v2643
    // Predicated region
    $region46: #{tpu_custom_call.1} parent=1 // pred_check
      _
    $region47: #{tpu_custom_call.1} parent=1 // pred_check_branch
      %2650 = sbr.rel (0) target = $region49
    $region48: #{tpu_custom_call.1} parent=1 // pred_region
      %s2652 = ssub.s32 128, 128
      %2653 = vsyncadd [#allocation4], %s2652
      %s2655 = sshll.u32 [#allocation10], 4
      %s2656 = int_to_ptr.vmem [resolvable:$true] %s2655
      %2658 = dma.vmem_to_hbm [thread:$0]  %s2656, 128, %s7, [#allocation4]
    $region49: #{tpu_custom_call.1} parent=1 // pred_fallthru
      _
    // Predicated region
    $region50: #{tpu_custom_call.1} parent=1 // pred_check
      _
    $region51: #{tpu_custom_call.1} parent=1 // pred_check_branch
      %2660 = sbr.rel (0) target = $region53
    $region52: #{tpu_custom_call.1} parent=1 // pred_region
      %2661 = dma.done [#allocation4], 128
    $region53: #{tpu_custom_call.1} parent=1 // pred_fallthru
      _
    %2662 = vsyncpa [#allocation3], 1
    %2663 = vsyncpa [#allocation6], 1
    %2664 = vsyncpa [#allocation9], 1
    %2665 = vsyncpa [#allocation4], 1

// kernel: tpu_custom_call.1
$region0: #{tpu_custom_call.1}
  #allocation0 [shape = 'u32[]', space=smem, size = 0x4, offset = 0x4, fixed_abs, tag = 'smem constant byte address 0x4 - core index']
  #allocation1 [shape = 'u32[144,128]{1,0:T(1,128)}', space=vmem, size = 0x12000, scoped, tag = 'internal scratch']
  %s0 = inlined_call_operand.hbm [shape: f32[8,1024], index: 0, kind: input, shape index: {}]
  %s1 = inlined_call_operand.hbm [shape: bf16[1024,512], index: 1, kind: input, shape index: {}]
  %s2 = inlined_call_operand.vmem [shape: f32[1,512], index: 2, kind: input, shape index: {}]
  %s3 = inlined_call_operand.hbm [shape: bf16[512,256], index: 3, kind: input, shape index: {}]
  %s4 = inlined_call_operand.vmem [shape: f32[1,256], index: 4, kind: input, shape index: {}]
  %s5 = inlined_call_operand.hbm [shape: bf16[256,128], index: 5, kind: input, shape index: {}]
  %s6 = inlined_call_operand.vmem [shape: f32[1,128], index: 6, kind: input, shape index: {}]
  %s7 = inlined_call_operand.hbm [shape: f32[8,128], index: 7, kind: output, shape index: {}]
  %s8 = sld [smem:[#allocation0]]
  $region54: #{tpu_custom_call.1} parent=0
    _
  %s10 = ssub.s32 1, %s8
  %s11 = scalar_select 0, %s10, %s8
  $region1: #{tpu_custom_call.1} parent=0
    #allocation2 [shape = 'u8[32768]{0}', space=vmem, size = 0x8000, scoped, tag = 'input window, operand 0, single buffered']
    #allocation3 [shape = 's32[1]{0}', space=sflag, size = 0x4, scoped, tag = 'scoped memory for tpu_custom_call.1']
    #allocation4 [shape = 's32[1]{0}', space=sflag, size = 0x4, scoped, tag = 'scoped memory for tpu_custom_call.1']
    #allocation5 [shape = 'u8[1048576]{0}', space=vmem, size = 0x100000, scoped, tag = 'input window, operand 1, single buffered']
    #allocation6 [shape = 's32[1]{0}', space=sflag, size = 0x4, scoped, tag = 'scoped memory for tpu_custom_call.1']
    #allocation7 [shape = 'u8[262144]{0}', space=vmem, size = 0x40000, scoped, tag = 'input window, operand 3, single buffered']
    #allocation8 [shape = 'u8[65536]{0}', space=vmem, size = 0x10000, scoped, tag = 'input window, operand 5, single buffered']
    #allocation9 [shape = 's32[1]{0}', space=sflag, size = 0x4, scoped, tag = 'scoped memory for tpu_custom_call.1']
    #allocation10 [shape = 'u8[4096]{0}', space=vmem, size = 0x1000, scoped, tag = 'output window, operand 0, single buffered']
    %12 = vsyncpa [#allocation3], 0
    %13 = vsyncpa [#allocation6], 0
    %14 = vsyncpa [#allocation9], 0
    %15 = vsyncpa [#allocation4], 0
    // Predicated region
    $region2: #{tpu_custom_call.1} parent=1 // pred_check
      _
    $region3: #{tpu_custom_call.1} parent=1 // pred_check_branch
      %17 = sbr.rel (0) target = $region5
    $region4: #{tpu_custom_call.1} parent=1 // pred_region
      %s19 = ssub.s32 1024, 1024
      %20 = vsyncadd [#allocation3], %s19
      %s22 = sshll.u32 [#allocation2], 4
      %s23 = int_to_ptr.vmem [resolvable:$true] %s22
      %25 = dma.hbm_to_vmem [thread:$0]  %s0, 1024, %s23, [#allocation3]
    $region5: #{tpu_custom_call.1} parent=1 // pred_fallthru
      _
    // Predicated region
    $region6: #{tpu_custom_call.1} parent=1 // pred_check
      _
    $region7: #{tpu_custom_call.1} parent=1 // pred_check_branch
      %27 = sbr.rel (0) target = $region9
    $region8: #{tpu_custom_call.1} parent=1 // pred_region
      %s29 = ssub.s32 32768, 32768
      %30 = vsyncadd [#allocation6], %s29
      %s31 = sshll.u32 [#allocation5], 4
      %s32 = int_to_ptr.vmem [resolvable:$true] %s31
      %37 = dma.hbm_to_vmem [thread:$0]  %s1, 32768, %s32, [#allocation6], 256, 256, 16
    $region9: #{tpu_custom_call.1} parent=1 // pred_fallthru
      _
    // Predicated region
    $region10: #{tpu_custom_call.1} parent=1 // pred_check
      _
    $region11: #{tpu_custom_call.1} parent=1 // pred_check_branch
      %39 = sbr.rel (0) target = $region13
    $region12: #{tpu_custom_call.1} parent=1 // pred_region
      _
    $region13: #{tpu_custom_call.1} parent=1 // pred_fallthru
      _
    // Predicated region
    $region14: #{tpu_custom_call.1} parent=1 // pred_check
      _
    $region15: #{tpu_custom_call.1} parent=1 // pred_check_branch
      %41 = sbr.rel (0) target = $region17
    $region16: #{tpu_custom_call.1} parent=1 // pred_region
      %s43 = ssub.s32 8192, 8192
      %44 = vsyncadd [#allocation6], %s43
      %s45 = sshll.u32 [#allocation7], 4
      %s46 = int_to_ptr.vmem [resolvable:$true] %s45
      %51 = dma.hbm_to_vmem [thread:$0]  %s3, 8192, %s46, [#allocation6], 128, 128, 8
    $region17: #{tpu_custom_call.1} parent=1 // pred_fallthru
      _
    // Predicated region
    $region18: #{tpu_custom_call.1} parent=1 // pred_check
      _
    $region19: #{tpu_custom_call.1} parent=1 // pred_check_branch
      %53 = sbr.rel (0) target = $region21
    $region20: #{tpu_custom_call.1} parent=1 // pred_region
      _
    $region21: #{tpu_custom_call.1} parent=1 // pred_fallthru
      _
    // Predicated region
    $region22: #{tpu_custom_call.1} parent=1 // pred_check
      _
    $region23: #{tpu_custom_call.1} parent=1 // pred_check_branch
      %55 = sbr.rel (0) target = $region25
    $region24: #{tpu_custom_call.1} parent=1 // pred_region
      %s57 = ssub.s32 2048, 2048
      %58 = vsyncadd [#allocation9], %s57
      %s59 = sshll.u32 [#allocation8], 4
      %s60 = int_to_ptr.vmem [resolvable:$true] %s59
      %65 = dma.hbm_to_vmem [thread:$0]  %s5, 2048, %s60, [#allocation9], 64, 64, 4
    $region25: #{tpu_custom_call.1} parent=1 // pred_fallthru
      _
    // Predicated region
    $region26: #{tpu_custom_call.1} parent=1 // pred_check
      _
    $region27: #{tpu_custom_call.1} parent=1 // pred_check_branch
      %67 = sbr.rel (0) target = $region29
    $region28: #{tpu_custom_call.1} parent=1 // pred_region
      _
    $region29: #{tpu_custom_call.1} parent=1 // pred_fallthru
      _
    // Predicated region
    $region30: #{tpu_custom_call.1} parent=1 // pred_check
      _
    $region31: #{tpu_custom_call.1} parent=1 // pred_check_branch
      %69 = sbr.rel (0) target = $region33
    $region32: #{tpu_custom_call.1} parent=1 // pred_region
      %70 = dma.done [#allocation3], 1024
    $region33: #{tpu_custom_call.1} parent=1 // pred_fallthru
      _
    // Predicated region
    $region34: #{tpu_custom_call.1} parent=1 // pred_check
      _
    $region35: #{tpu_custom_call.1} parent=1 // pred_check_branch
      %72 = sbr.rel (0) target = $region37
    $region36: #{tpu_custom_call.1} parent=1 // pred_region
      %73 = dma.done [#allocation6], 32768
    $region37: #{tpu_custom_call.1} parent=1 // pred_fallthru
      _
    // Predicated region
    $region38: #{tpu_custom_call.1} parent=1 // pred_check
      _
    $region39: #{tpu_custom_call.1} parent=1 // pred_check_branch
      %75 = sbr.rel (0) target = $region41
    $region40: #{tpu_custom_call.1} parent=1 // pred_region
      %76 = dma.done [#allocation6], 8192
    $region41: #{tpu_custom_call.1} parent=1 // pred_fallthru
      _
    // Predicated region
    $region42: #{tpu_custom_call.1} parent=1 // pred_check
      _
    $region43: #{tpu_custom_call.1} parent=1 // pred_check_branch
      %78 = sbr.rel (0) target = $region45
    $region44: #{tpu_custom_call.1} parent=1 // pred_region
      %79 = dma.done [#allocation9], 2048
    $region45: #{tpu_custom_call.1} parent=1 // pred_fallthru
      _
    %v81 = vld [vmem:[#allocation2] sm:$0xff]
    %v82 = vld [vmem:[#allocation2 + $0x8] sm:$0xff]
    %v83 = vld [vmem:[#allocation2 + $0x10] sm:$0xff]
    %v84 = vld [vmem:[#allocation2 + $0x18] sm:$0xff]
    %v85 = vld [vmem:[#allocation2 + $0x20] sm:$0xff]
    %v86 = vld [vmem:[#allocation2 + $0x28] sm:$0xff]
    %v87 = vld [vmem:[#allocation2 + $0x30] sm:$0xff]
    %v88 = vld [vmem:[#allocation2 + $0x38] sm:$0xff]
    %v89 = vpack.c.bf16 %v81, %v81
    %v90 = vpack.c.bf16 %v82, %v82
    %v91 = vpack.c.bf16 %v83, %v83
    %v92 = vpack.c.bf16 %v84, %v84
    %v93 = vpack.c.bf16 %v85, %v85
    %v94 = vpack.c.bf16 %v86, %v86
    %v95 = vpack.c.bf16 %v87, %v87
    %v96 = vpack.c.bf16 %v88, %v88
    %v97 = vld [vmem:[#allocation5] sm:$0xff]
    %v98 = vld [vmem:[#allocation5 + $0x8] sm:$0xff]
    %v99 = vld [vmem:[#allocation5 + $0x10] sm:$0xff]
    %v100 = vld [vmem:[#allocation5 + $0x18] sm:$0xff]
    %v101 = vld [vmem:[#allocation5 + $0x20] sm:$0xff]
    %v102 = vld [vmem:[#allocation5 + $0x28] sm:$0xff]
    %v103 = vld [vmem:[#allocation5 + $0x30] sm:$0xff]
    %v104 = vld [vmem:[#allocation5 + $0x38] sm:$0xff]
    %v105 = vld [vmem:[#allocation5 + $0x40] sm:$0xff]
    %v106 = vld [vmem:[#allocation5 + $0x48] sm:$0xff]
    %v107 = vld [vmem:[#allocation5 + $0x50] sm:$0xff]
    %v108 = vld [vmem:[#allocation5 + $0x58] sm:$0xff]
    %v109 = vld [vmem:[#allocation5 + $0x60] sm:$0xff]
    %v110 = vld [vmem:[#allocation5 + $0x68] sm:$0xff]
    %v111 = vld [vmem:[#allocation5 + $0x70] sm:$0xff]
    %v112 = vld [vmem:[#allocation5 + $0x78] sm:$0xff]
    %v113 = vld [vmem:[#allocation5 + $0x80] sm:$0xff]
    %v114 = vld [vmem:[#allocation5 + $0x88] sm:$0xff]
    %v115 = vld [vmem:[#allocation5 + $0x90] sm:$0xff]
    %v116 = vld [vmem:[#allocation5 + $0x98] sm:$0xff]
    %v117 = vld [vmem:[#allocation5 + $0xa0] sm:$0xff]
    %v118 = vld [vmem:[#allocation5 + $0xa8] sm:$0xff]
    %v119 = vld [vmem:[#allocation5 + $0xb0] sm:$0xff]
    %v120 = vld [vmem:[#allocation5 + $0xb8] sm:$0xff]
    %v121 = vld [vmem:[#allocation5 + $0xc0] sm:$0xff]
    %v122 = vld [vmem:[#allocation5 + $0xc8] sm:$0xff]
    %v123 = vld [vmem:[#allocation5 + $0xd0] sm:$0xff]
    %v124 = vld [vmem:[#allocation5 + $0xd8] sm:$0xff]
    %v125 = vld [vmem:[#allocation5 + $0xe0] sm:$0xff]
    %v126 = vld [vmem:[#allocation5 + $0xe8] sm:$0xff]
    %v127 = vld [vmem:[#allocation5 + $0xf0] sm:$0xff]
    %v128 = vld [vmem:[#allocation5 + $0xf8] sm:$0xff]
    %v129 = vld [vmem:[#allocation5 + $0x100] sm:$0xff]
    %v130 = vld [vmem:[#allocation5 + $0x108] sm:$0xff]
    %v131 = vld [vmem:[#allocation5 + $0x110] sm:$0xff]
    %v132 = vld [vmem:[#allocation5 + $0x118] sm:$0xff]
    %v133 = vld [vmem:[#allocation5 + $0x120] sm:$0xff]
    %v134 = vld [vmem:[#allocation5 + $0x128] sm:$0xff]
    %v135 = vld [vmem:[#allocation5 + $0x130] sm:$0xff]
    %v136 = vld [vmem:[#allocation5 + $0x138] sm:$0xff]
    %v137 = vld [vmem:[#allocation5 + $0x140] sm:$0xff]
    %v138 = vld [vmem:[#allocation5 + $0x148] sm:$0xff]
    %v139 = vld [vmem:[#allocation5 + $0x150] sm:$0xff]
    %v140 = vld [vmem:[#allocation5 + $0x158] sm:$0xff]
    %v141 = vld [vmem:[#allocation5 + $0x160] sm:$0xff]
    %v142 = vld [vmem:[#allocation5 + $0x168] sm:$0xff]
    %v143 = vld [vmem:[#allocation5 + $0x170] sm:$0xff]
    %v144 = vld [vmem:[#allocation5 + $0x178] sm:$0xff]
    %v145 = vld [vmem:[#allocation5 + $0x180] sm:$0xff]
    %v146 = vld [vmem:[#allocation5 + $0x188] sm:$0xff]
    %v147 = vld [vmem:[#allocation5 + $0x190] sm:$0xff]
    %v148 = vld [vmem:[#allocation5 + $0x198] sm:$0xff]
    %v149 = vld [vmem:[#allocation5 + $0x1a0] sm:$0xff]
    %v150 = vld [vmem:[#allocation5 + $0x1a8] sm:$0xff]
    %v151 = vld [vmem:[#allocation5 + $0x1b0] sm:$0xff]
    %v152 = vld [vmem:[#allocation5 + $0x1b8] sm:$0xff]
    %v153 = vld [vmem:[#allocation5 + $0x1c0] sm:$0xff]
    %v154 = vld [vmem:[#allocation5 + $0x1c8] sm:$0xff]
    %v155 = vld [vmem:[#allocation5 + $0x1d0] sm:$0xff]
    %v156 = vld [vmem:[#allocation5 + $0x1d8] sm:$0xff]
    %v157 = vld [vmem:[#allocation5 + $0x1e0] sm:$0xff]
    %v158 = vld [vmem:[#allocation5 + $0x1e8] sm:$0xff]
    %v159 = vld [vmem:[#allocation5 + $0x1f0] sm:$0xff]
    %v160 = vld [vmem:[#allocation5 + $0x1f8] sm:$0xff]
    %v161 = vld [vmem:[#allocation5 + $0x200] sm:$0xff]
    %v162 = vld [vmem:[#allocation5 + $0x208] sm:$0xff]
    %v163 = vld [vmem:[#allocation5 + $0x210] sm:$0xff]
    %v164 = vld [vmem:[#allocation5 + $0x218] sm:$0xff]
    %v165 = vld [vmem:[#allocation5 + $0x220] sm:$0xff]
    %v166 = vld [vmem:[#allocation5 + $0x228] sm:$0xff]
    %v167 = vld [vmem:[#allocation5 + $0x230] sm:$0xff]
    %v168 = vld [vmem:[#allocation5 + $0x238] sm:$0xff]
    %v169 = vld [vmem:[#allocation5 + $0x240] sm:$0xff]
    %v170 = vld [vmem:[#allocation5 + $0x248] sm:$0xff]
    %v171 = vld [vmem:[#allocation5 + $0x250] sm:$0xff]
    %v172 = vld [vmem:[#allocation5 + $0x258] sm:$0xff]
    %v173 = vld [vmem:[#allocation5 + $0x260] sm:$0xff]
    %v174 = vld [vmem:[#allocation5 + $0x268] sm:$0xff]
    %v175 = vld [vmem:[#allocation5 + $0x270] sm:$0xff]
    %v176 = vld [vmem:[#allocation5 + $0x278] sm:$0xff]
    %v177 = vld [vmem:[#allocation5 + $0x280] sm:$0xff]
    %v178 = vld [vmem:[#allocation5 + $0x288] sm:$0xff]
    %v179 = vld [vmem:[#allocation5 + $0x290] sm:$0xff]
    %v180 = vld [vmem:[#allocation5 + $0x298] sm:$0xff]
    %v181 = vld [vmem:[#allocation5 + $0x2a0] sm:$0xff]
    %v182 = vld [vmem:[#allocation5 + $0x2a8] sm:$0xff]
    %v183 = vld [vmem:[#allocation5 + $0x2b0] sm:$0xff]
    %v184 = vld [vmem:[#allocation5 + $0x2b8] sm:$0xff]
    %v185 = vld [vmem:[#allocation5 + $0x2c0] sm:$0xff]
    %v186 = vld [vmem:[#allocation5 + $0x2c8] sm:$0xff]
    %v187 = vld [vmem:[#allocation5 + $0x2d0] sm:$0xff]
    %v188 = vld [vmem:[#allocation5 + $0x2d8] sm:$0xff]
    %v189 = vld [vmem:[#allocation5 + $0x2e0] sm:$0xff]
    %v190 = vld [vmem:[#allocation5 + $0x2e8] sm:$0xff]
    %v191 = vld [vmem:[#allocation5 + $0x2f0] sm:$0xff]
    %v192 = vld [vmem:[#allocation5 + $0x2f8] sm:$0xff]
    %v193 = vld [vmem:[#allocation5 + $0x300] sm:$0xff]
    %v194 = vld [vmem:[#allocation5 + $0x308] sm:$0xff]
    %v195 = vld [vmem:[#allocation5 + $0x310] sm:$0xff]
    %v196 = vld [vmem:[#allocation5 + $0x318] sm:$0xff]
    %v197 = vld [vmem:[#allocation5 + $0x320] sm:$0xff]
    %v198 = vld [vmem:[#allocation5 + $0x328] sm:$0xff]
    %v199 = vld [vmem:[#allocation5 + $0x330] sm:$0xff]
    %v200 = vld [vmem:[#allocation5 + $0x338] sm:$0xff]
    %v201 = vld [vmem:[#allocation5 + $0x340] sm:$0xff]
    %v202 = vld [vmem:[#allocation5 + $0x348] sm:$0xff]
    %v203 = vld [vmem:[#allocation5 + $0x350] sm:$0xff]
    %v204 = vld [vmem:[#allocation5 + $0x358] sm:$0xff]
    %v205 = vld [vmem:[#allocation5 + $0x360] sm:$0xff]
    %v206 = vld [vmem:[#allocation5 + $0x368] sm:$0xff]
    %v207 = vld [vmem:[#allocation5 + $0x370] sm:$0xff]
    %v208 = vld [vmem:[#allocation5 + $0x378] sm:$0xff]
    %v209 = vld [vmem:[#allocation5 + $0x380] sm:$0xff]
    %v210 = vld [vmem:[#allocation5 + $0x388] sm:$0xff]
    %v211 = vld [vmem:[#allocation5 + $0x390] sm:$0xff]
    %v212 = vld [vmem:[#allocation5 + $0x398] sm:$0xff]
    %v213 = vld [vmem:[#allocation5 + $0x3a0] sm:$0xff]
    %v214 = vld [vmem:[#allocation5 + $0x3a8] sm:$0xff]
    %v215 = vld [vmem:[#allocation5 + $0x3b0] sm:$0xff]
    %v216 = vld [vmem:[#allocation5 + $0x3b8] sm:$0xff]
    %v217 = vld [vmem:[#allocation5 + $0x3c0] sm:$0xff]
    %v218 = vld [vmem:[#allocation5 + $0x3c8] sm:$0xff]
    %v219 = vld [vmem:[#allocation5 + $0x3d0] sm:$0xff]
    %v220 = vld [vmem:[#allocation5 + $0x3d8] sm:$0xff]
    %v221 = vld [vmem:[#allocation5 + $0x3e0] sm:$0xff]
    %v222 = vld [vmem:[#allocation5 + $0x3e8] sm:$0xff]
    %v223 = vld [vmem:[#allocation5 + $0x3f0] sm:$0xff]
    %v224 = vld [vmem:[#allocation5 + $0x3f8] sm:$0xff]
    %v225 = vld [vmem:[#allocation5 + $0x400] sm:$0xff]
    %v226 = vld [vmem:[#allocation5 + $0x408] sm:$0xff]
    %v227 = vld [vmem:[#allocation5 + $0x410] sm:$0xff]
    %v228 = vld [vmem:[#allocation5 + $0x418] sm:$0xff]
    %v229 = vld [vmem:[#allocation5 + $0x420] sm:$0xff]
    %v230 = vld [vmem:[#allocation5 + $0x428] sm:$0xff]
    %v231 = vld [vmem:[#allocation5 + $0x430] sm:$0xff]
    %v232 = vld [vmem:[#allocation5 + $0x438] sm:$0xff]
    %v233 = vld [vmem:[#allocation5 + $0x440] sm:$0xff]
    %v234 = vld [vmem:[#allocation5 + $0x448] sm:$0xff]
    %v235 = vld [vmem:[#allocation5 + $0x450] sm:$0xff]
    %v236 = vld [vmem:[#allocation5 + $0x458] sm:$0xff]
    %v237 = vld [vmem:[#allocation5 + $0x460] sm:$0xff]
    %v238 = vld [vmem:[#allocation5 + $0x468] sm:$0xff]
    %v239 = vld [vmem:[#allocation5 + $0x470] sm:$0xff]
    %v240 = vld [vmem:[#allocation5 + $0x478] sm:$0xff]
    %v241 = vld [vmem:[#allocation5 + $0x480] sm:$0xff]
    %v242 = vld [vmem:[#allocation5 + $0x488] sm:$0xff]
    %v243 = vld [vmem:[#allocation5 + $0x490] sm:$0xff]
    %v244 = vld [vmem:[#allocation5 + $0x498] sm:$0xff]
    %v245 = vld [vmem:[#allocation5 + $0x4a0] sm:$0xff]
    %v246 = vld [vmem:[#allocation5 + $0x4a8] sm:$0xff]
    %v247 = vld [vmem:[#allocation5 + $0x4b0] sm:$0xff]
    %v248 = vld [vmem:[#allocation5 + $0x4b8] sm:$0xff]
    %v249 = vld [vmem:[#allocation5 + $0x4c0] sm:$0xff]
    %v250 = vld [vmem:[#allocation5 + $0x4c8] sm:$0xff]
    %v251 = vld [vmem:[#allocation5 + $0x4d0] sm:$0xff]
    %v252 = vld [vmem:[#allocation5 + $0x4d8] sm:$0xff]
    %v253 = vld [vmem:[#allocation5 + $0x4e0] sm:$0xff]
    %v254 = vld [vmem:[#allocation5 + $0x4e8] sm:$0xff]
    %v255 = vld [vmem:[#allocation5 + $0x4f0] sm:$0xff]
    %v256 = vld [vmem:[#allocation5 + $0x4f8] sm:$0xff]
    %v257 = vld [vmem:[#allocation5 + $0x500] sm:$0xff]
    %v258 = vld [vmem:[#allocation5 + $0x508] sm:$0xff]
    %v259 = vld [vmem:[#allocation5 + $0x510] sm:$0xff]
    %v260 = vld [vmem:[#allocation5 + $0x518] sm:$0xff]
    %v261 = vld [vmem:[#allocation5 + $0x520] sm:$0xff]
    %v262 = vld [vmem:[#allocation5 + $0x528] sm:$0xff]
    %v263 = vld [vmem:[#allocation5 + $0x530] sm:$0xff]
    %v264 = vld [vmem:[#allocation5 + $0x538] sm:$0xff]
    %v265 = vld [vmem:[#allocation5 + $0x540] sm:$0xff]
    %v266 = vld [vmem:[#allocation5 + $0x548] sm:$0xff]
    %v267 = vld [vmem:[#allocation5 + $0x550] sm:$0xff]
    %v268 = vld [vmem:[#allocation5 + $0x558] sm:$0xff]
    %v269 = vld [vmem:[#allocation5 + $0x560] sm:$0xff]
    %v270 = vld [vmem:[#allocation5 + $0x568] sm:$0xff]
    %v271 = vld [vmem:[#allocation5 + $0x570] sm:$0xff]
    %v272 = vld [vmem:[#allocation5 + $0x578] sm:$0xff]
    %v273 = vld [vmem:[#allocation5 + $0x580] sm:$0xff]
    %v274 = vld [vmem:[#allocation5 + $0x588] sm:$0xff]
    %v275 = vld [vmem:[#allocation5 + $0x590] sm:$0xff]
    %v276 = vld [vmem:[#allocation5 + $0x598] sm:$0xff]
    %v277 = vld [vmem:[#allocation5 + $0x5a0] sm:$0xff]
    %v278 = vld [vmem:[#allocation5 + $0x5a8] sm:$0xff]
    %v279 = vld [vmem:[#allocation5 + $0x5b0] sm:$0xff]
    %v280 = vld [vmem:[#allocation5 + $0x5b8] sm:$0xff]
    %v281 = vld [vmem:[#allocation5 + $0x5c0] sm:$0xff]
    %v282 = vld [vmem:[#allocation5 + $0x5c8] sm:$0xff]
    %v283 = vld [vmem:[#allocation5 + $0x5d0] sm:$0xff]
    %v284 = vld [vmem:[#allocation5 + $0x5d8] sm:$0xff]
    %v285 = vld [vmem:[#allocation5 + $0x5e0] sm:$0xff]
    %v286 = vld [vmem:[#allocation5 + $0x5e8] sm:$0xff]
    %v287 = vld [vmem:[#allocation5 + $0x5f0] sm:$0xff]
    %v288 = vld [vmem:[#allocation5 + $0x5f8] sm:$0xff]
    %v289 = vld [vmem:[#allocation5 + $0x600] sm:$0xff]
    %v290 = vld [vmem:[#allocation5 + $0x608] sm:$0xff]
    %v291 = vld [vmem:[#allocation5 + $0x610] sm:$0xff]
    %v292 = vld [vmem:[#allocation5 + $0x618] sm:$0xff]
    %v293 = vld [vmem:[#allocation5 + $0x620] sm:$0xff]
    %v294 = vld [vmem:[#allocation5 + $0x628] sm:$0xff]
    %v295 = vld [vmem:[#allocation5 + $0x630] sm:$0xff]
    %v296 = vld [vmem:[#allocation5 + $0x638] sm:$0xff]
    %v297 = vld [vmem:[#allocation5 + $0x640] sm:$0xff]
    %v298 = vld [vmem:[#allocation5 + $0x648] sm:$0xff]
    %v299 = vld [vmem:[#allocation5 + $0x650] sm:$0xff]
    %v300 = vld [vmem:[#allocation5 + $0x658] sm:$0xff]
    %v301 = vld [vmem:[#allocation5 + $0x660] sm:$0xff]
    %v302 = vld [vmem:[#allocation5 + $0x668] sm:$0xff]
    %v303 = vld [vmem:[#allocation5 + $0x670] sm:$0xff]
    %v304 = vld [vmem:[#allocation5 + $0x678] sm:$0xff]
    %v305 = vld [vmem:[#allocation5 + $0x680] sm:$0xff]
    %v306 = vld [vmem:[#allocation5 + $0x688] sm:$0xff]
    %v307 = vld [vmem:[#allocation5 + $0x690] sm:$0xff]
    %v308 = vld [vmem:[#allocation5 + $0x698] sm:$0xff]
    %v309 = vld [vmem:[#allocation5 + $0x6a0] sm:$0xff]
    %v310 = vld [vmem:[#allocation5 + $0x6a8] sm:$0xff]
    %v311 = vld [vmem:[#allocation5 + $0x6b0] sm:$0xff]
    %v312 = vld [vmem:[#allocation5 + $0x6b8] sm:$0xff]
    %v313 = vld [vmem:[#allocation5 + $0x6c0] sm:$0xff]
    %v314 = vld [vmem:[#allocation5 + $0x6c8] sm:$0xff]
    %v315 = vld [vmem:[#allocation5 + $0x6d0] sm:$0xff]
    %v316 = vld [vmem:[#allocation5 + $0x6d8] sm:$0xff]
    %v317 = vld [vmem:[#allocation5 + $0x6e0] sm:$0xff]
    %v318 = vld [vmem:[#allocation5 + $0x6e8] sm:$0xff]
    %v319 = vld [vmem:[#allocation5 + $0x6f0] sm:$0xff]
    %v320 = vld [vmem:[#allocation5 + $0x6f8] sm:$0xff]
    %v321 = vld [vmem:[#allocation5 + $0x700] sm:$0xff]
    %v322 = vld [vmem:[#allocation5 + $0x708] sm:$0xff]
    %v323 = vld [vmem:[#allocation5 + $0x710] sm:$0xff]
    %v324 = vld [vmem:[#allocation5 + $0x718] sm:$0xff]
    %v325 = vld [vmem:[#allocation5 + $0x720] sm:$0xff]
    %v326 = vld [vmem:[#allocation5 + $0x728] sm:$0xff]
    %v327 = vld [vmem:[#allocation5 + $0x730] sm:$0xff]
    %v328 = vld [vmem:[#allocation5 + $0x738] sm:$0xff]
    %v329 = vld [vmem:[#allocation5 + $0x740] sm:$0xff]
    %v330 = vld [vmem:[#allocation5 + $0x748] sm:$0xff]
    %v331 = vld [vmem:[#allocation5 + $0x750] sm:$0xff]
    %v332 = vld [vmem:[#allocation5 + $0x758] sm:$0xff]
    %v333 = vld [vmem:[#allocation5 + $0x760] sm:$0xff]
    %v334 = vld [vmem:[#allocation5 + $0x768] sm:$0xff]
    %v335 = vld [vmem:[#allocation5 + $0x770] sm:$0xff]
    %v336 = vld [vmem:[#allocation5 + $0x778] sm:$0xff]
    %v337 = vld [vmem:[#allocation5 + $0x780] sm:$0xff]
    %v338 = vld [vmem:[#allocation5 + $0x788] sm:$0xff]
    %v339 = vld [vmem:[#allocation5 + $0x790] sm:$0xff]
    %v340 = vld [vmem:[#allocation5 + $0x798] sm:$0xff]
    %v341 = vld [vmem:[#allocation5 + $0x7a0] sm:$0xff]
    %v342 = vld [vmem:[#allocation5 + $0x7a8] sm:$0xff]
    %v343 = vld [vmem:[#allocation5 + $0x7b0] sm:$0xff]
    %v344 = vld [vmem:[#allocation5 + $0x7b8] sm:$0xff]
    %v345 = vld [vmem:[#allocation5 + $0x7c0] sm:$0xff]
    %v346 = vld [vmem:[#allocation5 + $0x7c8] sm:$0xff]
    %v347 = vld [vmem:[#allocation5 + $0x7d0] sm:$0xff]
    %v348 = vld [vmem:[#allocation5 + $0x7d8] sm:$0xff]
    %v349 = vld [vmem:[#allocation5 + $0x7e0] sm:$0xff]
    %v350 = vld [vmem:[#allocation5 + $0x7e8] sm:$0xff]
    %v351 = vld [vmem:[#allocation5 + $0x7f0] sm:$0xff]
    %v352 = vld [vmem:[#allocation5 + $0x7f8] sm:$0xff]
    %v353 = vld [vmem:[%s2] sm:$0xf]
    %v355 = vlaneseq
    %v356 = vshrl.u32 %v355, 7
    %v357 = vsub.s32 0, %v356
    %v358 = vrot.slane %v353, %v357
    %v359 = vlaneseq
    %v360 = vshrl.u32 %v359, 7
    %v361 = vsub.s32 1, %v360
    %v362 = vrot.slane %v353, %v361
    %v363 = vlaneseq
    %v364 = vshrl.u32 %v363, 7
    %v365 = vsub.s32 2, %v364
    %v366 = vrot.slane %v353, %v365
    %v367 = vlaneseq
    %v368 = vshrl.u32 %v367, 7
    %v369 = vsub.s32 3, %v368
    %v370 = vrot.slane %v353, %v369
    %v631 = vunpack.c.l.b16 %v97
    %v632 = vunpack.c.h.b16 %v97
    %v633 = vunpack.c.l.b16 %v98
    %v634 = vunpack.c.h.b16 %v98
    %v635 = vunpack.c.l.b16 %v99
    %v636 = vunpack.c.h.b16 %v99
    %v637 = vunpack.c.l.b16 %v100
    %v638 = vunpack.c.h.b16 %v100
    %v639 = vunpack.c.l.b16 %v101
    %v640 = vunpack.c.h.b16 %v101
    %v641 = vunpack.c.l.b16 %v102
    %v642 = vunpack.c.h.b16 %v102
    %v643 = vunpack.c.l.b16 %v103
    %v644 = vunpack.c.h.b16 %v103
    %v645 = vunpack.c.l.b16 %v104
    %v646 = vunpack.c.h.b16 %v104
    %v647 = vunpack.c.l.b16 %v105
    %v648 = vunpack.c.h.b16 %v105
    %v649 = vunpack.c.l.b16 %v106
    %v650 = vunpack.c.h.b16 %v106
    %v651 = vunpack.c.l.b16 %v107
    %v652 = vunpack.c.h.b16 %v107
    %v653 = vunpack.c.l.b16 %v108
    %v654 = vunpack.c.h.b16 %v108
    %v655 = vunpack.c.l.b16 %v109
    %v656 = vunpack.c.h.b16 %v109
    %v657 = vunpack.c.l.b16 %v110
    %v658 = vunpack.c.h.b16 %v110
    %v659 = vunpack.c.l.b16 %v111
    %v660 = vunpack.c.h.b16 %v111
    %v661 = vunpack.c.l.b16 %v112
    %v662 = vunpack.c.h.b16 %v112
    %v663 = vunpack.c.l.b16 %v113
    %v664 = vunpack.c.h.b16 %v113
    %v665 = vunpack.c.l.b16 %v114
    %v666 = vunpack.c.h.b16 %v114
    %v667 = vunpack.c.l.b16 %v115
    %v668 = vunpack.c.h.b16 %v115
    %v669 = vunpack.c.l.b16 %v116
    %v670 = vunpack.c.h.b16 %v116
    %v671 = vunpack.c.l.b16 %v117
    %v672 = vunpack.c.h.b16 %v117
    %v673 = vunpack.c.l.b16 %v118
    %v674 = vunpack.c.h.b16 %v118
    %v675 = vunpack.c.l.b16 %v119
    %v676 = vunpack.c.h.b16 %v119
    %v677 = vunpack.c.l.b16 %v120
    %v678 = vunpack.c.h.b16 %v120
    %v679 = vunpack.c.l.b16 %v121
    %v680 = vunpack.c.h.b16 %v121
    %v681 = vunpack.c.l.b16 %v122
    %v682 = vunpack.c.h.b16 %v122
    %v683 = vunpack.c.l.b16 %v123
    %v684 = vunpack.c.h.b16 %v123
    %v685 = vunpack.c.l.b16 %v124
    %v686 = vunpack.c.h.b16 %v124
    %v687 = vunpack.c.l.b16 %v125
    %v688 = vunpack.c.h.b16 %v125
    %v689 = vunpack.c.l.b16 %v126
    %v690 = vunpack.c.h.b16 %v126
    %v691 = vunpack.c.l.b16 %v127
    %v692 = vunpack.c.h.b16 %v127
    %v693 = vunpack.c.l.b16 %v128
    %v694 = vunpack.c.h.b16 %v128
    %v695 = vunpack.c.l.b16 %v129
    %v696 = vunpack.c.h.b16 %v129
    %v697 = vunpack.c.l.b16 %v130
    %v698 = vunpack.c.h.b16 %v130
    %v699 = vunpack.c.l.b16 %v131
    %v700 = vunpack.c.h.b16 %v131
    %v701 = vunpack.c.l.b16 %v132
    %v702 = vunpack.c.h.b16 %v132
    %v703 = vunpack.c.l.b16 %v133
    %v704 = vunpack.c.h.b16 %v133
    %v705 = vunpack.c.l.b16 %v134
    %v706 = vunpack.c.h.b16 %v134
    %v707 = vunpack.c.l.b16 %v135
    %v708 = vunpack.c.h.b16 %v135
    %v709 = vunpack.c.l.b16 %v136
    %v710 = vunpack.c.h.b16 %v136
    %v711 = vunpack.c.l.b16 %v137
    %v712 = vunpack.c.h.b16 %v137
    %v713 = vunpack.c.l.b16 %v138
    %v714 = vunpack.c.h.b16 %v138
    %v715 = vunpack.c.l.b16 %v139
    %v716 = vunpack.c.h.b16 %v139
    %v717 = vunpack.c.l.b16 %v140
    %v718 = vunpack.c.h.b16 %v140
    %v719 = vunpack.c.l.b16 %v141
    %v720 = vunpack.c.h.b16 %v141
    %v721 = vunpack.c.l.b16 %v142
    %v722 = vunpack.c.h.b16 %v142
    %v723 = vunpack.c.l.b16 %v143
    %v724 = vunpack.c.h.b16 %v143
    %v725 = vunpack.c.l.b16 %v144
    %v726 = vunpack.c.h.b16 %v144
    %v727 = vunpack.c.l.b16 %v145
    %v728 = vunpack.c.h.b16 %v145
    %v729 = vunpack.c.l.b16 %v146
    %v730 = vunpack.c.h.b16 %v146
    %v731 = vunpack.c.l.b16 %v147
    %v732 = vunpack.c.h.b16 %v147
    %v733 = vunpack.c.l.b16 %v148
    %v734 = vunpack.c.h.b16 %v148
    %v735 = vunpack.c.l.b16 %v149
    %v736 = vunpack.c.h.b16 %v149
    %v737 = vunpack.c.l.b16 %v150
    %v738 = vunpack.c.h.b16 %v150
    %v739 = vunpack.c.l.b16 %v151
    %v740 = vunpack.c.h.b16 %v151
    %v741 = vunpack.c.l.b16 %v152
    %v742 = vunpack.c.h.b16 %v152
    %v743 = vunpack.c.l.b16 %v153
    %v744 = vunpack.c.h.b16 %v153
    %v745 = vunpack.c.l.b16 %v154
    %v746 = vunpack.c.h.b16 %v154
    %v747 = vunpack.c.l.b16 %v155
    %v748 = vunpack.c.h.b16 %v155
    %v749 = vunpack.c.l.b16 %v156
    %v750 = vunpack.c.h.b16 %v156
    %v751 = vunpack.c.l.b16 %v157
    %v752 = vunpack.c.h.b16 %v157
    %v753 = vunpack.c.l.b16 %v158
    %v754 = vunpack.c.h.b16 %v158
    %v755 = vunpack.c.l.b16 %v159
    %v756 = vunpack.c.h.b16 %v159
    %v757 = vunpack.c.l.b16 %v160
    %v758 = vunpack.c.h.b16 %v160
    %v759 = vunpack.c.l.b16 %v161
    %v760 = vunpack.c.h.b16 %v161
    %v761 = vunpack.c.l.b16 %v162
    %v762 = vunpack.c.h.b16 %v162
    %v763 = vunpack.c.l.b16 %v163
    %v764 = vunpack.c.h.b16 %v163
    %v765 = vunpack.c.l.b16 %v164
    %v766 = vunpack.c.h.b16 %v164
    %v767 = vunpack.c.l.b16 %v165
    %v768 = vunpack.c.h.b16 %v165
    %v769 = vunpack.c.l.b16 %v166
    %v770 = vunpack.c.h.b16 %v166
    %v771 = vunpack.c.l.b16 %v167
    %v772 = vunpack.c.h.b16 %v167
    %v773 = vunpack.c.l.b16 %v168
    %v774 = vunpack.c.h.b16 %v168
    %v775 = vunpack.c.l.b16 %v169
    %v776 = vunpack.c.h.b16 %v169
    %v777 = vunpack.c.l.b16 %v170
    %v778 = vunpack.c.h.b16 %v170
    %v779 = vunpack.c.l.b16 %v171
    %v780 = vunpack.c.h.b16 %v171
    %v781 = vunpack.c.l.b16 %v172
    %v782 = vunpack.c.h.b16 %v172
    %v783 = vunpack.c.l.b16 %v173
    %v784 = vunpack.c.h.b16 %v173
    %v785 = vunpack.c.l.b16 %v174
    %v786 = vunpack.c.h.b16 %v174
    %v787 = vunpack.c.l.b16 %v175
    %v788 = vunpack.c.h.b16 %v175
    %v789 = vunpack.c.l.b16 %v176
    %v790 = vunpack.c.h.b16 %v176
    %v791 = vunpack.c.l.b16 %v177
    %v792 = vunpack.c.h.b16 %v177
    %v793 = vunpack.c.l.b16 %v178
    %v794 = vunpack.c.h.b16 %v178
    %v795 = vunpack.c.l.b16 %v179
    %v796 = vunpack.c.h.b16 %v179
    %v797 = vunpack.c.l.b16 %v180
    %v798 = vunpack.c.h.b16 %v180
    %v799 = vunpack.c.l.b16 %v181
    %v800 = vunpack.c.h.b16 %v181
    %v801 = vunpack.c.l.b16 %v182
    %v802 = vunpack.c.h.b16 %v182
    %v803 = vunpack.c.l.b16 %v183
    %v804 = vunpack.c.h.b16 %v183
    %v805 = vunpack.c.l.b16 %v184
    %v806 = vunpack.c.h.b16 %v184
    %v807 = vunpack.c.l.b16 %v185
    %v808 = vunpack.c.h.b16 %v185
    %v809 = vunpack.c.l.b16 %v186
    %v810 = vunpack.c.h.b16 %v186
    %v811 = vunpack.c.l.b16 %v187
    %v812 = vunpack.c.h.b16 %v187
    %v813 = vunpack.c.l.b16 %v188
    %v814 = vunpack.c.h.b16 %v188
    %v815 = vunpack.c.l.b16 %v189
    %v816 = vunpack.c.h.b16 %v189
    %v817 = vunpack.c.l.b16 %v190
    %v818 = vunpack.c.h.b16 %v190
    %v819 = vunpack.c.l.b16 %v191
    %v820 = vunpack.c.h.b16 %v191
    %v821 = vunpack.c.l.b16 %v192
    %v822 = vunpack.c.h.b16 %v192
    %v823 = vunpack.c.l.b16 %v193
    %v824 = vunpack.c.h.b16 %v193
    %v825 = vunpack.c.l.b16 %v194
    %v826 = vunpack.c.h.b16 %v194
    %v827 = vunpack.c.l.b16 %v195
    %v828 = vunpack.c.h.b16 %v195
    %v829 = vunpack.c.l.b16 %v196
    %v830 = vunpack.c.h.b16 %v196
    %v831 = vunpack.c.l.b16 %v197
    %v832 = vunpack.c.h.b16 %v197
    %v833 = vunpack.c.l.b16 %v198
    %v834 = vunpack.c.h.b16 %v198
    %v835 = vunpack.c.l.b16 %v199
    %v836 = vunpack.c.h.b16 %v199
    %v837 = vunpack.c.l.b16 %v200
    %v838 = vunpack.c.h.b16 %v200
    %v839 = vunpack.c.l.b16 %v201
    %v840 = vunpack.c.h.b16 %v201
    %v841 = vunpack.c.l.b16 %v202
    %v842 = vunpack.c.h.b16 %v202
    %v843 = vunpack.c.l.b16 %v203
    %v844 = vunpack.c.h.b16 %v203
    %v845 = vunpack.c.l.b16 %v204
    %v846 = vunpack.c.h.b16 %v204
    %v847 = vunpack.c.l.b16 %v205
    %v848 = vunpack.c.h.b16 %v205
    %v849 = vunpack.c.l.b16 %v206
    %v850 = vunpack.c.h.b16 %v206
    %v851 = vunpack.c.l.b16 %v207
    %v852 = vunpack.c.h.b16 %v207
    %v853 = vunpack.c.l.b16 %v208
    %v854 = vunpack.c.h.b16 %v208
    %v855 = vunpack.c.l.b16 %v209
    %v856 = vunpack.c.h.b16 %v209
    %v857 = vunpack.c.l.b16 %v210
    %v858 = vunpack.c.h.b16 %v210
    %v859 = vunpack.c.l.b16 %v211
    %v860 = vunpack.c.h.b16 %v211
    %v861 = vunpack.c.l.b16 %v212
    %v862 = vunpack.c.h.b16 %v212
    %v863 = vunpack.c.l.b16 %v213
    %v864 = vunpack.c.h.b16 %v213
    %v865 = vunpack.c.l.b16 %v214
    %v866 = vunpack.c.h.b16 %v214
    %v867 = vunpack.c.l.b16 %v215
    %v868 = vunpack.c.h.b16 %v215
    %v869 = vunpack.c.l.b16 %v216
    %v870 = vunpack.c.h.b16 %v216
    %v871 = vunpack.c.l.b16 %v217
    %v872 = vunpack.c.h.b16 %v217
    %v873 = vunpack.c.l.b16 %v218
    %v874 = vunpack.c.h.b16 %v218
    %v875 = vunpack.c.l.b16 %v219
    %v876 = vunpack.c.h.b16 %v219
    %v877 = vunpack.c.l.b16 %v220
    %v878 = vunpack.c.h.b16 %v220
    %v879 = vunpack.c.l.b16 %v221
    %v880 = vunpack.c.h.b16 %v221
    %v881 = vunpack.c.l.b16 %v222
    %v882 = vunpack.c.h.b16 %v222
    %v883 = vunpack.c.l.b16 %v223
    %v884 = vunpack.c.h.b16 %v223
    %v885 = vunpack.c.l.b16 %v224
    %v886 = vunpack.c.h.b16 %v224
    %v887 = vunpack.c.l.b16 %v225
    %v888 = vunpack.c.h.b16 %v225
    %v889 = vunpack.c.l.b16 %v226
    %v890 = vunpack.c.h.b16 %v226
    %v891 = vunpack.c.l.b16 %v227
    %v892 = vunpack.c.h.b16 %v227
    %v893 = vunpack.c.l.b16 %v228
    %v894 = vunpack.c.h.b16 %v228
    %v895 = vunpack.c.l.b16 %v229
    %v896 = vunpack.c.h.b16 %v229
    %v897 = vunpack.c.l.b16 %v230
    %v898 = vunpack.c.h.b16 %v230
    %v899 = vunpack.c.l.b16 %v231
    %v900 = vunpack.c.h.b16 %v231
    %v901 = vunpack.c.l.b16 %v232
    %v902 = vunpack.c.h.b16 %v232
    %v903 = vunpack.c.l.b16 %v233
    %v904 = vunpack.c.h.b16 %v233
    %v905 = vunpack.c.l.b16 %v234
    %v906 = vunpack.c.h.b16 %v234
    %v907 = vunpack.c.l.b16 %v235
    %v908 = vunpack.c.h.b16 %v235
    %v909 = vunpack.c.l.b16 %v236
    %v910 = vunpack.c.h.b16 %v236
    %v911 = vunpack.c.l.b16 %v237
    %v912 = vunpack.c.h.b16 %v237
    %v913 = vunpack.c.l.b16 %v238
    %v914 = vunpack.c.h.b16 %v238
    %v915 = vunpack.c.l.b16 %v239
    %v916 = vunpack.c.h.b16 %v239
    %v917 = vunpack.c.l.b16 %v240
    %v918 = vunpack.c.h.b16 %v240
    %v919 = vunpack.c.l.b16 %v241
    %v920 = vunpack.c.h.b16 %v241
    %v921 = vunpack.c.l.b16 %v242
    %v922 = vunpack.c.h.b16 %v242
    %v923 = vunpack.c.l.b16 %v243
    %v924 = vunpack.c.h.b16 %v243
    %v925 = vunpack.c.l.b16 %v244
    %v926 = vunpack.c.h.b16 %v244
    %v927 = vunpack.c.l.b16 %v245
    %v928 = vunpack.c.h.b16 %v245
    %v929 = vunpack.c.l.b16 %v246
    %v930 = vunpack.c.h.b16 %v246
    %v931 = vunpack.c.l.b16 %v247
    %v932 = vunpack.c.h.b16 %v247
    %v933 = vunpack.c.l.b16 %v248
    %v934 = vunpack.c.h.b16 %v248
    %v935 = vunpack.c.l.b16 %v249
    %v936 = vunpack.c.h.b16 %v249
    %v937 = vunpack.c.l.b16 %v250
    %v938 = vunpack.c.h.b16 %v250
    %v939 = vunpack.c.l.b16 %v251
    %v940 = vunpack.c.h.b16 %v251
    %v941 = vunpack.c.l.b16 %v252
    %v942 = vunpack.c.h.b16 %v252
    %v943 = vunpack.c.l.b16 %v253
    %v944 = vunpack.c.h.b16 %v253
    %v945 = vunpack.c.l.b16 %v254
    %v946 = vunpack.c.h.b16 %v254
    %v947 = vunpack.c.l.b16 %v255
    %v948 = vunpack.c.h.b16 %v255
    %v949 = vunpack.c.l.b16 %v256
    %v950 = vunpack.c.h.b16 %v256
    %v951 = vunpack.c.l.b16 %v257
    %v952 = vunpack.c.h.b16 %v257
    %v953 = vunpack.c.l.b16 %v258
    %v954 = vunpack.c.h.b16 %v258
    %v955 = vunpack.c.l.b16 %v259
    %v956 = vunpack.c.h.b16 %v259
    %v957 = vunpack.c.l.b16 %v260
    %v958 = vunpack.c.h.b16 %v260
    %v959 = vunpack.c.l.b16 %v261
    %v960 = vunpack.c.h.b16 %v261
    %v961 = vunpack.c.l.b16 %v262
    %v962 = vunpack.c.h.b16 %v262
    %v963 = vunpack.c.l.b16 %v263
    %v964 = vunpack.c.h.b16 %v263
    %v965 = vunpack.c.l.b16 %v264
    %v966 = vunpack.c.h.b16 %v264
    %v967 = vunpack.c.l.b16 %v265
    %v968 = vunpack.c.h.b16 %v265
    %v969 = vunpack.c.l.b16 %v266
    %v970 = vunpack.c.h.b16 %v266
    %v971 = vunpack.c.l.b16 %v267
    %v972 = vunpack.c.h.b16 %v267
    %v973 = vunpack.c.l.b16 %v268
    %v974 = vunpack.c.h.b16 %v268
    %v975 = vunpack.c.l.b16 %v269
    %v976 = vunpack.c.h.b16 %v269
    %v977 = vunpack.c.l.b16 %v270
    %v978 = vunpack.c.h.b16 %v270
    %v979 = vunpack.c.l.b16 %v271
    %v980 = vunpack.c.h.b16 %v271
    %v981 = vunpack.c.l.b16 %v272
    %v982 = vunpack.c.h.b16 %v272
    %v983 = vunpack.c.l.b16 %v273
    %v984 = vunpack.c.h.b16 %v273
    %v985 = vunpack.c.l.b16 %v274
    %v986 = vunpack.c.h.b16 %v274
    %v987 = vunpack.c.l.b16 %v275
    %v988 = vunpack.c.h.b16 %v275
    %v989 = vunpack.c.l.b16 %v276
    %v990 = vunpack.c.h.b16 %v276
    %v991 = vunpack.c.l.b16 %v277
    %v992 = vunpack.c.h.b16 %v277
    %v993 = vunpack.c.l.b16 %v278
    %v994 = vunpack.c.h.b16 %v278
    %v995 = vunpack.c.l.b16 %v279
    %v996 = vunpack.c.h.b16 %v279
    %v997 = vunpack.c.l.b16 %v280
    %v998 = vunpack.c.h.b16 %v280
    %v999 = vunpack.c.l.b16 %v281
    %v1000 = vunpack.c.h.b16 %v281
    %v1001 = vunpack.c.l.b16 %v282
    %v1002 = vunpack.c.h.b16 %v282
    %v1003 = vunpack.c.l.b16 %v283
    %v1004 = vunpack.c.h.b16 %v283
    %v1005 = vunpack.c.l.b16 %v284
    %v1006 = vunpack.c.h.b16 %v284
    %v1007 = vunpack.c.l.b16 %v285
    %v1008 = vunpack.c.h.b16 %v285
    %v1009 = vunpack.c.l.b16 %v286
    %v1010 = vunpack.c.h.b16 %v286
    %v1011 = vunpack.c.l.b16 %v287
    %v1012 = vunpack.c.h.b16 %v287
    %v1013 = vunpack.c.l.b16 %v288
    %v1014 = vunpack.c.h.b16 %v288
    %v1015 = vunpack.c.l.b16 %v289
    %v1016 = vunpack.c.h.b16 %v289
    %v1017 = vunpack.c.l.b16 %v290
    %v1018 = vunpack.c.h.b16 %v290
    %v1019 = vunpack.c.l.b16 %v291
    %v1020 = vunpack.c.h.b16 %v291
    %v1021 = vunpack.c.l.b16 %v292
    %v1022 = vunpack.c.h.b16 %v292
    %v1023 = vunpack.c.l.b16 %v293
    %v1024 = vunpack.c.h.b16 %v293
    %v1025 = vunpack.c.l.b16 %v294
    %v1026 = vunpack.c.h.b16 %v294
    %v1027 = vunpack.c.l.b16 %v295
    %v1028 = vunpack.c.h.b16 %v295
    %v1029 = vunpack.c.l.b16 %v296
    %v1030 = vunpack.c.h.b16 %v296
    %v1031 = vunpack.c.l.b16 %v297
    %v1032 = vunpack.c.h.b16 %v297
    %v1033 = vunpack.c.l.b16 %v298
    %v1034 = vunpack.c.h.b16 %v298
    %v1035 = vunpack.c.l.b16 %v299
    %v1036 = vunpack.c.h.b16 %v299
    %v1037 = vunpack.c.l.b16 %v300
    %v1038 = vunpack.c.h.b16 %v300
    %v1039 = vunpack.c.l.b16 %v301
    %v1040 = vunpack.c.h.b16 %v301
    %v1041 = vunpack.c.l.b16 %v302
    %v1042 = vunpack.c.h.b16 %v302
    %v1043 = vunpack.c.l.b16 %v303
    %v1044 = vunpack.c.h.b16 %v303
    %v1045 = vunpack.c.l.b16 %v304
    %v1046 = vunpack.c.h.b16 %v304
    %v1047 = vunpack.c.l.b16 %v305
    %v1048 = vunpack.c.h.b16 %v305
    %v1049 = vunpack.c.l.b16 %v306
    %v1050 = vunpack.c.h.b16 %v306
    %v1051 = vunpack.c.l.b16 %v307
    %v1052 = vunpack.c.h.b16 %v307
    %v1053 = vunpack.c.l.b16 %v308
    %v1054 = vunpack.c.h.b16 %v308
    %v1055 = vunpack.c.l.b16 %v309
    %v1056 = vunpack.c.h.b16 %v309
    %v1057 = vunpack.c.l.b16 %v310
    %v1058 = vunpack.c.h.b16 %v310
    %v1059 = vunpack.c.l.b16 %v311
    %v1060 = vunpack.c.h.b16 %v311
    %v1061 = vunpack.c.l.b16 %v312
    %v1062 = vunpack.c.h.b16 %v312
    %v1063 = vunpack.c.l.b16 %v313
    %v1064 = vunpack.c.h.b16 %v313
    %v1065 = vunpack.c.l.b16 %v314
    %v1066 = vunpack.c.h.b16 %v314
    %v1067 = vunpack.c.l.b16 %v315
    %v1068 = vunpack.c.h.b16 %v315
    %v1069 = vunpack.c.l.b16 %v316
    %v1070 = vunpack.c.h.b16 %v316
    %v1071 = vunpack.c.l.b16 %v317
    %v1072 = vunpack.c.h.b16 %v317
    %v1073 = vunpack.c.l.b16 %v318
    %v1074 = vunpack.c.h.b16 %v318
    %v1075 = vunpack.c.l.b16 %v319
    %v1076 = vunpack.c.h.b16 %v319
    %v1077 = vunpack.c.l.b16 %v320
    %v1078 = vunpack.c.h.b16 %v320
    %v1079 = vunpack.c.l.b16 %v321
    %v1080 = vunpack.c.h.b16 %v321
    %v1081 = vunpack.c.l.b16 %v322
    %v1082 = vunpack.c.h.b16 %v322
    %v1083 = vunpack.c.l.b16 %v323
    %v1084 = vunpack.c.h.b16 %v323
    %v1085 = vunpack.c.l.b16 %v324
    %v1086 = vunpack.c.h.b16 %v324
    %v1087 = vunpack.c.l.b16 %v325
    %v1088 = vunpack.c.h.b16 %v325
    %v1089 = vunpack.c.l.b16 %v326
    %v1090 = vunpack.c.h.b16 %v326
    %v1091 = vunpack.c.l.b16 %v327
    %v1092 = vunpack.c.h.b16 %v327
    %v1093 = vunpack.c.l.b16 %v328
    %v1094 = vunpack.c.h.b16 %v328
    %v1095 = vunpack.c.l.b16 %v329
    %v1096 = vunpack.c.h.b16 %v329
    %v1097 = vunpack.c.l.b16 %v330
    %v1098 = vunpack.c.h.b16 %v330
    %v1099 = vunpack.c.l.b16 %v331
    %v1100 = vunpack.c.h.b16 %v331
    %v1101 = vunpack.c.l.b16 %v332
    %v1102 = vunpack.c.h.b16 %v332
    %v1103 = vunpack.c.l.b16 %v333
    %v1104 = vunpack.c.h.b16 %v333
    %v1105 = vunpack.c.l.b16 %v334
    %v1106 = vunpack.c.h.b16 %v334
    %v1107 = vunpack.c.l.b16 %v335
    %v1108 = vunpack.c.h.b16 %v335
    %v1109 = vunpack.c.l.b16 %v336
    %v1110 = vunpack.c.h.b16 %v336
    %v1111 = vunpack.c.l.b16 %v337
    %v1112 = vunpack.c.h.b16 %v337
    %v1113 = vunpack.c.l.b16 %v338
    %v1114 = vunpack.c.h.b16 %v338
    %v1115 = vunpack.c.l.b16 %v339
    %v1116 = vunpack.c.h.b16 %v339
    %v1117 = vunpack.c.l.b16 %v340
    %v1118 = vunpack.c.h.b16 %v340
    %v1119 = vunpack.c.l.b16 %v341
    %v1120 = vunpack.c.h.b16 %v341
    %v1121 = vunpack.c.l.b16 %v342
    %v1122 = vunpack.c.h.b16 %v342
    %v1123 = vunpack.c.l.b16 %v343
    %v1124 = vunpack.c.h.b16 %v343
    %v1125 = vunpack.c.l.b16 %v344
    %v1126 = vunpack.c.h.b16 %v344
    %v1127 = vunpack.c.l.b16 %v345
    %v1128 = vunpack.c.h.b16 %v345
    %v1129 = vunpack.c.l.b16 %v346
    %v1130 = vunpack.c.h.b16 %v346
    %v1131 = vunpack.c.l.b16 %v347
    %v1132 = vunpack.c.h.b16 %v347
    %v1133 = vunpack.c.l.b16 %v348
    %v1134 = vunpack.c.h.b16 %v348
    %v1135 = vunpack.c.l.b16 %v349
    %v1136 = vunpack.c.h.b16 %v349
    %v1137 = vunpack.c.l.b16 %v350
    %v1138 = vunpack.c.h.b16 %v350
    %v1139 = vunpack.c.l.b16 %v351
    %v1140 = vunpack.c.h.b16 %v351
    %v1141 = vunpack.c.l.b16 %v352
    %v1142 = vunpack.c.h.b16 %v352
    %v1143 = vpack.c.b16 %v635, %v631
    %v1144 = vpack.c.b16 %v636, %v632
    %v1145 = vpack.c.b16 %v637, %v633
    %v1146 = vpack.c.b16 %v638, %v634
    %v1147 = vpack.c.b16 %v643, %v639
    %v1148 = vpack.c.b16 %v644, %v640
    %v1149 = vpack.c.b16 %v645, %v641
    %v1150 = vpack.c.b16 %v646, %v642
    %v1151 = vpack.c.b16 %v651, %v647
    %v1152 = vpack.c.b16 %v652, %v648
    %v1153 = vpack.c.b16 %v653, %v649
    %v1154 = vpack.c.b16 %v654, %v650
    %v1155 = vpack.c.b16 %v659, %v655
    %v1156 = vpack.c.b16 %v660, %v656
    %v1157 = vpack.c.b16 %v661, %v657
    %v1158 = vpack.c.b16 %v662, %v658
    %v1159 = vpack.c.b16 %v667, %v663
    %v1160 = vpack.c.b16 %v668, %v664
    %v1161 = vpack.c.b16 %v669, %v665
    %v1162 = vpack.c.b16 %v670, %v666
    %v1163 = vpack.c.b16 %v675, %v671
    %v1164 = vpack.c.b16 %v676, %v672
    %v1165 = vpack.c.b16 %v677, %v673
    %v1166 = vpack.c.b16 %v678, %v674
    %v1167 = vpack.c.b16 %v683, %v679
    %v1168 = vpack.c.b16 %v684, %v680
    %v1169 = vpack.c.b16 %v685, %v681
    %v1170 = vpack.c.b16 %v686, %v682
    %v1171 = vpack.c.b16 %v691, %v687
    %v1172 = vpack.c.b16 %v692, %v688
    %v1173 = vpack.c.b16 %v693, %v689
    %v1174 = vpack.c.b16 %v694, %v690
    %v1175 = vpack.c.b16 %v699, %v695
    %v1176 = vpack.c.b16 %v700, %v696
    %v1177 = vpack.c.b16 %v701, %v697
    %v1178 = vpack.c.b16 %v702, %v698
    %v1179 = vpack.c.b16 %v707, %v703
    %v1180 = vpack.c.b16 %v708, %v704
    %v1181 = vpack.c.b16 %v709, %v705
    %v1182 = vpack.c.b16 %v710, %v706
    %v1183 = vpack.c.b16 %v715, %v711
    %v1184 = vpack.c.b16 %v716, %v712
    %v1185 = vpack.c.b16 %v717, %v713
    %v1186 = vpack.c.b16 %v718, %v714
    %v1187 = vpack.c.b16 %v723, %v719
    %v1188 = vpack.c.b16 %v724, %v720
    %v1189 = vpack.c.b16 %v725, %v721
    %v1190 = vpack.c.b16 %v726, %v722
    %v1191 = vpack.c.b16 %v731, %v727
    %v1192 = vpack.c.b16 %v732, %v728
    %v1193 = vpack.c.b16 %v733, %v729
    %v1194 = vpack.c.b16 %v734, %v730
    %v1195 = vpack.c.b16 %v739, %v735
    %v1196 = vpack.c.b16 %v740, %v736
    %v1197 = vpack.c.b16 %v741, %v737
    %v1198 = vpack.c.b16 %v742, %v738
    %v1199 = vpack.c.b16 %v747, %v743
    %v1200 = vpack.c.b16 %v748, %v744
    %v1201 = vpack.c.b16 %v749, %v745
    %v1202 = vpack.c.b16 %v750, %v746
    %v1203 = vpack.c.b16 %v755, %v751
    %v1204 = vpack.c.b16 %v756, %v752
    %v1205 = vpack.c.b16 %v757, %v753
    %v1206 = vpack.c.b16 %v758, %v754
    %v1207 = vpack.c.b16 %v763, %v759
    %v1208 = vpack.c.b16 %v764, %v760
    %v1209 = vpack.c.b16 %v765, %v761
    %v1210 = vpack.c.b16 %v766, %v762
    %v1211 = vpack.c.b16 %v771, %v767
    %v1212 = vpack.c.b16 %v772, %v768
    %v1213 = vpack.c.b16 %v773, %v769
    %v1214 = vpack.c.b16 %v774, %v770
    %v1215 = vpack.c.b16 %v779, %v775
    %v1216 = vpack.c.b16 %v780, %v776
    %v1217 = vpack.c.b16 %v781, %v777
    %v1218 = vpack.c.b16 %v782, %v778
    %v1219 = vpack.c.b16 %v787, %v783
    %v1220 = vpack.c.b16 %v788, %v784
    %v1221 = vpack.c.b16 %v789, %v785
    %v1222 = vpack.c.b16 %v790, %v786
    %v1223 = vpack.c.b16 %v795, %v791
    %v1224 = vpack.c.b16 %v796, %v792
    %v1225 = vpack.c.b16 %v797, %v793
    %v1226 = vpack.c.b16 %v798, %v794
    %v1227 = vpack.c.b16 %v803, %v799
    %v1228 = vpack.c.b16 %v804, %v800
    %v1229 = vpack.c.b16 %v805, %v801
    %v1230 = vpack.c.b16 %v806, %v802
    %v1231 = vpack.c.b16 %v811, %v807
    %v1232 = vpack.c.b16 %v812, %v808
    %v1233 = vpack.c.b16 %v813, %v809
    %v1234 = vpack.c.b16 %v814, %v810
    %v1235 = vpack.c.b16 %v819, %v815
    %v1236 = vpack.c.b16 %v820, %v816
    %v1237 = vpack.c.b16 %v821, %v817
    %v1238 = vpack.c.b16 %v822, %v818
    %v1239 = vpack.c.b16 %v827, %v823
    %v1240 = vpack.c.b16 %v828, %v824
    %v1241 = vpack.c.b16 %v829, %v825
    %v1242 = vpack.c.b16 %v830, %v826
    %v1243 = vpack.c.b16 %v835, %v831
    %v1244 = vpack.c.b16 %v836, %v832
    %v1245 = vpack.c.b16 %v837, %v833
    %v1246 = vpack.c.b16 %v838, %v834
    %v1247 = vpack.c.b16 %v843, %v839
    %v1248 = vpack.c.b16 %v844, %v840
    %v1249 = vpack.c.b16 %v845, %v841
    %v1250 = vpack.c.b16 %v846, %v842
    %v1251 = vpack.c.b16 %v851, %v847
    %v1252 = vpack.c.b16 %v852, %v848
    %v1253 = vpack.c.b16 %v853, %v849
    %v1254 = vpack.c.b16 %v854, %v850
    %v1255 = vpack.c.b16 %v859, %v855
    %v1256 = vpack.c.b16 %v860, %v856
    %v1257 = vpack.c.b16 %v861, %v857
    %v1258 = vpack.c.b16 %v862, %v858
    %v1259 = vpack.c.b16 %v867, %v863
    %v1260 = vpack.c.b16 %v868, %v864
    %v1261 = vpack.c.b16 %v869, %v865
    %v1262 = vpack.c.b16 %v870, %v866
    %v1263 = vpack.c.b16 %v875, %v871
    %v1264 = vpack.c.b16 %v876, %v872
    %v1265 = vpack.c.b16 %v877, %v873
    %v1266 = vpack.c.b16 %v878, %v874
    %v1267 = vpack.c.b16 %v883, %v879
    %v1268 = vpack.c.b16 %v884, %v880
    %v1269 = vpack.c.b16 %v885, %v881
    %v1270 = vpack.c.b16 %v886, %v882
    %v1271 = vpack.c.b16 %v891, %v887
    %v1272 = vpack.c.b16 %v892, %v888
    %v1273 = vpack.c.b16 %v893, %v889
    %v1274 = vpack.c.b16 %v894, %v890
    %v1275 = vpack.c.b16 %v899, %v895
    %v1276 = vpack.c.b16 %v900, %v896
    %v1277 = vpack.c.b16 %v901, %v897
    %v1278 = vpack.c.b16 %v902, %v898
    %v1279 = vpack.c.b16 %v907, %v903
    %v1280 = vpack.c.b16 %v908, %v904
    %v1281 = vpack.c.b16 %v909, %v905
    %v1282 = vpack.c.b16 %v910, %v906
    %v1283 = vpack.c.b16 %v915, %v911
    %v1284 = vpack.c.b16 %v916, %v912
    %v1285 = vpack.c.b16 %v917, %v913
    %v1286 = vpack.c.b16 %v918, %v914
    %v1287 = vpack.c.b16 %v923, %v919
    %v1288 = vpack.c.b16 %v924, %v920
    %v1289 = vpack.c.b16 %v925, %v921
    %v1290 = vpack.c.b16 %v926, %v922
    %v1291 = vpack.c.b16 %v931, %v927
    %v1292 = vpack.c.b16 %v932, %v928
    %v1293 = vpack.c.b16 %v933, %v929
    %v1294 = vpack.c.b16 %v934, %v930
    %v1295 = vpack.c.b16 %v939, %v935
    %v1296 = vpack.c.b16 %v940, %v936
    %v1297 = vpack.c.b16 %v941, %v937
    %v1298 = vpack.c.b16 %v942, %v938
    %v1299 = vpack.c.b16 %v947, %v943
    %v1300 = vpack.c.b16 %v948, %v944
    %v1301 = vpack.c.b16 %v949, %v945
    %v1302 = vpack.c.b16 %v950, %v946
    %v1303 = vpack.c.b16 %v955, %v951
    %v1304 = vpack.c.b16 %v956, %v952
    %v1305 = vpack.c.b16 %v957, %v953
    %v1306 = vpack.c.b16 %v958, %v954
    %v1307 = vpack.c.b16 %v963, %v959
    %v1308 = vpack.c.b16 %v964, %v960
    %v1309 = vpack.c.b16 %v965, %v961
    %v1310 = vpack.c.b16 %v966, %v962
    %v1311 = vpack.c.b16 %v971, %v967
    %v1312 = vpack.c.b16 %v972, %v968
    %v1313 = vpack.c.b16 %v973, %v969
    %v1314 = vpack.c.b16 %v974, %v970
    %v1315 = vpack.c.b16 %v979, %v975
    %v1316 = vpack.c.b16 %v980, %v976
    %v1317 = vpack.c.b16 %v981, %v977
    %v1318 = vpack.c.b16 %v982, %v978
    %v1319 = vpack.c.b16 %v987, %v983
    %v1320 = vpack.c.b16 %v988, %v984
    %v1321 = vpack.c.b16 %v989, %v985
    %v1322 = vpack.c.b16 %v990, %v986
    %v1323 = vpack.c.b16 %v995, %v991
    %v1324 = vpack.c.b16 %v996, %v992
    %v1325 = vpack.c.b16 %v997, %v993
    %v1326 = vpack.c.b16 %v998, %v994
    %v1327 = vpack.c.b16 %v1003, %v999
    %v1328 = vpack.c.b16 %v1004, %v1000
    %v1329 = vpack.c.b16 %v1005, %v1001
    %v1330 = vpack.c.b16 %v1006, %v1002
    %v1331 = vpack.c.b16 %v1011, %v1007
    %v1332 = vpack.c.b16 %v1012, %v1008
    %v1333 = vpack.c.b16 %v1013, %v1009
    %v1334 = vpack.c.b16 %v1014, %v1010
    %v1335 = vpack.c.b16 %v1019, %v1015
    %v1336 = vpack.c.b16 %v1020, %v1016
    %v1337 = vpack.c.b16 %v1021, %v1017
    %v1338 = vpack.c.b16 %v1022, %v1018
    %v1339 = vpack.c.b16 %v1027, %v1023
    %v1340 = vpack.c.b16 %v1028, %v1024
    %v1341 = vpack.c.b16 %v1029, %v1025
    %v1342 = vpack.c.b16 %v1030, %v1026
    %v1343 = vpack.c.b16 %v1035, %v1031
    %v1344 = vpack.c.b16 %v1036, %v1032
    %v1345 = vpack.c.b16 %v1037, %v1033
    %v1346 = vpack.c.b16 %v1038, %v1034
    %v1347 = vpack.c.b16 %v1043, %v1039
    %v1348 = vpack.c.b16 %v1044, %v1040
    %v1349 = vpack.c.b16 %v1045, %v1041
    %v1350 = vpack.c.b16 %v1046, %v1042
    %v1351 = vpack.c.b16 %v1051, %v1047
    %v1352 = vpack.c.b16 %v1052, %v1048
    %v1353 = vpack.c.b16 %v1053, %v1049
    %v1354 = vpack.c.b16 %v1054, %v1050
    %v1355 = vpack.c.b16 %v1059, %v1055
    %v1356 = vpack.c.b16 %v1060, %v1056
    %v1357 = vpack.c.b16 %v1061, %v1057
    %v1358 = vpack.c.b16 %v1062, %v1058
    %v1359 = vpack.c.b16 %v1067, %v1063
    %v1360 = vpack.c.b16 %v1068, %v1064
    %v1361 = vpack.c.b16 %v1069, %v1065
    %v1362 = vpack.c.b16 %v1070, %v1066
    %v1363 = vpack.c.b16 %v1075, %v1071
    %v1364 = vpack.c.b16 %v1076, %v1072
    %v1365 = vpack.c.b16 %v1077, %v1073
    %v1366 = vpack.c.b16 %v1078, %v1074
    %v1367 = vpack.c.b16 %v1083, %v1079
    %v1368 = vpack.c.b16 %v1084, %v1080
    %v1369 = vpack.c.b16 %v1085, %v1081
    %v1370 = vpack.c.b16 %v1086, %v1082
    %v1371 = vpack.c.b16 %v1091, %v1087
    %v1372 = vpack.c.b16 %v1092, %v1088
    %v1373 = vpack.c.b16 %v1093, %v1089
    %v1374 = vpack.c.b16 %v1094, %v1090
    %v1375 = vpack.c.b16 %v1099, %v1095
    %v1376 = vpack.c.b16 %v1100, %v1096
    %v1377 = vpack.c.b16 %v1101, %v1097
    %v1378 = vpack.c.b16 %v1102, %v1098
    %v1379 = vpack.c.b16 %v1107, %v1103
    %v1380 = vpack.c.b16 %v1108, %v1104
    %v1381 = vpack.c.b16 %v1109, %v1105
    %v1382 = vpack.c.b16 %v1110, %v1106
    %v1383 = vpack.c.b16 %v1115, %v1111
    %v1384 = vpack.c.b16 %v1116, %v1112
    %v1385 = vpack.c.b16 %v1117, %v1113
    %v1386 = vpack.c.b16 %v1118, %v1114
    %v1387 = vpack.c.b16 %v1123, %v1119
    %v1388 = vpack.c.b16 %v1124, %v1120
    %v1389 = vpack.c.b16 %v1125, %v1121
    %v1390 = vpack.c.b16 %v1126, %v1122
    %v1391 = vpack.c.b16 %v1131, %v1127
    %v1392 = vpack.c.b16 %v1132, %v1128
    %v1393 = vpack.c.b16 %v1133, %v1129
    %v1394 = vpack.c.b16 %v1134, %v1130
    %v1395 = vpack.c.b16 %v1139, %v1135
    %v1396 = vpack.c.b16 %v1140, %v1136
    %v1397 = vpack.c.b16 %v1141, %v1137
    %v1398 = vpack.c.b16 %v1142, %v1138
    %1655 = vmatprep.subr.bf16.mxu0 %v1144
    %1656 = vmatpush1.bf16.msra.mxu0 %v1143
    %1657 = vmatprep.subr.bf16.mxu0 %v1148
    %1658 = vmatpush1.bf16.msra.mxu0 %v1147
    %1659 = vmatprep.subr.bf16.mxu0 %v1152
    %1660 = vmatpush1.bf16.msra.mxu0 %v1151
    %1661 = vmatprep.subr.bf16.mxu0 %v1156
    %1662 = vmatpush1.bf16.msra.mxu0 %v1155
    %1663 = vmatprep.subr.bf16.mxu0 %v1160
    %1664 = vmatpush1.bf16.msra.mxu0 %v1159
    %1665 = vmatprep.subr.bf16.mxu0 %v1164
    %1666 = vmatpush1.bf16.msra.mxu0 %v1163
    %1667 = vmatprep.subr.bf16.mxu0 %v1168
    %1668 = vmatpush1.bf16.msra.mxu0 %v1167
    %1669 = vmatprep.subr.bf16.mxu0 %v1172
    %1670 = vmatpush1.bf16.msra.mxu0 %v1171
    %1671 = vmatprep.subr.bf16.mxu0 %v1176
    %1672 = vmatpush1.bf16.msra.mxu0 %v1175
    %1673 = vmatprep.subr.bf16.mxu0 %v1180
    %1674 = vmatpush1.bf16.msra.mxu0 %v1179
    %1675 = vmatprep.subr.bf16.mxu0 %v1184
    %1676 = vmatpush1.bf16.msra.mxu0 %v1183
    %1677 = vmatprep.subr.bf16.mxu0 %v1188
    %1678 = vmatpush1.bf16.msra.mxu0 %v1187
    %1679 = vmatprep.subr.bf16.mxu0 %v1192
    %1680 = vmatpush1.bf16.msra.mxu0 %v1191
    %1681 = vmatprep.subr.bf16.mxu0 %v1196
    %1682 = vmatpush1.bf16.msra.mxu0 %v1195
    %1683 = vmatprep.subr.bf16.mxu0 %v1200
    %1684 = vmatpush1.bf16.msra.mxu0 %v1199
    %1685 = vmatprep.subr.bf16.mxu0 %v1204
    %1686 = vmatpush1.bf16.msra.mxu0 %v1203
    %1687 = vmatprep.mubr.bf16.mxu0 %v90
    %1688 = vmatmul.mubr.bf16.gmra.mrb[0].mxu0 %v89
    %v1689 = vpop.f32.mrb[0].mxu0
    %v1690 = vadd.f32 %v358, %v1689
    %v1691 = vpop.f32.mrb[0].mxu0
    %v1692 = vadd.f32 %v362, %v1691
    %v1693 = vpop.f32.mrb[0].mxu0
    %v1694 = vpop.f32.mrb[0].mxu0
    %1695 = vdwg.mxu0
    %1696 = vmatprep.subr.bf16.mxu0 %v1208
    %1697 = vmatpush1.bf16.msra.mxu0 %v1207
    %1698 = vmatprep.subr.bf16.mxu0 %v1212
    %1699 = vmatpush1.bf16.msra.mxu0 %v1211
    %1700 = vmatprep.subr.bf16.mxu0 %v1216
    %1701 = vmatpush1.bf16.msra.mxu0 %v1215
    %1702 = vmatprep.subr.bf16.mxu0 %v1220
    %1703 = vmatpush1.bf16.msra.mxu0 %v1219
    %1704 = vmatprep.subr.bf16.mxu0 %v1224
    %1705 = vmatpush1.bf16.msra.mxu0 %v1223
    %1706 = vmatprep.subr.bf16.mxu0 %v1228
    %1707 = vmatpush1.bf16.msra.mxu0 %v1227
    %1708 = vmatprep.subr.bf16.mxu0 %v1232
    %1709 = vmatpush1.bf16.msra.mxu0 %v1231
    %1710 = vmatprep.subr.bf16.mxu0 %v1236
    %1711 = vmatpush1.bf16.msra.mxu0 %v1235
    %1712 = vmatprep.subr.bf16.mxu0 %v1240
    %1713 = vmatpush1.bf16.msra.mxu0 %v1239
    %1714 = vmatprep.subr.bf16.mxu0 %v1244
    %1715 = vmatpush1.bf16.msra.mxu0 %v1243
    %1716 = vmatprep.subr.bf16.mxu0 %v1248
    %1717 = vmatpush1.bf16.msra.mxu0 %v1247
    %1718 = vmatprep.subr.bf16.mxu0 %v1252
    %1719 = vmatpush1.bf16.msra.mxu0 %v1251
    %1720 = vmatprep.subr.bf16.mxu0 %v1256
    %1721 = vmatpush1.bf16.msra.mxu0 %v1255
    %1722 = vmatprep.subr.bf16.mxu0 %v1260
    %1723 = vmatpush1.bf16.msra.mxu0 %v1259
    %1724 = vmatprep.subr.bf16.mxu0 %v1264
    %1725 = vmatpush1.bf16.msra.mxu0 %v1263
    %1726 = vmatprep.subr.bf16.mxu0 %v1268
    %1727 = vmatpush1.bf16.msra.mxu0 %v1267
    %1728 = vmatprep.mubr.bf16.mxu0 %v92
    %1729 = vmatmul.mubr.bf16.gmra.mrb[0].mxu0 %v91
    %v1730 = vpop.f32.mrb[0].mxu0
    %v1731 = vadd.f32 %v1690, %v1730
    %v1732 = vpop.f32.mrb[0].mxu0
    %v1733 = vadd.f32 %v1692, %v1732
    %v1734 = vpop.f32.mrb[0].mxu0
    %v1735 = vpop.f32.mrb[0].mxu0
    %1736 = vdwg.mxu0
    %1737 = vmatprep.subr.bf16.mxu0 %v1272
    %1738 = vmatpush1.bf16.msra.mxu0 %v1271
    %1739 = vmatprep.subr.bf16.mxu0 %v1276
    %1740 = vmatpush1.bf16.msra.mxu0 %v1275
    %1741 = vmatprep.subr.bf16.mxu0 %v1280
    %1742 = vmatpush1.bf16.msra.mxu0 %v1279
    %1743 = vmatprep.subr.bf16.mxu0 %v1284
    %1744 = vmatpush1.bf16.msra.mxu0 %v1283
    %1745 = vmatprep.subr.bf16.mxu0 %v1288
    %1746 = vmatpush1.bf16.msra.mxu0 %v1287
    %1747 = vmatprep.subr.bf16.mxu0 %v1292
    %1748 = vmatpush1.bf16.msra.mxu0 %v1291
    %1749 = vmatprep.subr.bf16.mxu0 %v1296
    %1750 = vmatpush1.bf16.msra.mxu0 %v1295
    %1751 = vmatprep.subr.bf16.mxu0 %v1300
    %1752 = vmatpush1.bf16.msra.mxu0 %v1299
    %1753 = vmatprep.subr.bf16.mxu0 %v1304
    %1754 = vmatpush1.bf16.msra.mxu0 %v1303
    %1755 = vmatprep.subr.bf16.mxu0 %v1308
    %1756 = vmatpush1.bf16.msra.mxu0 %v1307
    %1757 = vmatprep.subr.bf16.mxu0 %v1312
    %1758 = vmatpush1.bf16.msra.mxu0 %v1311
    %1759 = vmatprep.subr.bf16.mxu0 %v1316
    %1760 = vmatpush1.bf16.msra.mxu0 %v1315
    %1761 = vmatprep.subr.bf16.mxu0 %v1320
    %1762 = vmatpush1.bf16.msra.mxu0 %v1319
    %1763 = vmatprep.subr.bf16.mxu0 %v1324
    %1764 = vmatpush1.bf16.msra.mxu0 %v1323
    %1765 = vmatprep.subr.bf16.mxu0 %v1328
    %1766 = vmatpush1.bf16.msra.mxu0 %v1327
    %1767 = vmatprep.subr.bf16.mxu0 %v1332
    %1768 = vmatpush1.bf16.msra.mxu0 %v1331
    %1769 = vmatprep.mubr.bf16.mxu0 %v94
    %1770 = vmatmul.mubr.bf16.gmra.mrb[0].mxu0 %v93
    %v1771 = vpop.f32.mrb[0].mxu0
    %v1772 = vadd.f32 %v1731, %v1771
    %v1773 = vpop.f32.mrb[0].mxu0
    %v1774 = vadd.f32 %v1733, %v1773
    %v1775 = vpop.f32.mrb[0].mxu0
    %v1776 = vpop.f32.mrb[0].mxu0
    %1777 = vdwg.mxu0
    %1778 = vmatprep.subr.bf16.mxu0 %v1336
    %1779 = vmatpush1.bf16.msra.mxu0 %v1335
    %1780 = vmatprep.subr.bf16.mxu0 %v1340
    %1781 = vmatpush1.bf16.msra.mxu0 %v1339
    %1782 = vmatprep.subr.bf16.mxu0 %v1344
    %1783 = vmatpush1.bf16.msra.mxu0 %v1343
    %1784 = vmatprep.subr.bf16.mxu0 %v1348
    %1785 = vmatpush1.bf16.msra.mxu0 %v1347
    %1786 = vmatprep.subr.bf16.mxu0 %v1352
    %1787 = vmatpush1.bf16.msra.mxu0 %v1351
    %1788 = vmatprep.subr.bf16.mxu0 %v1356
    %1789 = vmatpush1.bf16.msra.mxu0 %v1355
    %1790 = vmatprep.subr.bf16.mxu0 %v1360
    %1791 = vmatpush1.bf16.msra.mxu0 %v1359
    %1792 = vmatprep.subr.bf16.mxu0 %v1364
    %1793 = vmatpush1.bf16.msra.mxu0 %v1363
    %1794 = vmatprep.subr.bf16.mxu0 %v1368
    %1795 = vmatpush1.bf16.msra.mxu0 %v1367
    %1796 = vmatprep.subr.bf16.mxu0 %v1372
    %1797 = vmatpush1.bf16.msra.mxu0 %v1371
    %1798 = vmatprep.subr.bf16.mxu0 %v1376
    %1799 = vmatpush1.bf16.msra.mxu0 %v1375
    %1800 = vmatprep.subr.bf16.mxu0 %v1380
    %1801 = vmatpush1.bf16.msra.mxu0 %v1379
    %1802 = vmatprep.subr.bf16.mxu0 %v1384
    %1803 = vmatpush1.bf16.msra.mxu0 %v1383
    %1804 = vmatprep.subr.bf16.mxu0 %v1388
    %1805 = vmatpush1.bf16.msra.mxu0 %v1387
    %1806 = vmatprep.subr.bf16.mxu0 %v1392
    %1807 = vmatpush1.bf16.msra.mxu0 %v1391
    %1808 = vmatprep.subr.bf16.mxu0 %v1396
    %1809 = vmatpush1.bf16.msra.mxu0 %v1395
    %1810 = vmatprep.mubr.bf16.mxu0 %v96
    %1811 = vmatmul.mubr.bf16.gmra.mrb[0].mxu0 %v95
    %v1812 = vpop.f32.mrb[0].mxu0
    %v1813 = vadd.f32 %v1772, %v1812
    %v1814 = vpop.f32.mrb[0].mxu0
    %v1815 = vadd.f32 %v1774, %v1814
    %v1816 = vpop.f32.mrb[0].mxu0
    %v1817 = vpop.f32.mrb[0].mxu0
    %1818 = vdwg.mxu0
    %1819 = vmatprep.subr.bf16.mxu0 %v1146
    %1820 = vmatpush1.bf16.msra.mxu0 %v1145
    %1821 = vmatprep.subr.bf16.mxu0 %v1150
    %1822 = vmatpush1.bf16.msra.mxu0 %v1149
    %1823 = vmatprep.subr.bf16.mxu0 %v1154
    %1824 = vmatpush1.bf16.msra.mxu0 %v1153
    %1825 = vmatprep.subr.bf16.mxu0 %v1158
    %1826 = vmatpush1.bf16.msra.mxu0 %v1157
    %1827 = vmatprep.subr.bf16.mxu0 %v1162
    %1828 = vmatpush1.bf16.msra.mxu0 %v1161
    %1829 = vmatprep.subr.bf16.mxu0 %v1166
    %1830 = vmatpush1.bf16.msra.mxu0 %v1165
    %1831 = vmatprep.subr.bf16.mxu0 %v1170
    %1832 = vmatpush1.bf16.msra.mxu0 %v1169
    %1833 = vmatprep.subr.bf16.mxu0 %v1174
    %1834 = vmatpush1.bf16.msra.mxu0 %v1173
    %1835 = vmatprep.subr.bf16.mxu0 %v1178
    %1836 = vmatpush1.bf16.msra.mxu0 %v1177
    %1837 = vmatprep.subr.bf16.mxu0 %v1182
    %1838 = vmatpush1.bf16.msra.mxu0 %v1181
    %1839 = vmatprep.subr.bf16.mxu0 %v1186
    %1840 = vmatpush1.bf16.msra.mxu0 %v1185
    %1841 = vmatprep.subr.bf16.mxu0 %v1190
    %1842 = vmatpush1.bf16.msra.mxu0 %v1189
    %1843 = vmatprep.subr.bf16.mxu0 %v1194
    %1844 = vmatpush1.bf16.msra.mxu0 %v1193
    %1845 = vmatprep.subr.bf16.mxu0 %v1198
    %1846 = vmatpush1.bf16.msra.mxu0 %v1197
    %1847 = vmatprep.subr.bf16.mxu0 %v1202
    %1848 = vmatpush1.bf16.msra.mxu0 %v1201
    %1849 = vmatprep.subr.bf16.mxu0 %v1206
    %1850 = vmatpush1.bf16.msra.mxu0 %v1205
    %1851 = vmatprep.mubr.bf16.mxu0 %v90
    %1852 = vmatmul.mubr.bf16.gmra.mrb[0].mxu0 %v89
    %v1853 = vpop.f32.mrb[0].mxu0
    %v1854 = vadd.f32 %v366, %v1853
    %v1855 = vpop.f32.mrb[0].mxu0
    %v1856 = vadd.f32 %v370, %v1855
    %v1857 = vpop.f32.mrb[0].mxu0
    %v1858 = vpop.f32.mrb[0].mxu0
    %1859 = vdwg.mxu0
    %1860 = vmatprep.subr.bf16.mxu0 %v1210
    %1861 = vmatpush1.bf16.msra.mxu0 %v1209
    %1862 = vmatprep.subr.bf16.mxu0 %v1214
    %1863 = vmatpush1.bf16.msra.mxu0 %v1213
    %1864 = vmatprep.subr.bf16.mxu0 %v1218
    %1865 = vmatpush1.bf16.msra.mxu0 %v1217
    %1866 = vmatprep.subr.bf16.mxu0 %v1222
    %1867 = vmatpush1.bf16.msra.mxu0 %v1221
    %1868 = vmatprep.subr.bf16.mxu0 %v1226
    %1869 = vmatpush1.bf16.msra.mxu0 %v1225
    %1870 = vmatprep.subr.bf16.mxu0 %v1230
    %1871 = vmatpush1.bf16.msra.mxu0 %v1229
    %1872 = vmatprep.subr.bf16.mxu0 %v1234
    %1873 = vmatpush1.bf16.msra.mxu0 %v1233
    %1874 = vmatprep.subr.bf16.mxu0 %v1238
    %1875 = vmatpush1.bf16.msra.mxu0 %v1237
    %1876 = vmatprep.subr.bf16.mxu0 %v1242
    %1877 = vmatpush1.bf16.msra.mxu0 %v1241
    %1878 = vmatprep.subr.bf16.mxu0 %v1246
    %1879 = vmatpush1.bf16.msra.mxu0 %v1245
    %1880 = vmatprep.subr.bf16.mxu0 %v1250
    %1881 = vmatpush1.bf16.msra.mxu0 %v1249
    %1882 = vmatprep.subr.bf16.mxu0 %v1254
    %1883 = vmatpush1.bf16.msra.mxu0 %v1253
    %1884 = vmatprep.subr.bf16.mxu0 %v1258
    %1885 = vmatpush1.bf16.msra.mxu0 %v1257
    %1886 = vmatprep.subr.bf16.mxu0 %v1262
    %1887 = vmatpush1.bf16.msra.mxu0 %v1261
    %1888 = vmatprep.subr.bf16.mxu0 %v1266
    %1889 = vmatpush1.bf16.msra.mxu0 %v1265
    %1890 = vmatprep.subr.bf16.mxu0 %v1270
    %1891 = vmatpush1.bf16.msra.mxu0 %v1269
    %1892 = vmatprep.mubr.bf16.mxu0 %v92
    %1893 = vmatmul.mubr.bf16.gmra.mrb[0].mxu0 %v91
    %v1894 = vpop.f32.mrb[0].mxu0
    %v1895 = vadd.f32 %v1854, %v1894
    %v1896 = vpop.f32.mrb[0].mxu0
    %v1897 = vadd.f32 %v1856, %v1896
    %v1898 = vpop.f32.mrb[0].mxu0
    %v1899 = vpop.f32.mrb[0].mxu0
    %1900 = vdwg.mxu0
    %1901 = vmatprep.subr.bf16.mxu0 %v1274
    %1902 = vmatpush1.bf16.msra.mxu0 %v1273
    %1903 = vmatprep.subr.bf16.mxu0 %v1278
    %1904 = vmatpush1.bf16.msra.mxu0 %v1277
    %1905 = vmatprep.subr.bf16.mxu0 %v1282
    %1906 = vmatpush1.bf16.msra.mxu0 %v1281
    %1907 = vmatprep.subr.bf16.mxu0 %v1286
    %1908 = vmatpush1.bf16.msra.mxu0 %v1285
    %1909 = vmatprep.subr.bf16.mxu0 %v1290
    %1910 = vmatpush1.bf16.msra.mxu0 %v1289
    %1911 = vmatprep.subr.bf16.mxu0 %v1294
    %1912 = vmatpush1.bf16.msra.mxu0 %v1293
    %1913 = vmatprep.subr.bf16.mxu0 %v1298
    %1914 = vmatpush1.bf16.msra.mxu0 %v1297
    %1915 = vmatprep.subr.bf16.mxu0 %v1302
    %1916 = vmatpush1.bf16.msra.mxu0 %v1301
    %1917 = vmatprep.subr.bf16.mxu0 %v1306
    %1918 = vmatpush1.bf16.msra.mxu0 %v1305
    %1919 = vmatprep.subr.bf16.mxu0 %v1310
    %1920 = vmatpush1.bf16.msra.mxu0 %v1309
    %1921 = vmatprep.subr.bf16.mxu0 %v1314
    %1922 = vmatpush1.bf16.msra.mxu0 %v1313
    %1923 = vmatprep.subr.bf16.mxu0 %v1318
    %1924 = vmatpush1.bf16.msra.mxu0 %v1317
    %1925 = vmatprep.subr.bf16.mxu0 %v1322
    %1926 = vmatpush1.bf16.msra.mxu0 %v1321
    %1927 = vmatprep.subr.bf16.mxu0 %v1326
    %1928 = vmatpush1.bf16.msra.mxu0 %v1325
    %1929 = vmatprep.subr.bf16.mxu0 %v1330
    %1930 = vmatpush1.bf16.msra.mxu0 %v1329
    %1931 = vmatprep.subr.bf16.mxu0 %v1334
    %1932 = vmatpush1.bf16.msra.mxu0 %v1333
    %1933 = vmatprep.mubr.bf16.mxu0 %v94
    %1934 = vmatmul.mubr.bf16.gmra.mrb[0].mxu0 %v93
    %v1935 = vpop.f32.mrb[0].mxu0
    %v1936 = vadd.f32 %v1895, %v1935
    %v1937 = vpop.f32.mrb[0].mxu0
    %v1938 = vadd.f32 %v1897, %v1937
    %v1939 = vpop.f32.mrb[0].mxu0
    %v1940 = vpop.f32.mrb[0].mxu0
    %1941 = vdwg.mxu0
    %1942 = vmatprep.subr.bf16.mxu0 %v1338
    %1943 = vmatpush1.bf16.msra.mxu0 %v1337
    %1944 = vmatprep.subr.bf16.mxu0 %v1342
    %1945 = vmatpush1.bf16.msra.mxu0 %v1341
    %1946 = vmatprep.subr.bf16.mxu0 %v1346
    %1947 = vmatpush1.bf16.msra.mxu0 %v1345
    %1948 = vmatprep.subr.bf16.mxu0 %v1350
    %1949 = vmatpush1.bf16.msra.mxu0 %v1349
    %1950 = vmatprep.subr.bf16.mxu0 %v1354
    %1951 = vmatpush1.bf16.msra.mxu0 %v1353
    %1952 = vmatprep.subr.bf16.mxu0 %v1358
    %1953 = vmatpush1.bf16.msra.mxu0 %v1357
    %1954 = vmatprep.subr.bf16.mxu0 %v1362
    %1955 = vmatpush1.bf16.msra.mxu0 %v1361
    %1956 = vmatprep.subr.bf16.mxu0 %v1366
    %1957 = vmatpush1.bf16.msra.mxu0 %v1365
    %1958 = vmatprep.subr.bf16.mxu0 %v1370
    %1959 = vmatpush1.bf16.msra.mxu0 %v1369
    %1960 = vmatprep.subr.bf16.mxu0 %v1374
    %1961 = vmatpush1.bf16.msra.mxu0 %v1373
    %1962 = vmatprep.subr.bf16.mxu0 %v1378
    %1963 = vmatpush1.bf16.msra.mxu0 %v1377
    %1964 = vmatprep.subr.bf16.mxu0 %v1382
    %1965 = vmatpush1.bf16.msra.mxu0 %v1381
    %1966 = vmatprep.subr.bf16.mxu0 %v1386
    %1967 = vmatpush1.bf16.msra.mxu0 %v1385
    %1968 = vmatprep.subr.bf16.mxu0 %v1390
    %1969 = vmatpush1.bf16.msra.mxu0 %v1389
    %1970 = vmatprep.subr.bf16.mxu0 %v1394
    %1971 = vmatpush1.bf16.msra.mxu0 %v1393
    %1972 = vmatprep.subr.bf16.mxu0 %v1398
    %1973 = vmatpush1.bf16.msra.mxu0 %v1397
    %1974 = vmatprep.mubr.bf16.mxu0 %v96
    %1975 = vmatmul.mubr.bf16.gmra.mrb[0].mxu0 %v95
    %v1976 = vpop.f32.mrb[0].mxu0
    %v1977 = vadd.f32 %v1936, %v1976
    %v1978 = vpop.f32.mrb[0].mxu0
    %v1979 = vadd.f32 %v1938, %v1978
    %v1980 = vpop.f32.mrb[0].mxu0
    %v1981 = vpop.f32.mrb[0].mxu0
    %1982 = vdwg.mxu0
    %v1983 = vmax.f32 %v1813, 0.0
    %v1984 = vmax.f32 %v1815, 0.0
    %v1985 = vmax.f32 %v1977, 0.0
    %v1986 = vmax.f32 %v1979, 0.0
    %v1987 = vpack.c.bf16 %v1983, %v1983
    %v1988 = vpack.c.bf16 %v1984, %v1984
    %v1989 = vpack.c.bf16 %v1985, %v1985
    %v1990 = vpack.c.bf16 %v1986, %v1986
    %v1991 = vld [vmem:[#allocation7] sm:$0xff]
    %v1992 = vld [vmem:[#allocation7 + $0x8] sm:$0xff]
    %v1993 = vld [vmem:[#allocation7 + $0x10] sm:$0xff]
    %v1994 = vld [vmem:[#allocation7 + $0x18] sm:$0xff]
    %v1995 = vld [vmem:[#allocation7 + $0x20] sm:$0xff]
    %v1996 = vld [vmem:[#allocation7 + $0x28] sm:$0xff]
    %v1997 = vld [vmem:[#allocation7 + $0x30] sm:$0xff]
    %v1998 = vld [vmem:[#allocation7 + $0x38] sm:$0xff]
    %v1999 = vld [vmem:[#allocation7 + $0x40] sm:$0xff]
    %v2000 = vld [vmem:[#allocation7 + $0x48] sm:$0xff]
    %v2001 = vld [vmem:[#allocation7 + $0x50] sm:$0xff]
    %v2002 = vld [vmem:[#allocation7 + $0x58] sm:$0xff]
    %v2003 = vld [vmem:[#allocation7 + $0x60] sm:$0xff]
    %v2004 = vld [vmem:[#allocation7 + $0x68] sm:$0xff]
    %v2005 = vld [vmem:[#allocation7 + $0x70] sm:$0xff]
    %v2006 = vld [vmem:[#allocation7 + $0x78] sm:$0xff]
    %v2007 = vld [vmem:[#allocation7 + $0x80] sm:$0xff]
    %v2008 = vld [vmem:[#allocation7 + $0x88] sm:$0xff]
    %v2009 = vld [vmem:[#allocation7 + $0x90] sm:$0xff]
    %v2010 = vld [vmem:[#allocation7 + $0x98] sm:$0xff]
    %v2011 = vld [vmem:[#allocation7 + $0xa0] sm:$0xff]
    %v2012 = vld [vmem:[#allocation7 + $0xa8] sm:$0xff]
    %v2013 = vld [vmem:[#allocation7 + $0xb0] sm:$0xff]
    %v2014 = vld [vmem:[#allocation7 + $0xb8] sm:$0xff]
    %v2015 = vld [vmem:[#allocation7 + $0xc0] sm:$0xff]
    %v2016 = vld [vmem:[#allocation7 + $0xc8] sm:$0xff]
    %v2017 = vld [vmem:[#allocation7 + $0xd0] sm:$0xff]
    %v2018 = vld [vmem:[#allocation7 + $0xd8] sm:$0xff]
    %v2019 = vld [vmem:[#allocation7 + $0xe0] sm:$0xff]
    %v2020 = vld [vmem:[#allocation7 + $0xe8] sm:$0xff]
    %v2021 = vld [vmem:[#allocation7 + $0xf0] sm:$0xff]
    %v2022 = vld [vmem:[#allocation7 + $0xf8] sm:$0xff]
    %v2023 = vld [vmem:[#allocation7 + $0x100] sm:$0xff]
    %v2024 = vld [vmem:[#allocation7 + $0x108] sm:$0xff]
    %v2025 = vld [vmem:[#allocation7 + $0x110] sm:$0xff]
    %v2026 = vld [vmem:[#allocation7 + $0x118] sm:$0xff]
    %v2027 = vld [vmem:[#allocation7 + $0x120] sm:$0xff]
    %v2028 = vld [vmem:[#allocation7 + $0x128] sm:$0xff]
    %v2029 = vld [vmem:[#allocation7 + $0x130] sm:$0xff]
    %v2030 = vld [vmem:[#allocation7 + $0x138] sm:$0xff]
    %v2031 = vld [vmem:[#allocation7 + $0x140] sm:$0xff]
    %v2032 = vld [vmem:[#allocation7 + $0x148] sm:$0xff]
    %v2033 = vld [vmem:[#allocation7 + $0x150] sm:$0xff]
    %v2034 = vld [vmem:[#allocation7 + $0x158] sm:$0xff]
    %v2035 = vld [vmem:[#allocation7 + $0x160] sm:$0xff]
    %v2036 = vld [vmem:[#allocation7 + $0x168] sm:$0xff]
    %v2037 = vld [vmem:[#allocation7 + $0x170] sm:$0xff]
    %v2038 = vld [vmem:[#allocation7 + $0x178] sm:$0xff]
    %v2039 = vld [vmem:[#allocation7 + $0x180] sm:$0xff]
    %v2040 = vld [vmem:[#allocation7 + $0x188] sm:$0xff]
    %v2041 = vld [vmem:[#allocation7 + $0x190] sm:$0xff]
    %v2042 = vld [vmem:[#allocation7 + $0x198] sm:$0xff]
    %v2043 = vld [vmem:[#allocation7 + $0x1a0] sm:$0xff]
    %v2044 = vld [vmem:[#allocation7 + $0x1a8] sm:$0xff]
    %v2045 = vld [vmem:[#allocation7 + $0x1b0] sm:$0xff]
    %v2046 = vld [vmem:[#allocation7 + $0x1b8] sm:$0xff]
    %v2047 = vld [vmem:[#allocation7 + $0x1c0] sm:$0xff]
    %v2048 = vld [vmem:[#allocation7 + $0x1c8] sm:$0xff]
    %v2049 = vld [vmem:[#allocation7 + $0x1d0] sm:$0xff]
    %v2050 = vld [vmem:[#allocation7 + $0x1d8] sm:$0xff]
    %v2051 = vld [vmem:[#allocation7 + $0x1e0] sm:$0xff]
    %v2052 = vld [vmem:[#allocation7 + $0x1e8] sm:$0xff]
    %v2053 = vld [vmem:[#allocation7 + $0x1f0] sm:$0xff]
    %v2054 = vld [vmem:[#allocation7 + $0x1f8] sm:$0xff]
    %v2055 = vld [vmem:[%s4] sm:$0x3]
    %v2057 = vlaneseq
    %v2058 = vshrl.u32 %v2057, 7
    %v2059 = vsub.s32 0, %v2058
    %v2060 = vrot.slane %v2055, %v2059
    %v2061 = vlaneseq
    %v2062 = vshrl.u32 %v2061, 7
    %v2063 = vsub.s32 1, %v2062
    %v2064 = vrot.slane %v2055, %v2063
    %v2131 = vunpack.c.l.b16 %v1991
    %v2132 = vunpack.c.h.b16 %v1991
    %v2133 = vunpack.c.l.b16 %v1992
    %v2134 = vunpack.c.h.b16 %v1992
    %v2135 = vunpack.c.l.b16 %v1993
    %v2136 = vunpack.c.h.b16 %v1993
    %v2137 = vunpack.c.l.b16 %v1994
    %v2138 = vunpack.c.h.b16 %v1994
    %v2139 = vunpack.c.l.b16 %v1995
    %v2140 = vunpack.c.h.b16 %v1995
    %v2141 = vunpack.c.l.b16 %v1996
    %v2142 = vunpack.c.h.b16 %v1996
    %v2143 = vunpack.c.l.b16 %v1997
    %v2144 = vunpack.c.h.b16 %v1997
    %v2145 = vunpack.c.l.b16 %v1998
    %v2146 = vunpack.c.h.b16 %v1998
    %v2147 = vunpack.c.l.b16 %v1999
    %v2148 = vunpack.c.h.b16 %v1999
    %v2149 = vunpack.c.l.b16 %v2000
    %v2150 = vunpack.c.h.b16 %v2000
    %v2151 = vunpack.c.l.b16 %v2001
    %v2152 = vunpack.c.h.b16 %v2001
    %v2153 = vunpack.c.l.b16 %v2002
    %v2154 = vunpack.c.h.b16 %v2002
    %v2155 = vunpack.c.l.b16 %v2003
    %v2156 = vunpack.c.h.b16 %v2003
    %v2157 = vunpack.c.l.b16 %v2004
    %v2158 = vunpack.c.h.b16 %v2004
    %v2159 = vunpack.c.l.b16 %v2005
    %v2160 = vunpack.c.h.b16 %v2005
    %v2161 = vunpack.c.l.b16 %v2006
    %v2162 = vunpack.c.h.b16 %v2006
    %v2163 = vunpack.c.l.b16 %v2007
    %v2164 = vunpack.c.h.b16 %v2007
    %v2165 = vunpack.c.l.b16 %v2008
    %v2166 = vunpack.c.h.b16 %v2008
    %v2167 = vunpack.c.l.b16 %v2009
    %v2168 = vunpack.c.h.b16 %v2009
    %v2169 = vunpack.c.l.b16 %v2010
    %v2170 = vunpack.c.h.b16 %v2010
    %v2171 = vunpack.c.l.b16 %v2011
    %v2172 = vunpack.c.h.b16 %v2011
    %v2173 = vunpack.c.l.b16 %v2012
    %v2174 = vunpack.c.h.b16 %v2012
    %v2175 = vunpack.c.l.b16 %v2013
    %v2176 = vunpack.c.h.b16 %v2013
    %v2177 = vunpack.c.l.b16 %v2014
    %v2178 = vunpack.c.h.b16 %v2014
    %v2179 = vunpack.c.l.b16 %v2015
    %v2180 = vunpack.c.h.b16 %v2015
    %v2181 = vunpack.c.l.b16 %v2016
    %v2182 = vunpack.c.h.b16 %v2016
    %v2183 = vunpack.c.l.b16 %v2017
    %v2184 = vunpack.c.h.b16 %v2017
    %v2185 = vunpack.c.l.b16 %v2018
    %v2186 = vunpack.c.h.b16 %v2018
    %v2187 = vunpack.c.l.b16 %v2019
    %v2188 = vunpack.c.h.b16 %v2019
    %v2189 = vunpack.c.l.b16 %v2020
    %v2190 = vunpack.c.h.b16 %v2020
    %v2191 = vunpack.c.l.b16 %v2021
    %v2192 = vunpack.c.h.b16 %v2021
    %v2193 = vunpack.c.l.b16 %v2022
    %v2194 = vunpack.c.h.b16 %v2022
    %v2195 = vunpack.c.l.b16 %v2023
    %v2196 = vunpack.c.h.b16 %v2023
    %v2197 = vunpack.c.l.b16 %v2024
    %v2198 = vunpack.c.h.b16 %v2024
    %v2199 = vunpack.c.l.b16 %v2025
    %v2200 = vunpack.c.h.b16 %v2025
    %v2201 = vunpack.c.l.b16 %v2026
    %v2202 = vunpack.c.h.b16 %v2026
    %v2203 = vunpack.c.l.b16 %v2027
    %v2204 = vunpack.c.h.b16 %v2027
    %v2205 = vunpack.c.l.b16 %v2028
    %v2206 = vunpack.c.h.b16 %v2028
    %v2207 = vunpack.c.l.b16 %v2029
    %v2208 = vunpack.c.h.b16 %v2029
    %v2209 = vunpack.c.l.b16 %v2030
    %v2210 = vunpack.c.h.b16 %v2030
    %v2211 = vunpack.c.l.b16 %v2031
    %v2212 = vunpack.c.h.b16 %v2031
    %v2213 = vunpack.c.l.b16 %v2032
    %v2214 = vunpack.c.h.b16 %v2032
    %v2215 = vunpack.c.l.b16 %v2033
    %v2216 = vunpack.c.h.b16 %v2033
    %v2217 = vunpack.c.l.b16 %v2034
    %v2218 = vunpack.c.h.b16 %v2034
    %v2219 = vunpack.c.l.b16 %v2035
    %v2220 = vunpack.c.h.b16 %v2035
    %v2221 = vunpack.c.l.b16 %v2036
    %v2222 = vunpack.c.h.b16 %v2036
    %v2223 = vunpack.c.l.b16 %v2037
    %v2224 = vunpack.c.h.b16 %v2037
    %v2225 = vunpack.c.l.b16 %v2038
    %v2226 = vunpack.c.h.b16 %v2038
    %v2227 = vunpack.c.l.b16 %v2039
    %v2228 = vunpack.c.h.b16 %v2039
    %v2229 = vunpack.c.l.b16 %v2040
    %v2230 = vunpack.c.h.b16 %v2040
    %v2231 = vunpack.c.l.b16 %v2041
    %v2232 = vunpack.c.h.b16 %v2041
    %v2233 = vunpack.c.l.b16 %v2042
    %v2234 = vunpack.c.h.b16 %v2042
    %v2235 = vunpack.c.l.b16 %v2043
    %v2236 = vunpack.c.h.b16 %v2043
    %v2237 = vunpack.c.l.b16 %v2044
    %v2238 = vunpack.c.h.b16 %v2044
    %v2239 = vunpack.c.l.b16 %v2045
    %v2240 = vunpack.c.h.b16 %v2045
    %v2241 = vunpack.c.l.b16 %v2046
    %v2242 = vunpack.c.h.b16 %v2046
    %v2243 = vunpack.c.l.b16 %v2047
    %v2244 = vunpack.c.h.b16 %v2047
    %v2245 = vunpack.c.l.b16 %v2048
    %v2246 = vunpack.c.h.b16 %v2048
    %v2247 = vunpack.c.l.b16 %v2049
    %v2248 = vunpack.c.h.b16 %v2049
    %v2249 = vunpack.c.l.b16 %v2050
    %v2250 = vunpack.c.h.b16 %v2050
    %v2251 = vunpack.c.l.b16 %v2051
    %v2252 = vunpack.c.h.b16 %v2051
    %v2253 = vunpack.c.l.b16 %v2052
    %v2254 = vunpack.c.h.b16 %v2052
    %v2255 = vunpack.c.l.b16 %v2053
    %v2256 = vunpack.c.h.b16 %v2053
    %v2257 = vunpack.c.l.b16 %v2054
    %v2258 = vunpack.c.h.b16 %v2054
    %v2259 = vpack.c.b16 %v2133, %v2131
    %v2260 = vpack.c.b16 %v2134, %v2132
    %v2261 = vpack.c.b16 %v2137, %v2135
    %v2262 = vpack.c.b16 %v2138, %v2136
    %v2263 = vpack.c.b16 %v2141, %v2139
    %v2264 = vpack.c.b16 %v2142, %v2140
    %v2265 = vpack.c.b16 %v2145, %v2143
    %v2266 = vpack.c.b16 %v2146, %v2144
    %v2267 = vpack.c.b16 %v2149, %v2147
    %v2268 = vpack.c.b16 %v2150, %v2148
    %v2269 = vpack.c.b16 %v2153, %v2151
    %v2270 = vpack.c.b16 %v2154, %v2152
    %v2271 = vpack.c.b16 %v2157, %v2155
    %v2272 = vpack.c.b16 %v2158, %v2156
    %v2273 = vpack.c.b16 %v2161, %v2159
    %v2274 = vpack.c.b16 %v2162, %v2160
    %v2275 = vpack.c.b16 %v2165, %v2163
    %v2276 = vpack.c.b16 %v2166, %v2164
    %v2277 = vpack.c.b16 %v2169, %v2167
    %v2278 = vpack.c.b16 %v2170, %v2168
    %v2279 = vpack.c.b16 %v2173, %v2171
    %v2280 = vpack.c.b16 %v2174, %v2172
    %v2281 = vpack.c.b16 %v2177, %v2175
    %v2282 = vpack.c.b16 %v2178, %v2176
    %v2283 = vpack.c.b16 %v2181, %v2179
    %v2284 = vpack.c.b16 %v2182, %v2180
    %v2285 = vpack.c.b16 %v2185, %v2183
    %v2286 = vpack.c.b16 %v2186, %v2184
    %v2287 = vpack.c.b16 %v2189, %v2187
    %v2288 = vpack.c.b16 %v2190, %v2188
    %v2289 = vpack.c.b16 %v2193, %v2191
    %v2290 = vpack.c.b16 %v2194, %v2192
    %v2291 = vpack.c.b16 %v2197, %v2195
    %v2292 = vpack.c.b16 %v2198, %v2196
    %v2293 = vpack.c.b16 %v2201, %v2199
    %v2294 = vpack.c.b16 %v2202, %v2200
    %v2295 = vpack.c.b16 %v2205, %v2203
    %v2296 = vpack.c.b16 %v2206, %v2204
    %v2297 = vpack.c.b16 %v2209, %v2207
    %v2298 = vpack.c.b16 %v2210, %v2208
    %v2299 = vpack.c.b16 %v2213, %v2211
    %v2300 = vpack.c.b16 %v2214, %v2212
    %v2301 = vpack.c.b16 %v2217, %v2215
    %v2302 = vpack.c.b16 %v2218, %v2216
    %v2303 = vpack.c.b16 %v2221, %v2219
    %v2304 = vpack.c.b16 %v2222, %v2220
    %v2305 = vpack.c.b16 %v2225, %v2223
    %v2306 = vpack.c.b16 %v2226, %v2224
    %v2307 = vpack.c.b16 %v2229, %v2227
    %v2308 = vpack.c.b16 %v2230, %v2228
    %v2309 = vpack.c.b16 %v2233, %v2231
    %v2310 = vpack.c.b16 %v2234, %v2232
    %v2311 = vpack.c.b16 %v2237, %v2235
    %v2312 = vpack.c.b16 %v2238, %v2236
    %v2313 = vpack.c.b16 %v2241, %v2239
    %v2314 = vpack.c.b16 %v2242, %v2240
    %v2315 = vpack.c.b16 %v2245, %v2243
    %v2316 = vpack.c.b16 %v2246, %v2244
    %v2317 = vpack.c.b16 %v2249, %v2247
    %v2318 = vpack.c.b16 %v2250, %v2248
    %v2319 = vpack.c.b16 %v2253, %v2251
    %v2320 = vpack.c.b16 %v2254, %v2252
    %v2321 = vpack.c.b16 %v2257, %v2255
    %v2322 = vpack.c.b16 %v2258, %v2256
    %2387 = vmatprep.subr.bf16.mxu0 %v2260
    %2388 = vmatpush1.bf16.msra.mxu0 %v2259
    %2389 = vmatprep.subr.bf16.mxu0 %v2262
    %2390 = vmatpush1.bf16.msra.mxu0 %v2261
    %2391 = vmatprep.subr.bf16.mxu0 %v2264
    %2392 = vmatpush1.bf16.msra.mxu0 %v2263
    %2393 = vmatprep.subr.bf16.mxu0 %v2266
    %2394 = vmatpush1.bf16.msra.mxu0 %v2265
    %2395 = vmatprep.subr.bf16.mxu0 %v2268
    %2396 = vmatpush1.bf16.msra.mxu0 %v2267
    %2397 = vmatprep.subr.bf16.mxu0 %v2270
    %2398 = vmatpush1.bf16.msra.mxu0 %v2269
    %2399 = vmatprep.subr.bf16.mxu0 %v2272
    %2400 = vmatpush1.bf16.msra.mxu0 %v2271
    %2401 = vmatprep.subr.bf16.mxu0 %v2274
    %2402 = vmatpush1.bf16.msra.mxu0 %v2273
    %2403 = vmatprep.subr.bf16.mxu0 %v2276
    %2404 = vmatpush1.bf16.msra.mxu0 %v2275
    %2405 = vmatprep.subr.bf16.mxu0 %v2278
    %2406 = vmatpush1.bf16.msra.mxu0 %v2277
    %2407 = vmatprep.subr.bf16.mxu0 %v2280
    %2408 = vmatpush1.bf16.msra.mxu0 %v2279
    %2409 = vmatprep.subr.bf16.mxu0 %v2282
    %2410 = vmatpush1.bf16.msra.mxu0 %v2281
    %2411 = vmatprep.subr.bf16.mxu0 %v2284
    %2412 = vmatpush1.bf16.msra.mxu0 %v2283
    %2413 = vmatprep.subr.bf16.mxu0 %v2286
    %2414 = vmatpush1.bf16.msra.mxu0 %v2285
    %2415 = vmatprep.subr.bf16.mxu0 %v2288
    %2416 = vmatpush1.bf16.msra.mxu0 %v2287
    %2417 = vmatprep.subr.bf16.mxu0 %v2290
    %2418 = vmatpush1.bf16.msra.mxu0 %v2289
    %2419 = vmatprep.mubr.bf16.mxu0 %v1988
    %2420 = vmatmul.mubr.bf16.gmra.mrb[0].mxu0 %v1987
    %v2421 = vpop.f32.mrb[0].mxu0
    %v2422 = vadd.f32 %v2060, %v2421
    %v2423 = vpop.f32.mrb[0].mxu0
    %v2424 = vadd.f32 %v2064, %v2423
    %v2425 = vpop.f32.mrb[0].mxu0
    %v2426 = vpop.f32.mrb[0].mxu0
    %2427 = vdwg.mxu0
    %2428 = vmatprep.subr.bf16.mxu0 %v2292
    %2429 = vmatpush1.bf16.msra.mxu0 %v2291
    %2430 = vmatprep.subr.bf16.mxu0 %v2294
    %2431 = vmatpush1.bf16.msra.mxu0 %v2293
    %2432 = vmatprep.subr.bf16.mxu0 %v2296
    %2433 = vmatpush1.bf16.msra.mxu0 %v2295
    %2434 = vmatprep.subr.bf16.mxu0 %v2298
    %2435 = vmatpush1.bf16.msra.mxu0 %v2297
    %2436 = vmatprep.subr.bf16.mxu0 %v2300
    %2437 = vmatpush1.bf16.msra.mxu0 %v2299
    %2438 = vmatprep.subr.bf16.mxu0 %v2302
    %2439 = vmatpush1.bf16.msra.mxu0 %v2301
    %2440 = vmatprep.subr.bf16.mxu0 %v2304
    %2441 = vmatpush1.bf16.msra.mxu0 %v2303
    %2442 = vmatprep.subr.bf16.mxu0 %v2306
    %2443 = vmatpush1.bf16.msra.mxu0 %v2305
    %2444 = vmatprep.subr.bf16.mxu0 %v2308
    %2445 = vmatpush1.bf16.msra.mxu0 %v2307
    %2446 = vmatprep.subr.bf16.mxu0 %v2310
    %2447 = vmatpush1.bf16.msra.mxu0 %v2309
    %2448 = vmatprep.subr.bf16.mxu0 %v2312
    %2449 = vmatpush1.bf16.msra.mxu0 %v2311
    %2450 = vmatprep.subr.bf16.mxu0 %v2314
    %2451 = vmatpush1.bf16.msra.mxu0 %v2313
    %2452 = vmatprep.subr.bf16.mxu0 %v2316
    %2453 = vmatpush1.bf16.msra.mxu0 %v2315
    %2454 = vmatprep.subr.bf16.mxu0 %v2318
    %2455 = vmatpush1.bf16.msra.mxu0 %v2317
    %2456 = vmatprep.subr.bf16.mxu0 %v2320
    %2457 = vmatpush1.bf16.msra.mxu0 %v2319
    %2458 = vmatprep.subr.bf16.mxu0 %v2322
    %2459 = vmatpush1.bf16.msra.mxu0 %v2321
    %2460 = vmatprep.mubr.bf16.mxu0 %v1990
    %2461 = vmatmul.mubr.bf16.gmra.mrb[0].mxu0 %v1989
    %v2462 = vpop.f32.mrb[0].mxu0
    %v2463 = vadd.f32 %v2422, %v2462
    %v2464 = vpop.f32.mrb[0].mxu0
    %v2465 = vadd.f32 %v2424, %v2464
    %v2466 = vpop.f32.mrb[0].mxu0
    %v2467 = vpop.f32.mrb[0].mxu0
    %2468 = vdwg.mxu0
    %v2469 = vmax.f32 %v2463, 0.0
    %v2470 = vmax.f32 %v2465, 0.0
    %v2471 = vpack.c.bf16 %v2469, %v2469
    %v2472 = vpack.c.bf16 %v2470, %v2470
    %v2473 = vld [vmem:[#allocation8] sm:$0xf]
    %v2474 = vld [vmem:[#allocation8 + $0x4] sm:$0xf]
    %v2475 = vld [vmem:[#allocation8 + $0x8] sm:$0xf]
    %v2476 = vld [vmem:[#allocation8 + $0xc] sm:$0xf]
    %v2477 = vld [vmem:[#allocation8 + $0x10] sm:$0xf]
    %v2478 = vld [vmem:[#allocation8 + $0x14] sm:$0xf]
    %v2479 = vld [vmem:[#allocation8 + $0x18] sm:$0xf]
    %v2480 = vld [vmem:[#allocation8 + $0x1c] sm:$0xf]
    %v2481 = vld [vmem:[#allocation8 + $0x20] sm:$0xf]
    %v2482 = vld [vmem:[#allocation8 + $0x24] sm:$0xf]
    %v2483 = vld [vmem:[#allocation8 + $0x28] sm:$0xf]
    %v2484 = vld [vmem:[#allocation8 + $0x2c] sm:$0xf]
    %v2485 = vld [vmem:[#allocation8 + $0x30] sm:$0xf]
    %v2486 = vld [vmem:[#allocation8 + $0x34] sm:$0xf]
    %v2487 = vld [vmem:[#allocation8 + $0x38] sm:$0xf]
    %v2488 = vld [vmem:[#allocation8 + $0x3c] sm:$0xf]
    %v2489 = vld [vmem:[#allocation8 + $0x40] sm:$0xf]
    %v2490 = vld [vmem:[#allocation8 + $0x44] sm:$0xf]
    %v2491 = vld [vmem:[#allocation8 + $0x48] sm:$0xf]
    %v2492 = vld [vmem:[#allocation8 + $0x4c] sm:$0xf]
    %v2493 = vld [vmem:[#allocation8 + $0x50] sm:$0xf]
    %v2494 = vld [vmem:[#allocation8 + $0x54] sm:$0xf]
    %v2495 = vld [vmem:[#allocation8 + $0x58] sm:$0xf]
    %v2496 = vld [vmem:[#allocation8 + $0x5c] sm:$0xf]
    %v2497 = vld [vmem:[#allocation8 + $0x60] sm:$0xf]
    %v2498 = vld [vmem:[#allocation8 + $0x64] sm:$0xf]
    %v2499 = vld [vmem:[#allocation8 + $0x68] sm:$0xf]
    %v2500 = vld [vmem:[#allocation8 + $0x6c] sm:$0xf]
    %v2501 = vld [vmem:[#allocation8 + $0x70] sm:$0xf]
    %v2502 = vld [vmem:[#allocation8 + $0x74] sm:$0xf]
    %v2503 = vld [vmem:[#allocation8 + $0x78] sm:$0xf]
    %v2504 = vld [vmem:[#allocation8 + $0x7c] sm:$0xf]
    %v2505 = vld [vmem:[%s6] sm:$0x1]
    %v2507 = vlaneseq
    %v2508 = vshrl.u32 %v2507, 7
    %v2509 = vsub.s32 0, %v2508
    %v2510 = vrot.slane %v2505, %v2509
    %v2544 = vunpack.c.l.b16 %v2473
    %v2545 = vunpack.c.l.b16 %v2474
    %v2546 = vunpack.c.l.b16 %v2475
    %v2547 = vunpack.c.l.b16 %v2476
    %v2548 = vunpack.c.l.b16 %v2477
    %v2549 = vunpack.c.l.b16 %v2478
    %v2550 = vunpack.c.l.b16 %v2479
    %v2551 = vunpack.c.l.b16 %v2480
    %v2552 = vunpack.c.l.b16 %v2481
    %v2553 = vunpack.c.l.b16 %v2482
    %v2554 = vunpack.c.l.b16 %v2483
    %v2555 = vunpack.c.l.b16 %v2484
    %v2556 = vunpack.c.l.b16 %v2485
    %v2557 = vunpack.c.l.b16 %v2486
    %v2558 = vunpack.c.l.b16 %v2487
    %v2559 = vunpack.c.l.b16 %v2488
    %v2560 = vunpack.c.l.b16 %v2489
    %v2561 = vunpack.c.l.b16 %v2490
    %v2562 = vunpack.c.l.b16 %v2491
    %v2563 = vunpack.c.l.b16 %v2492
    %v2564 = vunpack.c.l.b16 %v2493
    %v2565 = vunpack.c.l.b16 %v2494
    %v2566 = vunpack.c.l.b16 %v2495
    %v2567 = vunpack.c.l.b16 %v2496
    %v2568 = vunpack.c.l.b16 %v2497
    %v2569 = vunpack.c.l.b16 %v2498
    %v2570 = vunpack.c.l.b16 %v2499
    %v2571 = vunpack.c.l.b16 %v2500
    %v2572 = vunpack.c.l.b16 %v2501
    %v2573 = vunpack.c.l.b16 %v2502
    %v2574 = vunpack.c.l.b16 %v2503
    %v2575 = vunpack.c.l.b16 %v2504
    %v2576 = vpack.c.b16 %v2545, %v2544
    %v2577 = vpack.c.b16 %v2547, %v2546
    %v2578 = vpack.c.b16 %v2549, %v2548
    %v2579 = vpack.c.b16 %v2551, %v2550
    %v2580 = vpack.c.b16 %v2553, %v2552
    %v2581 = vpack.c.b16 %v2555, %v2554
    %v2582 = vpack.c.b16 %v2557, %v2556
    %v2583 = vpack.c.b16 %v2559, %v2558
    %v2584 = vpack.c.b16 %v2561, %v2560
    %v2585 = vpack.c.b16 %v2563, %v2562
    %v2586 = vpack.c.b16 %v2565, %v2564
    %v2587 = vpack.c.b16 %v2567, %v2566
    %v2588 = vpack.c.b16 %v2569, %v2568
    %v2589 = vpack.c.b16 %v2571, %v2570
    %v2590 = vpack.c.b16 %v2573, %v2572
    %v2591 = vpack.c.b16 %v2575, %v2574
    %2608 = vmatprep.subr.bf16.mxu0 0
    %2609 = vmatpush1.bf16.msra.mxu0 %v2576
    %2610 = vmatprep.subr.bf16.mxu0 0
    %2611 = vmatpush1.bf16.msra.mxu0 %v2577
    %2612 = vmatprep.subr.bf16.mxu0 0
    %2613 = vmatpush1.bf16.msra.mxu0 %v2578
    %2614 = vmatprep.subr.bf16.mxu0 0
    %2615 = vmatpush1.bf16.msra.mxu0 %v2579
    %2616 = vmatprep.subr.bf16.mxu0 0
    %2617 = vmatpush1.bf16.msra.mxu0 %v2580
    %2618 = vmatprep.subr.bf16.mxu0 0
    %2619 = vmatpush1.bf16.msra.mxu0 %v2581
    %2620 = vmatprep.subr.bf16.mxu0 0
    %2621 = vmatpush1.bf16.msra.mxu0 %v2582
    %2622 = vmatprep.subr.bf16.mxu0 0
    %2623 = vmatpush1.bf16.msra.mxu0 %v2583
    %2624 = vmatprep.subr.bf16.mxu0 0
    %2625 = vmatpush1.bf16.msra.mxu0 %v2584
    %2626 = vmatprep.subr.bf16.mxu0 0
    %2627 = vmatpush1.bf16.msra.mxu0 %v2585
    %2628 = vmatprep.subr.bf16.mxu0 0
    %2629 = vmatpush1.bf16.msra.mxu0 %v2586
    %2630 = vmatprep.subr.bf16.mxu0 0
    %2631 = vmatpush1.bf16.msra.mxu0 %v2587
    %2632 = vmatprep.subr.bf16.mxu0 0
    %2633 = vmatpush1.bf16.msra.mxu0 %v2588
    %2634 = vmatprep.subr.bf16.mxu0 0
    %2635 = vmatpush1.bf16.msra.mxu0 %v2589
    %2636 = vmatprep.subr.bf16.mxu0 0
    %2637 = vmatpush1.bf16.msra.mxu0 %v2590
    %2638 = vmatprep.subr.bf16.mxu0 0
    %2639 = vmatpush1.bf16.msra.mxu0 %v2591
    %2640 = vmatprep.mubr.bf16.mxu0 %v2472
    %2641 = vmatmul.mubr.bf16.gmra.mrb[0].mxu0 %v2471
    %v2642 = vpop.f32.mrb[0].mxu0
    %v2643 = vadd.f32 %v2510, %v2642
    %v2644 = vpop.f32.mrb[0].mxu0
    %v2645 = vpop.f32.mrb[0].mxu0
    %v2646 = vpop.f32.mrb[0].mxu0
    %2647 = vdwg.mxu0
    %2648 = vst [vmem:[#allocation10] sm:$0xff] %v2643
    // Predicated region
    $region46: #{tpu_custom_call.1} parent=1 // pred_check
      _
    $region47: #{tpu_custom_call.1} parent=1 // pred_check_branch
      %2650 = sbr.rel (0) target = $region49
    $region48: #{tpu_custom_call.1} parent=1 // pred_region
      %s2652 = ssub.s32 128, 128
      %2653 = vsyncadd [#allocation4], %s2652
      %s2655 = sshll.u32 [#allocation10], 4
      %s2656 = int_to_ptr.vmem [resolvable:$true] %s2655
      %2658 = dma.vmem_to_hbm [thread:$0]  %s2656, 128, %s7, [#allocation4]
    $region49: #{tpu_custom_call.1} parent=1 // pred_fallthru
      _
    // Predicated region
    $region50: #{tpu_custom_call.1} parent=1 // pred_check
      _
    $region51: #{tpu_custom_call.1} parent=1 // pred_check_branch
      %2660 = sbr.rel (0) target = $region53
    $region52: #{tpu_custom_call.1} parent=1 // pred_region
      %2661 = dma.done [#allocation4], 128
    $region53: #{tpu_custom_call.1} parent=1 // pred_fallthru
      _
    %2662 = vsyncpa [#allocation3], 1
    %2663 = vsyncpa [#allocation6], 1
    %2664 = vsyncpa [#allocation9], 1
    %2665 = vsyncpa [#allocation4], 1

</llo_original>
